<compile_context>
chip_gen: v5e
topology: v5e:2x2
jax: 0.10.0
libtpu: 0.0.40
codegen_flags: <defaults>
</compile_context>

<pallas_src>
import jax
import jax.numpy as jnp
from jax.experimental import pallas as pl
from jax.experimental.pallas import tpu as pltpu

C1 = 128          # conv1 output channels
C2 = 192          # layer2 channels
C2P = 256         # conv-B tap block padded to a vreg (128-lane) multiple
K1, S1 = 80, 8    # conv1 kernel / stride
POOL = 4          # maxpool kernel & stride
KP1 = 128         # conv1 contraction dim, padded 104 -> 128


def _edge_masks(m, c, b_blk, t2):
    """(m, c) bool masks for the first / last time row of every batch element
    inside the flattened M = b_blk*t2 row dimension (restores conv pad=0)."""
    row = jax.lax.broadcasted_iota(jnp.int32, (m, c), 0)
    first = row == 0
    last = row == (t2 - 1)
    for b in range(1, b_blk):
        first = jnp.logical_or(first, row == b * t2)
        last = jnp.logical_or(last, row == (b * t2 + t2 - 1))
    return first, last


# ---------------------------------------------------------------------------
# Fused kernel: whole forward pass for B_BLK batch elements, VMEM-resident.
# ---------------------------------------------------------------------------
def fused_kernel(sr_ref, w1_ref, bn1_ref, wa_ref, wb_ref, bn2_ref, o_ref):
    # sr_ref : (B, T2+3, 32) f32   raw signal, row u = samples [32u, 32u+32)
    # w1_ref : (128, 512) bf16     conv1 weights, 4 phase-shifted lane blocks
    # bn1_ref: (2, 512)  f32       folded BN1 [scale; shift], tiled x4
    # wa_ref : (384, 192) bf16     conv A weights stacked along K (taps -1,0,+1)
    # wb_ref : (768, 192) bf16     conv B weights, 3 tap blocks padded to 256 rows
    # bn2_ref: (4, 192)  f32       [scaleA; shiftA; scaleB; shiftB]
    # o_ref  : (B, T2, 192) f32
    B, tp3, _ = sr_ref.shape
    T2 = tp3 - 3
    M = B * T2

    # ---- layer 1: conv1 as one (M,128) @ (128,512) matmul ------------------
    s = sr_ref[...]                                              # (B, T2+3, 32)
    bps = []
    for b in range(B):
        sb = s[b]                                                # (T2+3, 32)
        # row t packs samples [32t, 32t+128); weight rows >= 104 are zero so
        # the extra 24 lanes beyond the receptive field never contribute.
        bps.append(jnp.concatenate(
            [sb[0:T2], sb[1:T2 + 1], sb[2:T2 + 2], sb[3:T2 + 3]], axis=1))
    bp = jnp.concatenate(bps, axis=0).astype(jnp.bfloat16)       # (M, 128)
    x1 = jnp.dot(bp, w1_ref[...], preferred_element_type=jnp.float32)  # (M,512)
    x1 = jnp.maximum(x1 * bn1_ref[0:1, :] + bn1_ref[1:2, :], 0.0)

    # ---- MaxPool1d(4,4): elementwise max of 4 lane-aligned phase blocks ----
    pooled = jnp.maximum(
        jnp.maximum(x1[:, 0:C1], x1[:, C1:2 * C1]),
        jnp.maximum(x1[:, 2 * C1:3 * C1], x1[:, 3 * C1:4 * C1]))  # (M, 128)

    # ---- conv A (k=3, pad=1, 128->192) + BN + ReLU, single fused matmul ----
    first1, last1 = _edge_masks(M, C1, B, T2)
    prev = jnp.where(first1, 0.0, pltpu.roll(pooled, 1, axis=0))      # x[t-1]
    nxt = jnp.where(last1, 0.0, pltpu.roll(pooled, M - 1, axis=0))    # x[t+1]
    xa = jnp.concatenate([prev, pooled, nxt], axis=1).astype(jnp.bfloat16)
    h = jnp.dot(xa, wa_ref[...], preferred_element_type=jnp.float32)  # (M,192)
    h = jnp.maximum(h * bn2_ref[0:1, :] + bn2_ref[1:2, :], 0.0)

    # ---- conv B (k=3, pad=1, 192->192) + BN (no ReLU), single matmul -------
    # Pad each 192-wide tap block to 256 lanes so block starts are vreg
    # aligned; the matching weight rows are zero.
    h256 = jnp.concatenate([h, jnp.zeros((M, C2P - C2), jnp.float32)], axis=1)
    first2, last2 = _edge_masks(M, C2P, B, T2)
    hprev = jnp.where(first2, 0.0, pltpu.roll(h256, 1, axis=0))
    hnxt = jnp.where(last2, 0.0, pltpu.roll(h256, M - 1, axis=0))
    xb = jnp.concatenate([hprev, h256, hnxt], axis=1).astype(jnp.bfloat16)
    y = jnp.dot(xb, wb_ref[...], preferred_element_type=jnp.float32)  # (M,192)
    y = y * bn2_ref[2:3, :] + bn2_ref[3:4, :]

    for b in range(B):
        o_ref[b, :, :] = y[b * T2:(b + 1) * T2, :]


def fused_forward(sr, w1big, bn1, wabig, wbbig, bn2, b_blk):
    N, tp3, _ = sr.shape
    T2 = tp3 - 3
    assert N % b_blk == 0
    return pl.pallas_call(
        fused_kernel,
        out_shape=jax.ShapeDtypeStruct((N, T2, C2), jnp.float32),
        grid=(N // b_blk,),
        in_specs=[
            pl.BlockSpec((b_blk, tp3, 32), lambda i: (i, 0, 0)),
            pl.BlockSpec((KP1, POOL * C1), lambda i: (0, 0)),
            pl.BlockSpec((2, POOL * C1), lambda i: (0, 0)),
            pl.BlockSpec((3 * C1, C2), lambda i: (0, 0)),
            pl.BlockSpec((3 * C2P, C2), lambda i: (0, 0)),
            pl.BlockSpec((4, C2), lambda i: (0, 0)),
        ],
        out_specs=pl.BlockSpec((b_blk, T2, C2), lambda i: (i, 0, 0)),
        compiler_params=pltpu.CompilerParams(
            dimension_semantics=("parallel",),
            vmem_limit_bytes=48 * 1024 * 1024),
    )(sr, w1big, bn1, wabig, wbbig, bn2)


# ---------------------------------------------------------------------------
# Parameter prep (folds, weight re-layouts) + forward glue
# ---------------------------------------------------------------------------
def fold_bn(gamma, beta, mean, var, conv_bias, eps=1e-5):
    scale = gamma / jnp.sqrt(var + eps)
    shift = beta - mean * scale + conv_bias * scale
    return scale.astype(jnp.float32), shift.astype(jnp.float32)


def prepare_params(params):
    # conv1 weights -> (128, 512): lane block p holds w1 shifted down by 8p
    # rows (rows 104..127 all zero), so patch row t yields conv1 outputs
    # 4t..4t+3 in one matmul with a whole-vreg K=128 contraction.
    w1t = jnp.transpose(params["w1"][:, 0, :], (1, 0))               # (80, 128)
    w1big = jnp.concatenate(
        [jnp.pad(w1t, ((8 * p, 48 - 8 * p), (0, 0))) for p in range(POOL)],
        axis=1).astype(jnp.bfloat16)                                 # (128, 512)
    s1, o1 = fold_bn(*params["bn1"], params["b1"])
    bn1 = jnp.stack([jnp.tile(s1, POOL), jnp.tile(o1, POOL)])        # (2, 512)

    wabig = jnp.concatenate(
        [jnp.transpose(params["w2a"][:, :, k], (1, 0)) for k in range(3)],
        axis=0).astype(jnp.bfloat16)                                 # (384, 192)
    # conv B: 3 tap blocks of 192 input rows, each zero-padded to 256 rows to
    # match the lane-aligned activation pack.
    wbbig = jnp.concatenate(
        [jnp.pad(jnp.transpose(params["w2b"][:, :, k], (1, 0)),
                 ((0, C2P - C2), (0, 0))) for k in range(3)],
        axis=0).astype(jnp.bfloat16)                                 # (768, 192)
    sa, oa = fold_bn(*params["bn2a"], params["b2a"])
    sb, ob = fold_bn(*params["bn2b"], params["b2b"])
    bn2 = jnp.stack([sa, oa, sb, ob])                                # (4, 192)
    return w1big, bn1, wabig, wbbig, bn2


def pick_batch_block(n):
    # Prefer more matmul rows per step, but keep >=2 grid steps so v7x's two
    # TensorCores (and pipelining) still have parallel work.
    for b in (4, 2):
        if n % b == 0 and n // b >= 2:
            return b
    return 1


def forward(x, params, batch_block=None):
    # x: (N, 1, L)  PyTorch NCL raw audio
    N, _, L = x.shape
    T1 = (L - K1) // S1 + 1
    T2 = T1 // POOL
    assert T2 >= 1, "input too short"
    b_blk = batch_block if batch_block is not None else pick_batch_block(N)

    # raw signal -> (N, T2+3, 32) rows; no im2col duplication in HBM.
    need = 32 * (T2 + 3)
    sig = x[:, 0, :]
    sig = sig[:, :need] if L >= need else jnp.pad(sig, ((0, 0), (0, need - L)))
    sr = sig.reshape(N, T2 + 3, 32)

    w1big, bn1, wabig, wbbig, bn2 = prepare_params(params)
    y = fused_forward(sr, w1big, bn1, wabig, wbbig, bn2, b_blk)      # (N,T2,192)
    # back to PyTorch NCL layout (N, 192, T2) to match module semantics.
    return jnp.transpose(y, (0, 2, 1))


def init_params(key):
    ks = jax.random.split(key, 18)
    p = {}
    p["w1"] = 0.05 * jax.random.normal(ks[0], (128, 1, 80), jnp.float32)
    p["b1"] = 0.05 * jax.random.normal(ks[1], (128,), jnp.float32)
    p["bn1"] = (1.0 + 0.1 * jax.random.normal(ks[2], (128,), jnp.float32),
                0.05 * jax.random.normal(ks[3], (128,), jnp.float32),
                0.05 * jax.random.normal(ks[4], (128,), jnp.float32),
                1.0 + 0.2 * jnp.abs(jax.random.normal(ks[5], (128,), jnp.float32)))
    p["w2a"] = 0.05 * jax.random.normal(ks[6], (192, 128, 3), jnp.float32)
    p["b2a"] = 0.05 * jax.random.normal(ks[7], (192,), jnp.float32)
    p["bn2a"] = (1.0 + 0.1 * jax.random.normal(ks[8], (192,), jnp.float32),
                 0.05 * jax.random.normal(ks[9], (192,), jnp.float32),
                 0.05 * jax.random.normal(ks[10], (192,), jnp.float32),
                 1.0 + 0.2 * jnp.abs(jax.random.normal(ks[11], (192,), jnp.float32)))
    p["w2b"] = 0.05 * jax.random.normal(ks[12], (192, 192, 3), jnp.float32)
    p["b2b"] = 0.05 * jax.random.normal(ks[13], (192,), jnp.float32)
    p["bn2b"] = (1.0 + 0.1 * jax.random.normal(ks[14], (192,), jnp.float32),
                 0.05 * jax.random.normal(ks[15], (192,), jnp.float32),
                 0.05 * jax.random.normal(ks[16], (192,), jnp.float32),
                 1.0 + 0.2 * jnp.abs(jax.random.normal(ks[17], (192,), jnp.float32)))
    return p


# ---------------------------------------------------------------------------
# Pure-JAX f32 reference (inference-mode BN) for a numerical sanity check.
# ---------------------------------------------------------------------------
def reference_forward(x, params, eps=1e-5):
    N, _, L = x.shape
    sig = x[:, 0, :]
    T1 = (L - K1) // S1 + 1
    idx = jnp.arange(T1)[:, None] * S1 + jnp.arange(K1)[None, :]
    patches = sig[:, idx]                                        # (N, T1, 80)
    w1t = params["w1"][:, 0, :].T
    x1 = jnp.einsum("ntk,kc->ntc", patches, w1t) + params["b1"]
    g, b, m, v = params["bn1"]
    x1 = jnp.maximum((x1 - m) / jnp.sqrt(v + eps) * g + b, 0.0)
    T2 = T1 // POOL
    pooled = jnp.max(x1[:, :POOL * T2].reshape(N, T2, POOL, 128), axis=2)

    def conv3(h, w, bias):
        hp = jnp.pad(h, ((0, 0), (1, 1), (0, 0)))
        return (jnp.einsum("ntc,oc->nto", hp[:, :-2], w[:, :, 0])
                + jnp.einsum("ntc,oc->nto", hp[:, 1:-1], w[:, :, 1])
                + jnp.einsum("ntc,oc->nto", hp[:, 2:], w[:, :, 2]) + bias)

    a = conv3(pooled, params["w2a"], params["b2a"])
    g, b, m, v = params["bn2a"]
    a = jnp.maximum((a - m) / jnp.sqrt(v + eps) * g + b, 0.0)
    yb = conv3(a, params["w2b"], params["b2b"])
    g, b, m, v = params["bn2b"]
    yb = (yb - m) / jnp.sqrt(v + eps) * g + b
    return jnp.transpose(yb, (0, 2, 1))                          # (N, 192, T2)


if __name__ == "__main__":
    N = 4
    T1 = 512                      # conv1 output length
    L = S1 * (T1 - 1) + K1        # = 4168 raw-audio samples
    T2 = T1 // POOL

    key = jax.random.PRNGKey(0)
    kx, kp = jax.random.split(key)
    x = jax.random.normal(kx, (N, 1, L), jnp.float32)
    params = init_params(kp)

    out = forward(x, params)      # picks batch_block=2 -> grid of 2 steps
    out = jax.block_until_ready(out)
    assert out.shape == (N, 192, T2), out.shape
    assert out.dtype == jnp.float32
    assert bool(jnp.all(jnp.isfinite(out)))

    # loose tolerance: matmuls run in bf16 with f32 accumulation
    ref = reference_forward(x, params)
    err = float(jnp.max(jnp.abs(out - ref)))
    assert err < 0.2, f"max abs err {err}"
    print("KERNEL_OK")
</pallas_src>

<mosaic_0001>
module attributes {stable_mosaic.version = 11 : i64} {
  func.func @fused_kernel(%arg0: i32, %arg1: memref<2x131x32xf32, #tpu.memory_space<vmem>>, %arg2: memref<128x512xbf16, #tpu.memory_space<vmem>>, %arg3: memref<2x512xf32, #tpu.memory_space<vmem>>, %arg4: memref<384x192xbf16, #tpu.memory_space<vmem>>, %arg5: memref<768x192xbf16, #tpu.memory_space<vmem>>, %arg6: memref<4x192xf32, #tpu.memory_space<vmem>>, %arg7: memref<2x128x192xf32, #tpu.memory_space<vmem>>) attributes {dimension_semantics = [#tpu.dimension_semantics<parallel>], iteration_bounds = array<i64: 2>, scalar_prefetch = 0 : i64, scratch_operands = 0 : i64, tpu.core_type = #tpu.core_type<tc>, window_params = [{transform_indices = @transform_0, window_bounds = array<i64: 2, 131, 32>}, {pipeline_mode = #tpu.pipeline_mode<synchronous>, transform_indices = @transform_1, window_bounds = array<i64: 128, 512>}, {pipeline_mode = #tpu.pipeline_mode<synchronous>, transform_indices = @transform_2, window_bounds = array<i64: 2, 512>}, {pipeline_mode = #tpu.pipeline_mode<synchronous>, transform_indices = @transform_3, window_bounds = array<i64: 384, 192>}, {pipeline_mode = #tpu.pipeline_mode<synchronous>, transform_indices = @transform_4, window_bounds = array<i64: 768, 192>}, {pipeline_mode = #tpu.pipeline_mode<synchronous>, transform_indices = @transform_5, window_bounds = array<i64: 4, 192>}, {transform_indices = @transform_6, window_bounds = array<i64: 2, 128, 192>}]} {
    %c0 = arith.constant 0 : index
    %c0_0 = arith.constant 0 : index
    %c0_1 = arith.constant 0 : index
    %0 = vector.load %arg1[%c0, %c0_0, %c0_1] : memref<2x131x32xf32, #tpu.memory_space<vmem>>, vector<2x131x32xf32>
    %1 = vector.extract_strided_slice %0 {offsets = [0, 0, 0], sizes = [1, 131, 32], strides = [1, 1, 1]} : vector<2x131x32xf32> to vector<1x131x32xf32>
    %2 = vector.shape_cast %1 : vector<1x131x32xf32> to vector<131x32xf32>
    %3 = vector.extract_strided_slice %2 {offsets = [0, 0], sizes = [128, 32], strides = [1, 1]} : vector<131x32xf32> to vector<128x32xf32>
    %4 = vector.extract_strided_slice %2 {offsets = [1, 0], sizes = [128, 32], strides = [1, 1]} : vector<131x32xf32> to vector<128x32xf32>
    %5 = vector.extract_strided_slice %2 {offsets = [2, 0], sizes = [128, 32], strides = [1, 1]} : vector<131x32xf32> to vector<128x32xf32>
    %6 = vector.extract_strided_slice %2 {offsets = [3, 0], sizes = [128, 32], strides = [1, 1]} : vector<131x32xf32> to vector<128x32xf32>
    %7 = tpu.concatenate %3, %4, %5, %6 in 1 : vector<128x32xf32>, vector<128x32xf32>, vector<128x32xf32>, vector<128x32xf32> -> vector<128x128xf32>
    %8 = vector.extract_strided_slice %0 {offsets = [1, 0, 0], sizes = [1, 131, 32], strides = [1, 1, 1]} : vector<2x131x32xf32> to vector<1x131x32xf32>
    %9 = vector.shape_cast %8 : vector<1x131x32xf32> to vector<131x32xf32>
    %10 = vector.extract_strided_slice %9 {offsets = [0, 0], sizes = [128, 32], strides = [1, 1]} : vector<131x32xf32> to vector<128x32xf32>
    %11 = vector.extract_strided_slice %9 {offsets = [1, 0], sizes = [128, 32], strides = [1, 1]} : vector<131x32xf32> to vector<128x32xf32>
    %12 = vector.extract_strided_slice %9 {offsets = [2, 0], sizes = [128, 32], strides = [1, 1]} : vector<131x32xf32> to vector<128x32xf32>
    %13 = vector.extract_strided_slice %9 {offsets = [3, 0], sizes = [128, 32], strides = [1, 1]} : vector<131x32xf32> to vector<128x32xf32>
    %14 = tpu.concatenate %10, %11, %12, %13 in 1 : vector<128x32xf32>, vector<128x32xf32>, vector<128x32xf32>, vector<128x32xf32> -> vector<128x128xf32>
    %15 = tpu.concatenate %7, %14 in 0 : vector<128x128xf32>, vector<128x128xf32> -> vector<256x128xf32>
    %16 = arith.truncf %15 : vector<256x128xf32> to vector<256x128xbf16>
    %c0_2 = arith.constant 0 : index
    %c0_3 = arith.constant 0 : index
    %17 = vector.load %arg2[%c0_2, %c0_3] : memref<128x512xbf16, #tpu.memory_space<vmem>>, vector<128x512xbf16>
    %cst = arith.constant dense<0.000000e+00> : vector<256x512xf32>
    %18 = tpu.matmul %16, %17, %cst {dimension_numbers = #tpu.dot_dimension_numbers<[1], [0], [0], [1], [0, 0, 1, 1], [], []>} : vector<256x128xbf16>, vector<128x512xbf16>, vector<256x512xf32> -> vector<256x512xf32>
    %c0_4 = arith.constant 0 : index
    %c0_5 = arith.constant 0 : index
    %19 = vector.load %arg3[%c0_4, %c0_5] : memref<2x512xf32, #tpu.memory_space<vmem>>, vector<1x512xf32>
    %20 = vector.broadcast %19 : vector<1x512xf32> to vector<256x512xf32>
    %21 = arith.mulf %18, %20 : vector<256x512xf32>
    %c1 = arith.constant 1 : index
    %c0_6 = arith.constant 0 : index
    %22 = vector.load %arg3[%c1, %c0_6] : memref<2x512xf32, #tpu.memory_space<vmem>>, vector<1x512xf32>
    %23 = vector.broadcast %22 : vector<1x512xf32> to vector<256x512xf32>
    %24 = arith.addf %21, %23 : vector<256x512xf32>
    %cst_7 = arith.constant 0.000000e+00 : f32
    %25 = vector.broadcast %cst_7 : f32 to vector<256x512xf32>
    %26 = arith.maximumf %24, %25 : vector<256x512xf32>
    %27 = vector.extract_strided_slice %26 {offsets = [0, 0], sizes = [256, 128], strides = [1, 1]} : vector<256x512xf32> to vector<256x128xf32>
    %28 = vector.extract_strided_slice %26 {offsets = [0, 128], sizes = [256, 128], strides = [1, 1]} : vector<256x512xf32> to vector<256x128xf32>
    %29 = arith.maximumf %27, %28 : vector<256x128xf32>
    %30 = vector.extract_strided_slice %26 {offsets = [0, 256], sizes = [256, 128], strides = [1, 1]} : vector<256x512xf32> to vector<256x128xf32>
    %31 = vector.extract_strided_slice %26 {offsets = [0, 384], sizes = [256, 128], strides = [1, 1]} : vector<256x512xf32> to vector<256x128xf32>
    %32 = arith.maximumf %30, %31 : vector<256x128xf32>
    %33 = arith.maximumf %29, %32 : vector<256x128xf32>
    %34 = tpu.iota {dimensions = array<i32: 0>} : vector<256x128xi32>
    %c0_i32 = arith.constant 0 : i32
    %35 = vector.broadcast %c0_i32 : i32 to vector<256x128xi32>
    %36 = arith.cmpi eq, %34, %35 : vector<256x128xi32>
    %c127_i32 = arith.constant 127 : i32
    %37 = vector.broadcast %c127_i32 : i32 to vector<256x128xi32>
    %38 = arith.cmpi eq, %34, %37 : vector<256x128xi32>
    %c128_i32 = arith.constant 128 : i32
    %39 = vector.broadcast %c128_i32 : i32 to vector<256x128xi32>
    %40 = arith.cmpi eq, %34, %39 : vector<256x128xi32>
    %41 = arith.ori %36, %40 : vector<256x128xi1>
    %c255_i32 = arith.constant 255 : i32
    %42 = vector.broadcast %c255_i32 : i32 to vector<256x128xi32>
    %43 = arith.cmpi eq, %34, %42 : vector<256x128xi32>
    %44 = arith.ori %38, %43 : vector<256x128xi1>
    %c1_i32 = arith.constant 1 : i32
    %45 = tpu.dynamic_rotate %33 by %c1_i32 dim 0 : vector<256x128xf32>, i32 -> vector<256x128xf32>
    %cst_8 = arith.constant 0.000000e+00 : f32
    %46 = vector.broadcast %cst_8 : f32 to vector<256x128xf32>
    %47 = arith.select %41, %46, %45 : vector<256x128xi1>, vector<256x128xf32>
    %c255_i32_9 = arith.constant 255 : i32
    %48 = tpu.dynamic_rotate %33 by %c255_i32_9 dim 0 : vector<256x128xf32>, i32 -> vector<256x128xf32>
    %cst_10 = arith.constant 0.000000e+00 : f32
    %49 = vector.broadcast %cst_10 : f32 to vector<256x128xf32>
    %50 = arith.select %44, %49, %48 : vector<256x128xi1>, vector<256x128xf32>
    %51 = tpu.concatenate %47, %33, %50 in 1 : vector<256x128xf32>, vector<256x128xf32>, vector<256x128xf32> -> vector<256x384xf32>
    %52 = arith.truncf %51 : vector<256x384xf32> to vector<256x384xbf16>
    %c0_11 = arith.constant 0 : index
    %c0_12 = arith.constant 0 : index
    %53 = vector.load %arg4[%c0_11, %c0_12] : memref<384x192xbf16, #tpu.memory_space<vmem>>, vector<384x192xbf16>
    %cst_13 = arith.constant dense<0.000000e+00> : vector<256x192xf32>
    %54 = tpu.matmul %52, %53, %cst_13 {dimension_numbers = #tpu.dot_dimension_numbers<[1], [0], [0], [1], [0, 0, 1, 1], [], []>} : vector<256x384xbf16>, vector<384x192xbf16>, vector<256x192xf32> -> vector<256x192xf32>
    %c0_14 = arith.constant 0 : index
    %c0_15 = arith.constant 0 : index
    %55 = vector.load %arg6[%c0_14, %c0_15] : memref<4x192xf32, #tpu.memory_space<vmem>>, vector<1x192xf32>
    %56 = vector.broadcast %55 : vector<1x192xf32> to vector<256x192xf32>
    %57 = arith.mulf %54, %56 : vector<256x192xf32>
    %c1_16 = arith.constant 1 : index
    %c0_17 = arith.constant 0 : index
    %58 = vector.load %arg6[%c1_16, %c0_17] : memref<4x192xf32, #tpu.memory_space<vmem>>, vector<1x192xf32>
    %59 = vector.broadcast %58 : vector<1x192xf32> to vector<256x192xf32>
    %60 = arith.addf %57, %59 : vector<256x192xf32>
    %cst_18 = arith.constant 0.000000e+00 : f32
    %61 = vector.broadcast %cst_18 : f32 to vector<256x192xf32>
    %62 = arith.maximumf %60, %61 : vector<256x192xf32>
    %cst_19 = arith.constant 0.000000e+00 : f32
    %63 = vector.broadcast %cst_19 : f32 to vector<256x64xf32>
    %64 = tpu.concatenate %62, %63 in 1 : vector<256x192xf32>, vector<256x64xf32> -> vector<256x256xf32>
    %65 = tpu.iota {dimensions = array<i32: 0>} : vector<256x256xi32>
    %c0_i32_20 = arith.constant 0 : i32
    %66 = vector.broadcast %c0_i32_20 : i32 to vector<256x256xi32>
    %67 = arith.cmpi eq, %65, %66 : vector<256x256xi32>
    %c127_i32_21 = arith.constant 127 : i32
    %68 = vector.broadcast %c127_i32_21 : i32 to vector<256x256xi32>
    %69 = arith.cmpi eq, %65, %68 : vector<256x256xi32>
    %c128_i32_22 = arith.constant 128 : i32
    %70 = vector.broadcast %c128_i32_22 : i32 to vector<256x256xi32>
    %71 = arith.cmpi eq, %65, %70 : vector<256x256xi32>
    %72 = arith.ori %67, %71 : vector<256x256xi1>
    %c255_i32_23 = arith.constant 255 : i32
    %73 = vector.broadcast %c255_i32_23 : i32 to vector<256x256xi32>
    %74 = arith.cmpi eq, %65, %73 : vector<256x256xi32>
    %75 = arith.ori %69, %74 : vector<256x256xi1>
    %c1_i32_24 = arith.constant 1 : i32
    %76 = tpu.dynamic_rotate %64 by %c1_i32_24 dim 0 : vector<256x256xf32>, i32 -> vector<256x256xf32>
    %cst_25 = arith.constant 0.000000e+00 : f32
    %77 = vector.broadcast %cst_25 : f32 to vector<256x256xf32>
    %78 = arith.select %72, %77, %76 : vector<256x256xi1>, vector<256x256xf32>
    %c255_i32_26 = arith.constant 255 : i32
    %79 = tpu.dynamic_rotate %64 by %c255_i32_26 dim 0 : vector<256x256xf32>, i32 -> vector<256x256xf32>
    %cst_27 = arith.constant 0.000000e+00 : f32
    %80 = vector.broadcast %cst_27 : f32 to vector<256x256xf32>
    %81 = arith.select %75, %80, %79 : vector<256x256xi1>, vector<256x256xf32>
    %82 = tpu.concatenate %78, %64, %81 in 1 : vector<256x256xf32>, vector<256x256xf32>, vector<256x256xf32> -> vector<256x768xf32>
    %83 = arith.truncf %82 : vector<256x768xf32> to vector<256x768xbf16>
    %c0_28 = arith.constant 0 : index
    %c0_29 = arith.constant 0 : index
    %84 = vector.load %arg5[%c0_28, %c0_29] : memref<768x192xbf16, #tpu.memory_space<vmem>>, vector<768x192xbf16>
    %cst_30 = arith.constant dense<0.000000e+00> : vector<256x192xf32>
    %85 = tpu.matmul %83, %84, %cst_30 {dimension_numbers = #tpu.dot_dimension_numbers<[1], [0], [0], [1], [0, 0, 1, 1], [], []>} : vector<256x768xbf16>, vector<768x192xbf16>, vector<256x192xf32> -> vector<256x192xf32>
    %c2 = arith.constant 2 : index
    %c0_31 = arith.constant 0 : index
    %86 = vector.load %arg6[%c2, %c0_31] : memref<4x192xf32, #tpu.memory_space<vmem>>, vector<1x192xf32>
    %87 = vector.broadcast %86 : vector<1x192xf32> to vector<256x192xf32>
    %88 = arith.mulf %85, %87 : vector<256x192xf32>
    %c3 = arith.constant 3 : index
    %c0_32 = arith.constant 0 : index
    %89 = vector.load %arg6[%c3, %c0_32] : memref<4x192xf32, #tpu.memory_space<vmem>>, vector<1x192xf32>
    %90 = vector.broadcast %89 : vector<1x192xf32> to vector<256x192xf32>
    %91 = arith.addf %88, %90 : vector<256x192xf32>
    %92 = vector.extract_strided_slice %91 {offsets = [0, 0], sizes = [128, 192], strides = [1, 1]} : vector<256x192xf32> to vector<128x192xf32>
    %c0_33 = arith.constant 0 : index
    %c0_34 = arith.constant 0 : index
    %c0_35 = arith.constant 0 : index
    %93 = vector.load %arg7[%c0_33, %c0_34, %c0_35] : memref<2x128x192xf32, #tpu.memory_space<vmem>>, vector<1x128x192xf32>
    %94 = vector.shape_cast %93 : vector<1x128x192xf32> to vector<128x192xf32>
    %95 = vector.shape_cast %92 : vector<128x192xf32> to vector<1x128x192xf32>
    tpu.vector_store %arg7[%c0_33, %c0_34, %c0_35], %95 {strides = array<i32>} : memref<2x128x192xf32, #tpu.memory_space<vmem>>, vector<1x128x192xf32>,
    %96 = vector.extract_strided_slice %91 {offsets = [128, 0], sizes = [128, 192], strides = [1, 1]} : vector<256x192xf32> to vector<128x192xf32>
    %c1_36 = arith.constant 1 : index
    %c0_37 = arith.constant 0 : index
    %c0_38 = arith.constant 0 : index
    %97 = vector.load %arg7[%c1_36, %c0_37, %c0_38] : memref<2x128x192xf32, #tpu.memory_space<vmem>>, vector<1x128x192xf32>
    %98 = vector.shape_cast %97 : vector<1x128x192xf32> to vector<128x192xf32>
    %99 = vector.shape_cast %96 : vector<128x192xf32> to vector<1x128x192xf32>
    tpu.vector_store %arg7[%c1_36, %c0_37, %c0_38], %99 {strides = array<i32>} : memref<2x128x192xf32, #tpu.memory_space<vmem>>, vector<1x128x192xf32>,
    return
  }
  func.func @transform_0(%arg0: i32) -> (i32, i32, i32) {
    %c0_i32 = arith.constant 0 : i32
    %c0_i32_0 = arith.constant 0 : i32
    %c0_i32_1 = arith.constant 0 : i32
    return %arg0, %c0_i32, %c0_i32_0 : i32, i32, i32
  }
  func.func @transform_1(%arg0: i32) -> (i32, i32) {
    %c0_i32 = arith.constant 0 : i32
    %c0_i32_0 = arith.constant 0 : i32
    %c0_i32_1 = arith.constant 0 : i32
    return %c0_i32, %c0_i32_0 : i32, i32
  }
  func.func @transform_2(%arg0: i32) -> (i32, i32) {
    %c0_i32 = arith.constant 0 : i32
    %c0_i32_0 = arith.constant 0 : i32
    %c0_i32_1 = arith.constant 0 : i32
    return %c0_i32, %c0_i32_0 : i32, i32
  }
  func.func @transform_3(%arg0: i32) -> (i32, i32) {
    %c0_i32 = arith.constant 0 : i32
    %c0_i32_0 = arith.constant 0 : i32
    %c0_i32_1 = arith.constant 0 : i32
    return %c0_i32, %c0_i32_0 : i32, i32
  }
  func.func @transform_4(%arg0: i32) -> (i32, i32) {
    %c0_i32 = arith.constant 0 : i32
    %c0_i32_0 = arith.constant 0 : i32
    %c0_i32_1 = arith.constant 0 : i32
    return %c0_i32, %c0_i32_0 : i32, i32
  }
  func.func @transform_5(%arg0: i32) -> (i32, i32) {
    %c0_i32 = arith.constant 0 : i32
    %c0_i32_0 = arith.constant 0 : i32
    %c0_i32_1 = arith.constant 0 : i32
    return %c0_i32, %c0_i32_0 : i32, i32
  }
  func.func @transform_6(%arg0: i32) -> (i32, i32, i32) {
    %c0_i32 = arith.constant 0 : i32
    %c0_i32_0 = arith.constant 0 : i32
    %c0_i32_1 = arith.constant 0 : i32
    return %arg0, %c0_i32, %c0_i32_0 : i32, i32, i32
  }
}

</mosaic_0001>

<llo_original>
// kernel: tpu_custom_call.1
$region0: #{tpu_custom_call.1}
  #allocation0 [shape = 'u32[]', space=smem, size = 0x4, offset = 0x4, fixed_abs, tag = 'smem constant byte address 0x4 - core index']
  #allocation1 [shape = 'u32[72,128]{1,0:T(1,128)}', space=vmem, size = 0x9000, scoped, tag = 'internal scratch']
  %s0 = inlined_call_operand.vmem [shape: f32[4,131,32], index: 0, kind: input, shape index: {}]
  %s1 = inlined_call_operand.vmem [shape: bf16[128,512], index: 1, kind: input, shape index: {}]
  %s2 = inlined_call_operand.vmem [shape: f32[2,512], index: 2, kind: input, shape index: {}]
  %s3 = inlined_call_operand.vmem [shape: bf16[384,192], index: 3, kind: input, shape index: {}]
  %s4 = inlined_call_operand.vmem [shape: bf16[768,192], index: 4, kind: input, shape index: {}]
  %s5 = inlined_call_operand.vmem [shape: f32[4,192], index: 5, kind: input, shape index: {}]
  %s6 = inlined_call_operand.vmem [shape: f32[4,128,192], index: 6, kind: output, shape index: {}]
  %s7 = sld [smem:[#allocation0]]
  $region57: #{tpu_custom_call.1} parent=0
    _
  %s9 = ssub.s32 1, %s7
  %s10 = scalar_select 0, %s9, %s7
  loop: start=0, step=1, limit=4
  $region2: #{tpu_custom_call.1} parent=0 // loop_pre_header
    _
  $region3: #{tpu_custom_call.1} parent=0 // loop_header
    %s12 = sphi 0, %s16
    %p13 = scmp.ge.s32.totalorder %s12, 4
    %s22 = sphi 0, %s24
    %s25 = sphi 0, %s22
    %s26 = sphi 0, %s25
    %s42 = sphi 0, %s26
    %s46 = sphi 0, %s46
    %s48 = sphi 0, %s46
    %s49 = sphi 0, %s48
    %s63 = sphi 0, %s49
    %s67 = sphi 0, %s67
    %s69 = sphi 0, %s67
    %s70 = sphi 0, %s69
    %s84 = sphi 0, %s70
    %s88 = sphi 0, %s88
    %s90 = sphi 0, %s88
    %s91 = sphi 0, %s90
    %s105 = sphi 0, %s91
    %s109 = sphi 0, %s109
    %s111 = sphi 0, %s109
    %s112 = sphi 0, %s111
    %s126 = sphi 0, %s112
    %s130 = sphi 0, %s130
    %s132 = sphi 0, %s130
    %s133 = sphi 0, %s132
    %s147 = sphi 0, %s133
    %s153 = sphi 0, %s155
    %s156 = sphi 0, %s153
    %s157 = sphi 0, %s156
    %s173 = sphi 0, %s157
  $region4: #{tpu_custom_call.1} parent=0 // loop_header_branch
    %15 = sbr.rel (%p13) target = $region8
  $region5: #{tpu_custom_call.1} parent=0 // loop_body
    %s17 = ssub.s32 %s12, 1
    %s18 = ssub.s32 %s12, 2
    %s19 = sadd.s32 %s12, 1
    %s20 = ssub.s32 %s12, %s19
    %p21 = scmp.eq.s32.totalorder %s20, 0
    %s23 = sadd.s32 %s22, 1
    %s24 = scalar_select %p21, %s22, %s23
    %p27 = pneg %p21
    %p28 = scmp.eq.s32.totalorder %s12, 1
    %p29 = por %p27, %p28
    %p30 = scmp.ne.s32.totalorder %s22, %s25
    %p31 = scmp.eq.s32.totalorder %s12, 0
    %p32 = por %p30, %p31
    %p33 = scmp.ne.s32.totalorder %s22, %s25
    %p34 = scmp.eq.s32.totalorder %s17, 1
    %p35 = por %p33, %p34
    %p36 = scmp.ne.s32.totalorder %s25, %s26
    %p37 = scmp.eq.s32.totalorder %s17, 0
    %p38 = por %p36, %p37
    %p39 = scmp.ne.s32.totalorder %s25, %s26
    %p40 = scmp.eq.s32.totalorder %s18, 1
    %p41 = por %p39, %p40
    %p43 = scmp.ne.s32.totalorder %s26, %s42
    %p44 = scmp.eq.s32.totalorder %s18, 0
    %p45 = por %p43, %p44
    %s47 = sadd.s32 %s46, 1
    %p50 = scmp.eq.s32.totalorder %s12, 1
    %p51 = scmp.ne.s32.totalorder %s46, %s48
    %p52 = scmp.eq.s32.totalorder %s12, 0
    %p53 = por %p51, %p52
    %p54 = scmp.ne.s32.totalorder %s46, %s48
    %p55 = scmp.eq.s32.totalorder %s17, 1
    %p56 = por %p54, %p55
    %p57 = scmp.ne.s32.totalorder %s48, %s49
    %p58 = scmp.eq.s32.totalorder %s17, 0
    %p59 = por %p57, %p58
    %p60 = scmp.ne.s32.totalorder %s48, %s49
    %p61 = scmp.eq.s32.totalorder %s18, 1
    %p62 = por %p60, %p61
    %p64 = scmp.ne.s32.totalorder %s49, %s63
    %p65 = scmp.eq.s32.totalorder %s18, 0
    %p66 = por %p64, %p65
    %s68 = sadd.s32 %s67, 1
    %p71 = scmp.eq.s32.totalorder %s12, 1
    %p72 = scmp.ne.s32.totalorder %s67, %s69
    %p73 = scmp.eq.s32.totalorder %s12, 0
    %p74 = por %p72, %p73
    %p75 = scmp.ne.s32.totalorder %s67, %s69
    %p76 = scmp.eq.s32.totalorder %s17, 1
    %p77 = por %p75, %p76
    %p78 = scmp.ne.s32.totalorder %s69, %s70
    %p79 = scmp.eq.s32.totalorder %s17, 0
    %p80 = por %p78, %p79
    %p81 = scmp.ne.s32.totalorder %s69, %s70
    %p82 = scmp.eq.s32.totalorder %s18, 1
    %p83 = por %p81, %p82
    %p85 = scmp.ne.s32.totalorder %s70, %s84
    %p86 = scmp.eq.s32.totalorder %s18, 0
    %p87 = por %p85, %p86
    %s89 = sadd.s32 %s88, 1
    %p92 = scmp.eq.s32.totalorder %s12, 1
    %p93 = scmp.ne.s32.totalorder %s88, %s90
    %p94 = scmp.eq.s32.totalorder %s12, 0
    %p95 = por %p93, %p94
    %p96 = scmp.ne.s32.totalorder %s88, %s90
    %p97 = scmp.eq.s32.totalorder %s17, 1
    %p98 = por %p96, %p97
    %p99 = scmp.ne.s32.totalorder %s90, %s91
    %p100 = scmp.eq.s32.totalorder %s17, 0
    %p101 = por %p99, %p100
    %p102 = scmp.ne.s32.totalorder %s90, %s91
    %p103 = scmp.eq.s32.totalorder %s18, 1
    %p104 = por %p102, %p103
    %p106 = scmp.ne.s32.totalorder %s91, %s105
    %p107 = scmp.eq.s32.totalorder %s18, 0
    %p108 = por %p106, %p107
    %s110 = sadd.s32 %s109, 1
    %p113 = scmp.eq.s32.totalorder %s12, 1
    %p114 = scmp.ne.s32.totalorder %s109, %s111
    %p115 = scmp.eq.s32.totalorder %s12, 0
    %p116 = por %p114, %p115
    %p117 = scmp.ne.s32.totalorder %s109, %s111
    %p118 = scmp.eq.s32.totalorder %s17, 1
    %p119 = por %p117, %p118
    %p120 = scmp.ne.s32.totalorder %s111, %s112
    %p121 = scmp.eq.s32.totalorder %s17, 0
    %p122 = por %p120, %p121
    %p123 = scmp.ne.s32.totalorder %s111, %s112
    %p124 = scmp.eq.s32.totalorder %s18, 1
    %p125 = por %p123, %p124
    %p127 = scmp.ne.s32.totalorder %s112, %s126
    %p128 = scmp.eq.s32.totalorder %s18, 0
    %p129 = por %p127, %p128
    %s131 = sadd.s32 %s130, 1
    %p134 = scmp.eq.s32.totalorder %s12, 1
    %p135 = scmp.ne.s32.totalorder %s130, %s132
    %p136 = scmp.eq.s32.totalorder %s12, 0
    %p137 = por %p135, %p136
    %p138 = scmp.ne.s32.totalorder %s130, %s132
    %p139 = scmp.eq.s32.totalorder %s17, 1
    %p140 = por %p138, %p139
    %p141 = scmp.ne.s32.totalorder %s132, %s133
    %p142 = scmp.eq.s32.totalorder %s17, 0
    %p143 = por %p141, %p142
    %p144 = scmp.ne.s32.totalorder %s132, %s133
    %p145 = scmp.eq.s32.totalorder %s18, 1
    %p146 = por %p144, %p145
    %p148 = scmp.ne.s32.totalorder %s133, %s147
    %p149 = scmp.eq.s32.totalorder %s18, 0
    %p150 = por %p148, %p149
    %s151 = ssub.s32 %s12, %s19
    %p152 = scmp.eq.s32.totalorder %s151, 0
    %s154 = sadd.s32 %s153, 1
    %s155 = scalar_select %p152, %s153, %s154
    %p158 = pneg %p152
    %p159 = scmp.eq.s32.totalorder %s12, 1
    %p160 = por %p158, %p159
    %p161 = scmp.ne.s32.totalorder %s153, %s156
    %p162 = scmp.eq.s32.totalorder %s12, 0
    %p163 = por %p161, %p162
    %p164 = scmp.ne.s32.totalorder %s153, %s156
    %p165 = scmp.eq.s32.totalorder %s17, 1
    %p166 = por %p164, %p165
    %p167 = scmp.ne.s32.totalorder %s156, %s157
    %p168 = scmp.eq.s32.totalorder %s17, 0
    %p169 = por %p167, %p168
    %p170 = scmp.ne.s32.totalorder %s156, %s157
    %p171 = scmp.eq.s32.totalorder %s18, 1
    %p172 = por %p170, %p171
    %p174 = scmp.ne.s32.totalorder %s157, %s173
    %p175 = scmp.eq.s32.totalorder %s18, 0
    %p176 = por %p174, %p175
    %p177 = scmp.le.s32.totalorder 1, %s12
    %p178 = scmp.lt.s32.totalorder %s12, 3
    %p179 = pnand %p177, %p178
    %p180 = pneg %p179
    // Predicated region
    $region9: #{tpu_custom_call.1} parent=5 // pred_check
      _
    $region10: #{tpu_custom_call.1} parent=5 // pred_check_branch
      %182 = sbr.rel (%p179) target = $region12
    $region11: #{tpu_custom_call.1} parent=5 // pred_region
      %s183 = ssub.s32 %s12, 1
      // Predicated region
      $region13: #{tpu_custom_call.1} parent=11 // pred_check
        %p184 = pneg %p59
      $region14: #{tpu_custom_call.1} parent=11 // pred_check_branch
        %186 = sbr.rel (%p184) target = $region16
      $region15: #{tpu_custom_call.1} parent=11 // pred_region
        _
      $region16: #{tpu_custom_call.1} parent=11 // pred_fallthru
        _
      // Predicated region
      $region17: #{tpu_custom_call.1} parent=11 // pred_check
        %p187 = pneg %p80
      $region18: #{tpu_custom_call.1} parent=11 // pred_check_branch
        %189 = sbr.rel (%p187) target = $region20
      $region19: #{tpu_custom_call.1} parent=11 // pred_region
        _
      $region20: #{tpu_custom_call.1} parent=11 // pred_fallthru
        _
      // Predicated region
      $region21: #{tpu_custom_call.1} parent=11 // pred_check
        %p190 = pneg %p101
      $region22: #{tpu_custom_call.1} parent=11 // pred_check_branch
        %192 = sbr.rel (%p190) target = $region24
      $region23: #{tpu_custom_call.1} parent=11 // pred_region
        _
      $region24: #{tpu_custom_call.1} parent=11 // pred_fallthru
        _
      // Predicated region
      $region25: #{tpu_custom_call.1} parent=11 // pred_check
        %p193 = pneg %p122
      $region26: #{tpu_custom_call.1} parent=11 // pred_check_branch
        %195 = sbr.rel (%p193) target = $region28
      $region27: #{tpu_custom_call.1} parent=11 // pred_region
        _
      $region28: #{tpu_custom_call.1} parent=11 // pred_fallthru
        _
      // Predicated region
      $region29: #{tpu_custom_call.1} parent=11 // pred_check
        %p196 = pneg %p143
      $region30: #{tpu_custom_call.1} parent=11 // pred_check_branch
        %198 = sbr.rel (%p196) target = $region32
      $region31: #{tpu_custom_call.1} parent=11 // pred_region
        _
      $region32: #{tpu_custom_call.1} parent=11 // pred_fallthru
        _
    $region12: #{tpu_custom_call.1} parent=5 // pred_fallthru
      _
    %p199 = scmp.lt.s32.totalorder %s12, 2
    // Predicated region
    $region33: #{tpu_custom_call.1} parent=5 // pred_check
      %p200 = pneg %p199
    $region34: #{tpu_custom_call.1} parent=5 // pred_check_branch
      %202 = sbr.rel (%p200) target = $region36
    $region35: #{tpu_custom_call.1} parent=5 // pred_region
      // Predicated region
      $region37: #{tpu_custom_call.1} parent=35 // pred_check
        %p203 = pneg %p32
      $region38: #{tpu_custom_call.1} parent=35 // pred_check_branch
        %205 = sbr.rel (%p203) target = $region40
      $region39: #{tpu_custom_call.1} parent=35 // pred_region
        %s206 = smul.u32 2, %s12
        %p207 = scmp.lt.s32.totalorder %s206, 3
        %s208 = scalar_select %p207, %s206, 3
        %s209 = smul.addr %s208, 17
        %s210 = smul.addr %s209, 8
        %s211 = scalar_lea.vmem %s0, %s210
        %s212 = smul.u32 2, %s12
      $region40: #{tpu_custom_call.1} parent=35 // pred_fallthru
        _
    $region36: #{tpu_custom_call.1} parent=5 // pred_fallthru
      _
    %p213 = scmp.le.s32.totalorder 1, %s12
    %p214 = scmp.lt.s32.totalorder %s12, 3
    %p215 = pnand %p213, %p214
    %p216 = pneg %p215
    // Predicated region
    $region41: #{tpu_custom_call.1} parent=5 // pred_check
      _
    $region42: #{tpu_custom_call.1} parent=5 // pred_check_branch
      %218 = sbr.rel (%p215) target = $region44
    $region43: #{tpu_custom_call.1} parent=5 // pred_region
      %s219 = ssub.s32 %s12, 1
      %s220 = smul.u32 2, %s17
      %p221 = scmp.lt.s32.totalorder %s220, 3
      %s222 = scalar_select %p221, %s220, 3
      %s223 = smul.addr %s222, 17
      %s224 = smul.addr %s223, 8
      %s225 = scalar_lea.vmem %s0, %s224
      %p226 = pneg %p38
      %p227 = pneg %p35
      %p228 = pneg %p59
      %p229 = pneg %p56
      %p230 = pneg %p80
      %p231 = pneg %p77
      %p232 = pneg %p101
      %p233 = pneg %p98
      %p234 = pneg %p122
      %p235 = pneg %p119
      %p236 = pneg %p143
      %p237 = pneg %p140
      %p238 = pneg %p169
      %p239 = pneg %p166
      %s240 = smul.u32 2, %s17
      %p241 = scmp.lt.s32.totalorder %s240, 3
      %s242 = scalar_select %p241, %s240, 3
      %s243 = smul.addr %s242, 32
      %s244 = smul.addr %s243, 8
      %s245 = scalar_lea.vmem %s6, %s244
      %s246 = smul.u32 2, %s17
      %p247 = scmp.lt.s32.totalorder %s246, 3
      %s248 = scalar_select %p247, %s246, 3
      %s249 = smul.addr %s248, 17
      %s250 = smul.addr %s249, 8
      %s251 = scalar_lea.vmem %s0, %s250
      %s252 = smul.u32 2, %s17
      %s253 = smul.u32 2, %s17
      %p254 = scmp.lt.s32.totalorder %s253, 3
      %s255 = scalar_select %p254, %s253, 3
      %s256 = smul.addr %s255, 32
      %s257 = smul.addr %s256, 8
      %s258 = scalar_lea.vmem %s6, %s257
      %s259 = smul.u32 2, %s17
      %v260 = vld [vmem:[%s251] sm:$0xff]
      %v261 = vld [vmem:[%s251 + $0x8] sm:$0xff]
      %v262 = vld [vmem:[%s251 + $0x10] sm:$0xff]
      %v263 = vld [vmem:[%s251 + $0x18] sm:$0xff]
      %v264 = vld [vmem:[%s251 + $0x20] sm:$0xff]
      %v265 = vld [vmem:[%s251 + $0x28] sm:$0xff]
      %v266 = vld [vmem:[%s251 + $0x30] sm:$0xff]
      %v267 = vld [vmem:[%s251 + $0x38] sm:$0xff]
      %v268 = vld [vmem:[%s251 + $0x40] sm:$0xff]
      %v269 = vld [vmem:[%s251 + $0x48] sm:$0xff]
      %v270 = vld [vmem:[%s251 + $0x50] sm:$0xff]
      %v271 = vld [vmem:[%s251 + $0x58] sm:$0xff]
      %v272 = vld [vmem:[%s251 + $0x60] sm:$0xff]
      %v273 = vld [vmem:[%s251 + $0x68] sm:$0xff]
      %v274 = vld [vmem:[%s251 + $0x70] sm:$0xff]
      %v275 = vld [vmem:[%s251 + $0x78] sm:$0xff]
      %v276 = vld [vmem:[%s251 + $0x80] sm:$0x7]
      %v277 = vld [vmem:[%s251 + $0x88] sm:$0xff]
      %v278 = vld [vmem:[%s251 + $0x90] sm:$0xff]
      %v279 = vld [vmem:[%s251 + $0x98] sm:$0xff]
      %v280 = vld [vmem:[%s251 + $0xa0] sm:$0xff]
      %v281 = vld [vmem:[%s251 + $0xa8] sm:$0xff]
      %v282 = vld [vmem:[%s251 + $0xb0] sm:$0xff]
      %v283 = vld [vmem:[%s251 + $0xb8] sm:$0xff]
      %v284 = vld [vmem:[%s251 + $0xc0] sm:$0xff]
      %v285 = vld [vmem:[%s251 + $0xc8] sm:$0xff]
      %v286 = vld [vmem:[%s251 + $0xd0] sm:$0xff]
      %v287 = vld [vmem:[%s251 + $0xd8] sm:$0xff]
      %v288 = vld [vmem:[%s251 + $0xe0] sm:$0xff]
      %v289 = vld [vmem:[%s251 + $0xe8] sm:$0xff]
      %v290 = vld [vmem:[%s251 + $0xf0] sm:$0xff]
      %v291 = vld [vmem:[%s251 + $0xf8] sm:$0xff]
      %v292 = vld [vmem:[%s251 + $0x100] sm:$0xff]
      %v293 = vld [vmem:[%s251 + $0x108] sm:$0x7]
      %vm311 = vcmask 1046528
      %v312 = vrot.slane %v260, 1
      %v313 = vrot.slane %v261, 1
      %v314 = vsel %vm311, %v312, %v313
      %v315 = vrot.slane %v262, 1
      %v316 = vsel %vm311, %v313, %v315
      %v317 = vrot.slane %v263, 1
      %v318 = vsel %vm311, %v315, %v317
      %v319 = vrot.slane %v264, 1
      %v320 = vsel %vm311, %v317, %v319
      %v321 = vrot.slane %v265, 1
      %v322 = vsel %vm311, %v319, %v321
      %v323 = vrot.slane %v266, 1
      %v324 = vsel %vm311, %v321, %v323
      %v325 = vrot.slane %v267, 1
      %v326 = vsel %vm311, %v323, %v325
      %v327 = vrot.slane %v268, 1
      %v328 = vsel %vm311, %v325, %v327
      %v329 = vrot.slane %v269, 1
      %v330 = vsel %vm311, %v327, %v329
      %v331 = vrot.slane %v270, 1
      %v332 = vsel %vm311, %v329, %v331
      %v333 = vrot.slane %v271, 1
      %v334 = vsel %vm311, %v331, %v333
      %v335 = vrot.slane %v272, 1
      %v336 = vsel %vm311, %v333, %v335
      %v337 = vrot.slane %v273, 1
      %v338 = vsel %vm311, %v335, %v337
      %v339 = vrot.slane %v274, 1
      %v340 = vsel %vm311, %v337, %v339
      %v341 = vrot.slane %v275, 1
      %v342 = vsel %vm311, %v339, %v341
      %v343 = vrot.slane %v276, 1
      %v344 = vsel %vm311, %v341, %v343
      %345 = vrot.lane.b32.xlu0 %v314, 32
      %v346 = vpop.permute.xlu0 %345
      %347 = vrot.lane.b32.xlu0 %v316, 32
      %v348 = vpop.permute.xlu0 %347
      %349 = vrot.lane.b32.xlu0 %v318, 32
      %v350 = vpop.permute.xlu0 %349
      %351 = vrot.lane.b32.xlu0 %v320, 32
      %v352 = vpop.permute.xlu0 %351
      %353 = vrot.lane.b32.xlu0 %v322, 32
      %v354 = vpop.permute.xlu0 %353
      %355 = vrot.lane.b32.xlu0 %v324, 32
      %v356 = vpop.permute.xlu0 %355
      %357 = vrot.lane.b32.xlu0 %v326, 32
      %v358 = vpop.permute.xlu0 %357
      %359 = vrot.lane.b32.xlu0 %v328, 32
      %v360 = vpop.permute.xlu0 %359
      %361 = vrot.lane.b32.xlu0 %v330, 32
      %v362 = vpop.permute.xlu0 %361
      %363 = vrot.lane.b32.xlu0 %v332, 32
      %v364 = vpop.permute.xlu0 %363
      %365 = vrot.lane.b32.xlu0 %v334, 32
      %v366 = vpop.permute.xlu0 %365
      %367 = vrot.lane.b32.xlu0 %v336, 32
      %v368 = vpop.permute.xlu0 %367
      %369 = vrot.lane.b32.xlu0 %v338, 32
      %v370 = vpop.permute.xlu0 %369
      %371 = vrot.lane.b32.xlu0 %v340, 32
      %v372 = vpop.permute.xlu0 %371
      %373 = vrot.lane.b32.xlu0 %v342, 32
      %v374 = vpop.permute.xlu0 %373
      %375 = vrot.lane.b32.xlu0 %v344, 32
      %v376 = vpop.permute.xlu0 %375
      %vm393 = vcmask 1045504
      %v394 = vrot.slane %v260, 2
      %v395 = vrot.slane %v261, 2
      %v396 = vsel %vm393, %v394, %v395
      %v397 = vrot.slane %v262, 2
      %v398 = vsel %vm393, %v395, %v397
      %v399 = vrot.slane %v263, 2
      %v400 = vsel %vm393, %v397, %v399
      %v401 = vrot.slane %v264, 2
      %v402 = vsel %vm393, %v399, %v401
      %v403 = vrot.slane %v265, 2
      %v404 = vsel %vm393, %v401, %v403
      %v405 = vrot.slane %v266, 2
      %v406 = vsel %vm393, %v403, %v405
      %v407 = vrot.slane %v267, 2
      %v408 = vsel %vm393, %v405, %v407
      %v409 = vrot.slane %v268, 2
      %v410 = vsel %vm393, %v407, %v409
      %v411 = vrot.slane %v269, 2
      %v412 = vsel %vm393, %v409, %v411
      %v413 = vrot.slane %v270, 2
      %v414 = vsel %vm393, %v411, %v413
      %v415 = vrot.slane %v271, 2
      %v416 = vsel %vm393, %v413, %v415
      %v417 = vrot.slane %v272, 2
      %v418 = vsel %vm393, %v415, %v417
      %v419 = vrot.slane %v273, 2
      %v420 = vsel %vm393, %v417, %v419
      %v421 = vrot.slane %v274, 2
      %v422 = vsel %vm393, %v419, %v421
      %v423 = vrot.slane %v275, 2
      %v424 = vsel %vm393, %v421, %v423
      %v425 = vrot.slane %v276, 2
      %v426 = vsel %vm393, %v423, %v425
      %427 = vrot.lane.b32.xlu0 %v396, 64
      %v428 = vpop.permute.xlu0 %427
      %429 = vrot.lane.b32.xlu0 %v398, 64
      %v430 = vpop.permute.xlu0 %429
      %431 = vrot.lane.b32.xlu0 %v400, 64
      %v432 = vpop.permute.xlu0 %431
      %433 = vrot.lane.b32.xlu0 %v402, 64
      %v434 = vpop.permute.xlu0 %433
      %435 = vrot.lane.b32.xlu0 %v404, 64
      %v436 = vpop.permute.xlu0 %435
      %437 = vrot.lane.b32.xlu0 %v406, 64
      %v438 = vpop.permute.xlu0 %437
      %439 = vrot.lane.b32.xlu0 %v408, 64
      %v440 = vpop.permute.xlu0 %439
      %441 = vrot.lane.b32.xlu0 %v410, 64
      %v442 = vpop.permute.xlu0 %441
      %443 = vrot.lane.b32.xlu0 %v412, 64
      %v444 = vpop.permute.xlu0 %443
      %445 = vrot.lane.b32.xlu0 %v414, 64
      %v446 = vpop.permute.xlu0 %445
      %447 = vrot.lane.b32.xlu0 %v416, 64
      %v448 = vpop.permute.xlu0 %447
      %449 = vrot.lane.b32.xlu0 %v418, 64
      %v450 = vpop.permute.xlu0 %449
      %451 = vrot.lane.b32.xlu0 %v420, 64
      %v452 = vpop.permute.xlu0 %451
      %453 = vrot.lane.b32.xlu0 %v422, 64
      %v454 = vpop.permute.xlu0 %453
      %455 = vrot.lane.b32.xlu0 %v424, 64
      %v456 = vpop.permute.xlu0 %455
      %457 = vrot.lane.b32.xlu0 %v426, 64
      %v458 = vpop.permute.xlu0 %457
      %vm475 = vcmask 1044480
      %v476 = vrot.slane %v260, 3
      %v477 = vrot.slane %v261, 3
      %v478 = vsel %vm475, %v476, %v477
      %v479 = vrot.slane %v262, 3
      %v480 = vsel %vm475, %v477, %v479
      %v481 = vrot.slane %v263, 3
      %v482 = vsel %vm475, %v479, %v481
      %v483 = vrot.slane %v264, 3
      %v484 = vsel %vm475, %v481, %v483
      %v485 = vrot.slane %v265, 3
      %v486 = vsel %vm475, %v483, %v485
      %v487 = vrot.slane %v266, 3
      %v488 = vsel %vm475, %v485, %v487
      %v489 = vrot.slane %v267, 3
      %v490 = vsel %vm475, %v487, %v489
      %v491 = vrot.slane %v268, 3
      %v492 = vsel %vm475, %v489, %v491
      %v493 = vrot.slane %v269, 3
      %v494 = vsel %vm475, %v491, %v493
      %v495 = vrot.slane %v270, 3
      %v496 = vsel %vm475, %v493, %v495
      %v497 = vrot.slane %v271, 3
      %v498 = vsel %vm475, %v495, %v497
      %v499 = vrot.slane %v272, 3
      %v500 = vsel %vm475, %v497, %v499
      %v501 = vrot.slane %v273, 3
      %v502 = vsel %vm475, %v499, %v501
      %v503 = vrot.slane %v274, 3
      %v504 = vsel %vm475, %v501, %v503
      %v505 = vrot.slane %v275, 3
      %v506 = vsel %vm475, %v503, %v505
      %v507 = vrot.slane %v276, 3
      %v508 = vsel %vm475, %v505, %v507
      %509 = vrot.lane.b32.xlu0 %v478, 96
      %v510 = vpop.permute.xlu0 %509
      %511 = vrot.lane.b32.xlu0 %v480, 96
      %v512 = vpop.permute.xlu0 %511
      %513 = vrot.lane.b32.xlu0 %v482, 96
      %v514 = vpop.permute.xlu0 %513
      %515 = vrot.lane.b32.xlu0 %v484, 96
      %v516 = vpop.permute.xlu0 %515
      %517 = vrot.lane.b32.xlu0 %v486, 96
      %v518 = vpop.permute.xlu0 %517
      %519 = vrot.lane.b32.xlu0 %v488, 96
      %v520 = vpop.permute.xlu0 %519
      %521 = vrot.lane.b32.xlu0 %v490, 96
      %v522 = vpop.permute.xlu0 %521
      %523 = vrot.lane.b32.xlu0 %v492, 96
      %v524 = vpop.permute.xlu0 %523
      %525 = vrot.lane.b32.xlu0 %v494, 96
      %v526 = vpop.permute.xlu0 %525
      %527 = vrot.lane.b32.xlu0 %v496, 96
      %v528 = vpop.permute.xlu0 %527
      %529 = vrot.lane.b32.xlu0 %v498, 96
      %v530 = vpop.permute.xlu0 %529
      %531 = vrot.lane.b32.xlu0 %v500, 96
      %v532 = vpop.permute.xlu0 %531
      %533 = vrot.lane.b32.xlu0 %v502, 96
      %v534 = vpop.permute.xlu0 %533
      %535 = vrot.lane.b32.xlu0 %v504, 96
      %v536 = vpop.permute.xlu0 %535
      %537 = vrot.lane.b32.xlu0 %v506, 96
      %v538 = vpop.permute.xlu0 %537
      %539 = vrot.lane.b32.xlu0 %v508, 96
      %v540 = vpop.permute.xlu0 %539
      %vm557 = vcmask 261120
      %v558 = vsel %vm557, %v260, %v346
      %v559 = vsel %vm557, %v261, %v348
      %v560 = vsel %vm557, %v262, %v350
      %v561 = vsel %vm557, %v263, %v352
      %v562 = vsel %vm557, %v264, %v354
      %v563 = vsel %vm557, %v265, %v356
      %v564 = vsel %vm557, %v266, %v358
      %v565 = vsel %vm557, %v267, %v360
      %v566 = vsel %vm557, %v268, %v362
      %v567 = vsel %vm557, %v269, %v364
      %v568 = vsel %vm557, %v270, %v366
      %v569 = vsel %vm557, %v271, %v368
      %v570 = vsel %vm557, %v272, %v370
      %v571 = vsel %vm557, %v273, %v372
      %v572 = vsel %vm557, %v274, %v374
      %v573 = vsel %vm557, %v275, %v376
      %vm574 = vcmask 523264
      %v575 = vsel %vm574, %v558, %v428
      %v576 = vsel %vm574, %v559, %v430
      %v577 = vsel %vm574, %v560, %v432
      %v578 = vsel %vm574, %v561, %v434
      %v579 = vsel %vm574, %v562, %v436
      %v580 = vsel %vm574, %v563, %v438
      %v581 = vsel %vm574, %v564, %v440
      %v582 = vsel %vm574, %v565, %v442
      %v583 = vsel %vm574, %v566, %v444
      %v584 = vsel %vm574, %v567, %v446
      %v585 = vsel %vm574, %v568, %v448
      %v586 = vsel %vm574, %v569, %v450
      %v587 = vsel %vm574, %v570, %v452
      %v588 = vsel %vm574, %v571, %v454
      %v589 = vsel %vm574, %v572, %v456
      %v590 = vsel %vm574, %v573, %v458
      %vm591 = vcmask 785408
      %v592 = vsel %vm591, %v575, %v510
      %v593 = vsel %vm591, %v576, %v512
      %v594 = vsel %vm591, %v577, %v514
      %v595 = vsel %vm591, %v578, %v516
      %v596 = vsel %vm591, %v579, %v518
      %v597 = vsel %vm591, %v580, %v520
      %v598 = vsel %vm591, %v581, %v522
      %v599 = vsel %vm591, %v582, %v524
      %v600 = vsel %vm591, %v583, %v526
      %v601 = vsel %vm591, %v584, %v528
      %v602 = vsel %vm591, %v585, %v530
      %v603 = vsel %vm591, %v586, %v532
      %v604 = vsel %vm591, %v587, %v534
      %v605 = vsel %vm591, %v588, %v536
      %v606 = vsel %vm591, %v589, %v538
      %v607 = vsel %vm591, %v590, %v540
      %v625 = vrot.slane %v277, 1
      %v626 = vrot.slane %v278, 1
      %v627 = vsel %vm311, %v625, %v626
      %v628 = vrot.slane %v279, 1
      %v629 = vsel %vm311, %v626, %v628
      %v630 = vrot.slane %v280, 1
      %v631 = vsel %vm311, %v628, %v630
      %v632 = vrot.slane %v281, 1
      %v633 = vsel %vm311, %v630, %v632
      %v634 = vrot.slane %v282, 1
      %v635 = vsel %vm311, %v632, %v634
      %v636 = vrot.slane %v283, 1
      %v637 = vsel %vm311, %v634, %v636
      %v638 = vrot.slane %v284, 1
      %v639 = vsel %vm311, %v636, %v638
      %v640 = vrot.slane %v285, 1
      %v641 = vsel %vm311, %v638, %v640
      %v642 = vrot.slane %v286, 1
      %v643 = vsel %vm311, %v640, %v642
      %v644 = vrot.slane %v287, 1
      %v645 = vsel %vm311, %v642, %v644
      %v646 = vrot.slane %v288, 1
      %v647 = vsel %vm311, %v644, %v646
      %v648 = vrot.slane %v289, 1
      %v649 = vsel %vm311, %v646, %v648
      %v650 = vrot.slane %v290, 1
      %v651 = vsel %vm311, %v648, %v650
      %v652 = vrot.slane %v291, 1
      %v653 = vsel %vm311, %v650, %v652
      %v654 = vrot.slane %v292, 1
      %v655 = vsel %vm311, %v652, %v654
      %v656 = vrot.slane %v293, 1
      %v657 = vsel %vm311, %v654, %v656
      %658 = vrot.lane.b32.xlu0 %v627, 32
      %v659 = vpop.permute.xlu0 %658
      %660 = vrot.lane.b32.xlu0 %v629, 32
      %v661 = vpop.permute.xlu0 %660
      %662 = vrot.lane.b32.xlu0 %v631, 32
      %v663 = vpop.permute.xlu0 %662
      %664 = vrot.lane.b32.xlu0 %v633, 32
      %v665 = vpop.permute.xlu0 %664
      %666 = vrot.lane.b32.xlu0 %v635, 32
      %v667 = vpop.permute.xlu0 %666
      %668 = vrot.lane.b32.xlu0 %v637, 32
      %v669 = vpop.permute.xlu0 %668
      %670 = vrot.lane.b32.xlu0 %v639, 32
      %v671 = vpop.permute.xlu0 %670
      %672 = vrot.lane.b32.xlu0 %v641, 32
      %v673 = vpop.permute.xlu0 %672
      %674 = vrot.lane.b32.xlu0 %v643, 32
      %v675 = vpop.permute.xlu0 %674
      %676 = vrot.lane.b32.xlu0 %v645, 32
      %v677 = vpop.permute.xlu0 %676
      %678 = vrot.lane.b32.xlu0 %v647, 32
      %v679 = vpop.permute.xlu0 %678
      %680 = vrot.lane.b32.xlu0 %v649, 32
      %v681 = vpop.permute.xlu0 %680
      %682 = vrot.lane.b32.xlu0 %v651, 32
      %v683 = vpop.permute.xlu0 %682
      %684 = vrot.lane.b32.xlu0 %v653, 32
      %v685 = vpop.permute.xlu0 %684
      %686 = vrot.lane.b32.xlu0 %v655, 32
      %v687 = vpop.permute.xlu0 %686
      %688 = vrot.lane.b32.xlu0 %v657, 32
      %v689 = vpop.permute.xlu0 %688
      %v706 = vrot.slane %v277, 2
      %v707 = vrot.slane %v278, 2
      %v708 = vsel %vm393, %v706, %v707
      %v709 = vrot.slane %v279, 2
      %v710 = vsel %vm393, %v707, %v709
      %v711 = vrot.slane %v280, 2
      %v712 = vsel %vm393, %v709, %v711
      %v713 = vrot.slane %v281, 2
      %v714 = vsel %vm393, %v711, %v713
      %v715 = vrot.slane %v282, 2
      %v716 = vsel %vm393, %v713, %v715
      %v717 = vrot.slane %v283, 2
      %v718 = vsel %vm393, %v715, %v717
      %v719 = vrot.slane %v284, 2
      %v720 = vsel %vm393, %v717, %v719
      %v721 = vrot.slane %v285, 2
      %v722 = vsel %vm393, %v719, %v721
      %v723 = vrot.slane %v286, 2
      %v724 = vsel %vm393, %v721, %v723
      %v725 = vrot.slane %v287, 2
      %v726 = vsel %vm393, %v723, %v725
      %v727 = vrot.slane %v288, 2
      %v728 = vsel %vm393, %v725, %v727
      %v729 = vrot.slane %v289, 2
      %v730 = vsel %vm393, %v727, %v729
      %v731 = vrot.slane %v290, 2
      %v732 = vsel %vm393, %v729, %v731
      %v733 = vrot.slane %v291, 2
      %v734 = vsel %vm393, %v731, %v733
      %v735 = vrot.slane %v292, 2
      %v736 = vsel %vm393, %v733, %v735
      %v737 = vrot.slane %v293, 2
      %v738 = vsel %vm393, %v735, %v737
      %739 = vrot.lane.b32.xlu0 %v708, 64
      %v740 = vpop.permute.xlu0 %739
      %741 = vrot.lane.b32.xlu0 %v710, 64
      %v742 = vpop.permute.xlu0 %741
      %743 = vrot.lane.b32.xlu0 %v712, 64
      %v744 = vpop.permute.xlu0 %743
      %745 = vrot.lane.b32.xlu0 %v714, 64
      %v746 = vpop.permute.xlu0 %745
      %747 = vrot.lane.b32.xlu0 %v716, 64
      %v748 = vpop.permute.xlu0 %747
      %749 = vrot.lane.b32.xlu0 %v718, 64
      %v750 = vpop.permute.xlu0 %749
      %751 = vrot.lane.b32.xlu0 %v720, 64
      %v752 = vpop.permute.xlu0 %751
      %753 = vrot.lane.b32.xlu0 %v722, 64
      %v754 = vpop.permute.xlu0 %753
      %755 = vrot.lane.b32.xlu0 %v724, 64
      %v756 = vpop.permute.xlu0 %755
      %757 = vrot.lane.b32.xlu0 %v726, 64
      %v758 = vpop.permute.xlu0 %757
      %759 = vrot.lane.b32.xlu0 %v728, 64
      %v760 = vpop.permute.xlu0 %759
      %761 = vrot.lane.b32.xlu0 %v730, 64
      %v762 = vpop.permute.xlu0 %761
      %763 = vrot.lane.b32.xlu0 %v732, 64
      %v764 = vpop.permute.xlu0 %763
      %765 = vrot.lane.b32.xlu0 %v734, 64
      %v766 = vpop.permute.xlu0 %765
      %767 = vrot.lane.b32.xlu0 %v736, 64
      %v768 = vpop.permute.xlu0 %767
      %769 = vrot.lane.b32.xlu0 %v738, 64
      %v770 = vpop.permute.xlu0 %769
      %v787 = vrot.slane %v277, 3
      %v788 = vrot.slane %v278, 3
      %v789 = vsel %vm475, %v787, %v788
      %v790 = vrot.slane %v279, 3
      %v791 = vsel %vm475, %v788, %v790
      %v792 = vrot.slane %v280, 3
      %v793 = vsel %vm475, %v790, %v792
      %v794 = vrot.slane %v281, 3
      %v795 = vsel %vm475, %v792, %v794
      %v796 = vrot.slane %v282, 3
      %v797 = vsel %vm475, %v794, %v796
      %v798 = vrot.slane %v283, 3
      %v799 = vsel %vm475, %v796, %v798
      %v800 = vrot.slane %v284, 3
      %v801 = vsel %vm475, %v798, %v800
      %v802 = vrot.slane %v285, 3
      %v803 = vsel %vm475, %v800, %v802
      %v804 = vrot.slane %v286, 3
      %v805 = vsel %vm475, %v802, %v804
      %v806 = vrot.slane %v287, 3
      %v807 = vsel %vm475, %v804, %v806
      %v808 = vrot.slane %v288, 3
      %v809 = vsel %vm475, %v806, %v808
      %v810 = vrot.slane %v289, 3
      %v811 = vsel %vm475, %v808, %v810
      %v812 = vrot.slane %v290, 3
      %v813 = vsel %vm475, %v810, %v812
      %v814 = vrot.slane %v291, 3
      %v815 = vsel %vm475, %v812, %v814
      %v816 = vrot.slane %v292, 3
      %v817 = vsel %vm475, %v814, %v816
      %v818 = vrot.slane %v293, 3
      %v819 = vsel %vm475, %v816, %v818
      %820 = vrot.lane.b32.xlu0 %v789, 96
      %v821 = vpop.permute.xlu0 %820
      %822 = vrot.lane.b32.xlu0 %v791, 96
      %v823 = vpop.permute.xlu0 %822
      %824 = vrot.lane.b32.xlu0 %v793, 96
      %v825 = vpop.permute.xlu0 %824
      %826 = vrot.lane.b32.xlu0 %v795, 96
      %v827 = vpop.permute.xlu0 %826
      %828 = vrot.lane.b32.xlu0 %v797, 96
      %v829 = vpop.permute.xlu0 %828
      %830 = vrot.lane.b32.xlu0 %v799, 96
      %v831 = vpop.permute.xlu0 %830
      %832 = vrot.lane.b32.xlu0 %v801, 96
      %v833 = vpop.permute.xlu0 %832
      %834 = vrot.lane.b32.xlu0 %v803, 96
      %v835 = vpop.permute.xlu0 %834
      %836 = vrot.lane.b32.xlu0 %v805, 96
      %v837 = vpop.permute.xlu0 %836
      %838 = vrot.lane.b32.xlu0 %v807, 96
      %v839 = vpop.permute.xlu0 %838
      %840 = vrot.lane.b32.xlu0 %v809, 96
      %v841 = vpop.permute.xlu0 %840
      %842 = vrot.lane.b32.xlu0 %v811, 96
      %v843 = vpop.permute.xlu0 %842
      %844 = vrot.lane.b32.xlu0 %v813, 96
      %v845 = vpop.permute.xlu0 %844
      %846 = vrot.lane.b32.xlu0 %v815, 96
      %v847 = vpop.permute.xlu0 %846
      %848 = vrot.lane.b32.xlu0 %v817, 96
      %v849 = vpop.permute.xlu0 %848
      %850 = vrot.lane.b32.xlu0 %v819, 96
      %v851 = vpop.permute.xlu0 %850
      %v868 = vsel %vm557, %v277, %v659
      %v869 = vsel %vm557, %v278, %v661
      %v870 = vsel %vm557, %v279, %v663
      %v871 = vsel %vm557, %v280, %v665
      %v872 = vsel %vm557, %v281, %v667
      %v873 = vsel %vm557, %v282, %v669
      %v874 = vsel %vm557, %v283, %v671
      %v875 = vsel %vm557, %v284, %v673
      %v876 = vsel %vm557, %v285, %v675
      %v877 = vsel %vm557, %v286, %v677
      %v878 = vsel %vm557, %v287, %v679
      %v879 = vsel %vm557, %v288, %v681
      %v880 = vsel %vm557, %v289, %v683
      %v881 = vsel %vm557, %v290, %v685
      %v882 = vsel %vm557, %v291, %v687
      %v883 = vsel %vm557, %v292, %v689
      %v884 = vsel %vm574, %v868, %v740
      %v885 = vsel %vm574, %v869, %v742
      %v886 = vsel %vm574, %v870, %v744
      %v887 = vsel %vm574, %v871, %v746
      %v888 = vsel %vm574, %v872, %v748
      %v889 = vsel %vm574, %v873, %v750
      %v890 = vsel %vm574, %v874, %v752
      %v891 = vsel %vm574, %v875, %v754
      %v892 = vsel %vm574, %v876, %v756
      %v893 = vsel %vm574, %v877, %v758
      %v894 = vsel %vm574, %v878, %v760
      %v895 = vsel %vm574, %v879, %v762
      %v896 = vsel %vm574, %v880, %v764
      %v897 = vsel %vm574, %v881, %v766
      %v898 = vsel %vm574, %v882, %v768
      %v899 = vsel %vm574, %v883, %v770
      %v900 = vsel %vm591, %v884, %v821
      %v901 = vsel %vm591, %v885, %v823
      %v902 = vsel %vm591, %v886, %v825
      %v903 = vsel %vm591, %v887, %v827
      %v904 = vsel %vm591, %v888, %v829
      %v905 = vsel %vm591, %v889, %v831
      %v906 = vsel %vm591, %v890, %v833
      %v907 = vsel %vm591, %v891, %v835
      %v908 = vsel %vm591, %v892, %v837
      %v909 = vsel %vm591, %v893, %v839
      %v910 = vsel %vm591, %v894, %v841
      %v911 = vsel %vm591, %v895, %v843
      %v912 = vsel %vm591, %v896, %v845
      %v913 = vsel %vm591, %v897, %v847
      %v914 = vsel %vm591, %v898, %v849
      %v915 = vsel %vm591, %v899, %v851
      %v916 = vpack.c.bf16 %v593, %v592
      %v917 = vpack.c.bf16 %v595, %v594
      %v918 = vpack.c.bf16 %v597, %v596
      %v919 = vpack.c.bf16 %v599, %v598
      %v920 = vpack.c.bf16 %v601, %v600
      %v921 = vpack.c.bf16 %v603, %v602
      %v922 = vpack.c.bf16 %v605, %v604
      %v923 = vpack.c.bf16 %v607, %v606
      %v924 = vpack.c.bf16 %v901, %v900
      %v925 = vpack.c.bf16 %v903, %v902
      %v926 = vpack.c.bf16 %v905, %v904
      %v927 = vpack.c.bf16 %v907, %v906
      %v928 = vpack.c.bf16 %v909, %v908
      %v929 = vpack.c.bf16 %v911, %v910
      %v930 = vpack.c.bf16 %v913, %v912
      %v931 = vpack.c.bf16 %v915, %v914
      %v932 = vld [vmem:[%s1] sm:$0xff]
      %v933 = vld [vmem:[%s1 + $0x8] sm:$0xff]
      %v934 = vld [vmem:[%s1 + $0x10] sm:$0xff]
      %v935 = vld [vmem:[%s1 + $0x18] sm:$0xff]
      %v936 = vld [vmem:[%s1 + $0x20] sm:$0xff]
      %v937 = vld [vmem:[%s1 + $0x28] sm:$0xff]
      %v938 = vld [vmem:[%s1 + $0x30] sm:$0xff]
      %v939 = vld [vmem:[%s1 + $0x38] sm:$0xff]
      %v940 = vld [vmem:[%s1 + $0x40] sm:$0xff]
      %v941 = vld [vmem:[%s1 + $0x48] sm:$0xff]
      %v942 = vld [vmem:[%s1 + $0x50] sm:$0xff]
      %v943 = vld [vmem:[%s1 + $0x58] sm:$0xff]
      %v944 = vld [vmem:[%s1 + $0x60] sm:$0xff]
      %v945 = vld [vmem:[%s1 + $0x68] sm:$0xff]
      %v946 = vld [vmem:[%s1 + $0x70] sm:$0xff]
      %v947 = vld [vmem:[%s1 + $0x78] sm:$0xff]
      %v948 = vld [vmem:[%s1 + $0x80] sm:$0xff]
      %v949 = vld [vmem:[%s1 + $0x88] sm:$0xff]
      %v950 = vld [vmem:[%s1 + $0x90] sm:$0xff]
      %v951 = vld [vmem:[%s1 + $0x98] sm:$0xff]
      %v952 = vld [vmem:[%s1 + $0xa0] sm:$0xff]
      %v953 = vld [vmem:[%s1 + $0xa8] sm:$0xff]
      %v954 = vld [vmem:[%s1 + $0xb0] sm:$0xff]
      %v955 = vld [vmem:[%s1 + $0xb8] sm:$0xff]
      %v956 = vld [vmem:[%s1 + $0xc0] sm:$0xff]
      %v957 = vld [vmem:[%s1 + $0xc8] sm:$0xff]
      %v958 = vld [vmem:[%s1 + $0xd0] sm:$0xff]
      %v959 = vld [vmem:[%s1 + $0xd8] sm:$0xff]
      %v960 = vld [vmem:[%s1 + $0xe0] sm:$0xff]
      %v961 = vld [vmem:[%s1 + $0xe8] sm:$0xff]
      %v962 = vld [vmem:[%s1 + $0xf0] sm:$0xff]
      %v963 = vld [vmem:[%s1 + $0xf8] sm:$0xff]
      %v996 = vunpack.c.l.b16 %v932
      %v997 = vunpack.c.h.b16 %v932
      %v998 = vunpack.c.l.b16 %v933
      %v999 = vunpack.c.h.b16 %v933
      %v1000 = vunpack.c.l.b16 %v934
      %v1001 = vunpack.c.h.b16 %v934
      %v1002 = vunpack.c.l.b16 %v935
      %v1003 = vunpack.c.h.b16 %v935
      %v1004 = vunpack.c.l.b16 %v936
      %v1005 = vunpack.c.h.b16 %v936
      %v1006 = vunpack.c.l.b16 %v937
      %v1007 = vunpack.c.h.b16 %v937
      %v1008 = vunpack.c.l.b16 %v938
      %v1009 = vunpack.c.h.b16 %v938
      %v1010 = vunpack.c.l.b16 %v939
      %v1011 = vunpack.c.h.b16 %v939
      %v1012 = vunpack.c.l.b16 %v940
      %v1013 = vunpack.c.h.b16 %v940
      %v1014 = vunpack.c.l.b16 %v941
      %v1015 = vunpack.c.h.b16 %v941
      %v1016 = vunpack.c.l.b16 %v942
      %v1017 = vunpack.c.h.b16 %v942
      %v1018 = vunpack.c.l.b16 %v943
      %v1019 = vunpack.c.h.b16 %v943
      %v1020 = vunpack.c.l.b16 %v944
      %v1021 = vunpack.c.h.b16 %v944
      %v1022 = vunpack.c.l.b16 %v945
      %v1023 = vunpack.c.h.b16 %v945
      %v1024 = vunpack.c.l.b16 %v946
      %v1025 = vunpack.c.h.b16 %v946
      %v1026 = vunpack.c.l.b16 %v947
      %v1027 = vunpack.c.h.b16 %v947
      %v1028 = vunpack.c.l.b16 %v948
      %v1029 = vunpack.c.h.b16 %v948
      %v1030 = vunpack.c.l.b16 %v949
      %v1031 = vunpack.c.h.b16 %v949
      %v1032 = vunpack.c.l.b16 %v950
      %v1033 = vunpack.c.h.b16 %v950
      %v1034 = vunpack.c.l.b16 %v951
      %v1035 = vunpack.c.h.b16 %v951
      %v1036 = vunpack.c.l.b16 %v952
      %v1037 = vunpack.c.h.b16 %v952
      %v1038 = vunpack.c.l.b16 %v953
      %v1039 = vunpack.c.h.b16 %v953
      %v1040 = vunpack.c.l.b16 %v954
      %v1041 = vunpack.c.h.b16 %v954
      %v1042 = vunpack.c.l.b16 %v955
      %v1043 = vunpack.c.h.b16 %v955
      %v1044 = vunpack.c.l.b16 %v956
      %v1045 = vunpack.c.h.b16 %v956
      %v1046 = vunpack.c.l.b16 %v957
      %v1047 = vunpack.c.h.b16 %v957
      %v1048 = vunpack.c.l.b16 %v958
      %v1049 = vunpack.c.h.b16 %v958
      %v1050 = vunpack.c.l.b16 %v959
      %v1051 = vunpack.c.h.b16 %v959
      %v1052 = vunpack.c.l.b16 %v960
      %v1053 = vunpack.c.h.b16 %v960
      %v1054 = vunpack.c.l.b16 %v961
      %v1055 = vunpack.c.h.b16 %v961
      %v1056 = vunpack.c.l.b16 %v962
      %v1057 = vunpack.c.h.b16 %v962
      %v1058 = vunpack.c.l.b16 %v963
      %v1059 = vunpack.c.h.b16 %v963
      %v1060 = vpack.c.b16 %v1000, %v996
      %v1061 = vpack.c.b16 %v1001, %v997
      %v1062 = vpack.c.b16 %v1002, %v998
      %v1063 = vpack.c.b16 %v1003, %v999
      %v1064 = vpack.c.b16 %v1008, %v1004
      %v1065 = vpack.c.b16 %v1009, %v1005
      %v1066 = vpack.c.b16 %v1010, %v1006
      %v1067 = vpack.c.b16 %v1011, %v1007
      %v1068 = vpack.c.b16 %v1016, %v1012
      %v1069 = vpack.c.b16 %v1017, %v1013
      %v1070 = vpack.c.b16 %v1018, %v1014
      %v1071 = vpack.c.b16 %v1019, %v1015
      %v1072 = vpack.c.b16 %v1024, %v1020
      %v1073 = vpack.c.b16 %v1025, %v1021
      %v1074 = vpack.c.b16 %v1026, %v1022
      %v1075 = vpack.c.b16 %v1027, %v1023
      %v1076 = vpack.c.b16 %v1032, %v1028
      %v1077 = vpack.c.b16 %v1033, %v1029
      %v1078 = vpack.c.b16 %v1034, %v1030
      %v1079 = vpack.c.b16 %v1035, %v1031
      %v1080 = vpack.c.b16 %v1040, %v1036
      %v1081 = vpack.c.b16 %v1041, %v1037
      %v1082 = vpack.c.b16 %v1042, %v1038
      %v1083 = vpack.c.b16 %v1043, %v1039
      %v1084 = vpack.c.b16 %v1048, %v1044
      %v1085 = vpack.c.b16 %v1049, %v1045
      %v1086 = vpack.c.b16 %v1050, %v1046
      %v1087 = vpack.c.b16 %v1051, %v1047
      %v1088 = vpack.c.b16 %v1056, %v1052
      %v1089 = vpack.c.b16 %v1057, %v1053
      %v1090 = vpack.c.b16 %v1058, %v1054
      %v1091 = vpack.c.b16 %v1059, %v1055
      %1124 = vmatpush.bf16.msra.mxu0 %v1088
      %1125 = vmatpush.bf16.msra.mxu0 %v1084
      %1126 = vmatpush.bf16.msra.mxu0 %v1080
      %1127 = vmatpush.bf16.msra.mxu0 %v1076
      %1128 = vmatpush.bf16.msra.mxu0 %v1072
      %1129 = vmatpush.bf16.msra.mxu0 %v1068
      %1130 = vmatpush.bf16.msra.mxu0 %v1064
      %1131 = vmatpush.bf16.msra.mxu0 %v1060
      %1132 = vmatmul.bf16.gmra.mxu0 %v916
      %v1133 = vpop.f32.mrf.mxu0
      %v1134 = vadd.f32 0.0, %v1133
      %v1135 = vpop.f32.mrf.mxu0
      %v1136 = vadd.f32 0.0, %v1135
      %1137 = vmatmul.bf16.gmra.mxu0 %v917
      %v1138 = vpop.f32.mrf.mxu0
      %v1139 = vadd.f32 0.0, %v1138
      %v1140 = vpop.f32.mrf.mxu0
      %v1141 = vadd.f32 0.0, %v1140
      %1142 = vmatmul.bf16.gmra.mxu0 %v918
      %v1143 = vpop.f32.mrf.mxu0
      %v1144 = vadd.f32 0.0, %v1143
      %v1145 = vpop.f32.mrf.mxu0
      %v1146 = vadd.f32 0.0, %v1145
      %1147 = vmatmul.bf16.gmra.mxu0 %v919
      %v1148 = vpop.f32.mrf.mxu0
      %v1149 = vadd.f32 0.0, %v1148
      %v1150 = vpop.f32.mrf.mxu0
      %v1151 = vadd.f32 0.0, %v1150
      %1152 = vmatmul.bf16.gmra.mxu0 %v920
      %v1153 = vpop.f32.mrf.mxu0
      %v1154 = vadd.f32 0.0, %v1153
      %v1155 = vpop.f32.mrf.mxu0
      %v1156 = vadd.f32 0.0, %v1155
      %1157 = vmatmul.bf16.gmra.mxu0 %v921
      %v1158 = vpop.f32.mrf.mxu0
      %v1159 = vadd.f32 0.0, %v1158
      %v1160 = vpop.f32.mrf.mxu0
      %v1161 = vadd.f32 0.0, %v1160
      %1162 = vmatmul.bf16.gmra.mxu0 %v922
      %v1163 = vpop.f32.mrf.mxu0
      %v1164 = vadd.f32 0.0, %v1163
      %v1165 = vpop.f32.mrf.mxu0
      %v1166 = vadd.f32 0.0, %v1165
      %1167 = vmatmul.bf16.gmra.mxu0 %v923
      %v1168 = vpop.f32.mrf.mxu0
      %v1169 = vadd.f32 0.0, %v1168
      %v1170 = vpop.f32.mrf.mxu0
      %v1171 = vadd.f32 0.0, %v1170
      %1172 = vmatmul.bf16.gmra.mxu0 %v924
      %v1173 = vpop.f32.mrf.mxu0
      %v1174 = vadd.f32 0.0, %v1173
      %v1175 = vpop.f32.mrf.mxu0
      %v1176 = vadd.f32 0.0, %v1175
      %1177 = vmatmul.bf16.gmra.mxu0 %v925
      %v1178 = vpop.f32.mrf.mxu0
      %v1179 = vadd.f32 0.0, %v1178
      %v1180 = vpop.f32.mrf.mxu0
      %v1181 = vadd.f32 0.0, %v1180
      %1182 = vmatmul.bf16.gmra.mxu0 %v926
      %v1183 = vpop.f32.mrf.mxu0
      %v1184 = vadd.f32 0.0, %v1183
      %v1185 = vpop.f32.mrf.mxu0
      %v1186 = vadd.f32 0.0, %v1185
      %1187 = vmatmul.bf16.gmra.mxu0 %v927
      %v1188 = vpop.f32.mrf.mxu0
      %v1189 = vadd.f32 0.0, %v1188
      %v1190 = vpop.f32.mrf.mxu0
      %v1191 = vadd.f32 0.0, %v1190
      %1192 = vmatmul.bf16.gmra.mxu0 %v928
      %v1193 = vpop.f32.mrf.mxu0
      %v1194 = vadd.f32 0.0, %v1193
      %v1195 = vpop.f32.mrf.mxu0
      %v1196 = vadd.f32 0.0, %v1195
      %1197 = vmatmul.bf16.gmra.mxu0 %v929
      %v1198 = vpop.f32.mrf.mxu0
      %v1199 = vadd.f32 0.0, %v1198
      %v1200 = vpop.f32.mrf.mxu0
      %v1201 = vadd.f32 0.0, %v1200
      %1202 = vmatmul.bf16.gmra.mxu0 %v930
      %v1203 = vpop.f32.mrf.mxu0
      %v1204 = vadd.f32 0.0, %v1203
      %v1205 = vpop.f32.mrf.mxu0
      %v1206 = vadd.f32 0.0, %v1205
      %1207 = vmatmul.bf16.gmra.mxu0 %v931
      %v1208 = vpop.f32.mrf.mxu0
      %v1209 = vadd.f32 0.0, %v1208
      %v1210 = vpop.f32.mrf.mxu0
      %v1211 = vadd.f32 0.0, %v1210
      %1212 = vdwg.mxu0
      %1213 = vmatpush.bf16.msra.mxu0 %v1089
      %1214 = vmatpush.bf16.msra.mxu0 %v1085
      %1215 = vmatpush.bf16.msra.mxu0 %v1081
      %1216 = vmatpush.bf16.msra.mxu0 %v1077
      %1217 = vmatpush.bf16.msra.mxu0 %v1073
      %1218 = vmatpush.bf16.msra.mxu0 %v1069
      %1219 = vmatpush.bf16.msra.mxu0 %v1065
      %1220 = vmatpush.bf16.msra.mxu0 %v1061
      %1221 = vmatmul.bf16.gmra.mxu0 %v916
      %v1222 = vpop.f32.mrf.mxu0
      %v1223 = vadd.f32 0.0, %v1222
      %v1224 = vpop.f32.mrf.mxu0
      %v1225 = vadd.f32 0.0, %v1224
      %1226 = vmatmul.bf16.gmra.mxu0 %v917
      %v1227 = vpop.f32.mrf.mxu0
      %v1228 = vadd.f32 0.0, %v1227
      %v1229 = vpop.f32.mrf.mxu0
      %v1230 = vadd.f32 0.0, %v1229
      %1231 = vmatmul.bf16.gmra.mxu0 %v918
      %v1232 = vpop.f32.mrf.mxu0
      %v1233 = vadd.f32 0.0, %v1232
      %v1234 = vpop.f32.mrf.mxu0
      %v1235 = vadd.f32 0.0, %v1234
      %1236 = vmatmul.bf16.gmra.mxu0 %v919
      %v1237 = vpop.f32.mrf.mxu0
      %v1238 = vadd.f32 0.0, %v1237
      %v1239 = vpop.f32.mrf.mxu0
      %v1240 = vadd.f32 0.0, %v1239
      %1241 = vmatmul.bf16.gmra.mxu0 %v920
      %v1242 = vpop.f32.mrf.mxu0
      %v1243 = vadd.f32 0.0, %v1242
      %v1244 = vpop.f32.mrf.mxu0
      %v1245 = vadd.f32 0.0, %v1244
      %1246 = vmatmul.bf16.gmra.mxu0 %v921
      %v1247 = vpop.f32.mrf.mxu0
      %v1248 = vadd.f32 0.0, %v1247
      %v1249 = vpop.f32.mrf.mxu0
      %v1250 = vadd.f32 0.0, %v1249
      %1251 = vmatmul.bf16.gmra.mxu0 %v922
      %v1252 = vpop.f32.mrf.mxu0
      %v1253 = vadd.f32 0.0, %v1252
      %v1254 = vpop.f32.mrf.mxu0
      %v1255 = vadd.f32 0.0, %v1254
      %1256 = vmatmul.bf16.gmra.mxu0 %v923
      %v1257 = vpop.f32.mrf.mxu0
      %v1258 = vadd.f32 0.0, %v1257
      %v1259 = vpop.f32.mrf.mxu0
      %v1260 = vadd.f32 0.0, %v1259
      %1261 = vmatmul.bf16.gmra.mxu0 %v924
      %v1262 = vpop.f32.mrf.mxu0
      %v1263 = vadd.f32 0.0, %v1262
      %v1264 = vpop.f32.mrf.mxu0
      %v1265 = vadd.f32 0.0, %v1264
      %1266 = vmatmul.bf16.gmra.mxu0 %v925
      %v1267 = vpop.f32.mrf.mxu0
      %v1268 = vadd.f32 0.0, %v1267
      %v1269 = vpop.f32.mrf.mxu0
      %v1270 = vadd.f32 0.0, %v1269
      %1271 = vmatmul.bf16.gmra.mxu0 %v926
      %v1272 = vpop.f32.mrf.mxu0
      %v1273 = vadd.f32 0.0, %v1272
      %v1274 = vpop.f32.mrf.mxu0
      %v1275 = vadd.f32 0.0, %v1274
      %1276 = vmatmul.bf16.gmra.mxu0 %v927
      %v1277 = vpop.f32.mrf.mxu0
      %v1278 = vadd.f32 0.0, %v1277
      %v1279 = vpop.f32.mrf.mxu0
      %v1280 = vadd.f32 0.0, %v1279
      %1281 = vmatmul.bf16.gmra.mxu0 %v928
      %v1282 = vpop.f32.mrf.mxu0
      %v1283 = vadd.f32 0.0, %v1282
      %v1284 = vpop.f32.mrf.mxu0
      %v1285 = vadd.f32 0.0, %v1284
      %1286 = vmatmul.bf16.gmra.mxu0 %v929
      %v1287 = vpop.f32.mrf.mxu0
      %v1288 = vadd.f32 0.0, %v1287
      %v1289 = vpop.f32.mrf.mxu0
      %v1290 = vadd.f32 0.0, %v1289
      %1291 = vmatmul.bf16.gmra.mxu0 %v930
      %v1292 = vpop.f32.mrf.mxu0
      %v1293 = vadd.f32 0.0, %v1292
      %v1294 = vpop.f32.mrf.mxu0
      %v1295 = vadd.f32 0.0, %v1294
      %1296 = vmatmul.bf16.gmra.mxu0 %v931
      %v1297 = vpop.f32.mrf.mxu0
      %v1298 = vadd.f32 0.0, %v1297
      %v1299 = vpop.f32.mrf.mxu0
      %v1300 = vadd.f32 0.0, %v1299
      %1301 = vdwg.mxu0
      %1302 = vmatpush.bf16.msra.mxu0 %v1090
      %1303 = vmatpush.bf16.msra.mxu0 %v1086
      %1304 = vmatpush.bf16.msra.mxu0 %v1082
      %1305 = vmatpush.bf16.msra.mxu0 %v1078
      %1306 = vmatpush.bf16.msra.mxu0 %v1074
      %1307 = vmatpush.bf16.msra.mxu0 %v1070
      %1308 = vmatpush.bf16.msra.mxu0 %v1066
      %1309 = vmatpush.bf16.msra.mxu0 %v1062
      %1310 = vmatmul.bf16.gmra.mxu0 %v916
      %v1311 = vpop.f32.mrf.mxu0
      %v1312 = vadd.f32 0.0, %v1311
      %v1313 = vpop.f32.mrf.mxu0
      %v1314 = vadd.f32 0.0, %v1313
      %1315 = vmatmul.bf16.gmra.mxu0 %v917
      %v1316 = vpop.f32.mrf.mxu0
      %v1317 = vadd.f32 0.0, %v1316
      %v1318 = vpop.f32.mrf.mxu0
      %v1319 = vadd.f32 0.0, %v1318
      %1320 = vmatmul.bf16.gmra.mxu0 %v918
      %v1321 = vpop.f32.mrf.mxu0
      %v1322 = vadd.f32 0.0, %v1321
      %v1323 = vpop.f32.mrf.mxu0
      %v1324 = vadd.f32 0.0, %v1323
      %1325 = vmatmul.bf16.gmra.mxu0 %v919
      %v1326 = vpop.f32.mrf.mxu0
      %v1327 = vadd.f32 0.0, %v1326
      %v1328 = vpop.f32.mrf.mxu0
      %v1329 = vadd.f32 0.0, %v1328
      %1330 = vmatmul.bf16.gmra.mxu0 %v920
      %v1331 = vpop.f32.mrf.mxu0
      %v1332 = vadd.f32 0.0, %v1331
      %v1333 = vpop.f32.mrf.mxu0
      %v1334 = vadd.f32 0.0, %v1333
      %1335 = vmatmul.bf16.gmra.mxu0 %v921
      %v1336 = vpop.f32.mrf.mxu0
      %v1337 = vadd.f32 0.0, %v1336
      %v1338 = vpop.f32.mrf.mxu0
      %v1339 = vadd.f32 0.0, %v1338
      %1340 = vmatmul.bf16.gmra.mxu0 %v922
      %v1341 = vpop.f32.mrf.mxu0
      %v1342 = vadd.f32 0.0, %v1341
      %v1343 = vpop.f32.mrf.mxu0
      %v1344 = vadd.f32 0.0, %v1343
      %1345 = vmatmul.bf16.gmra.mxu0 %v923
      %v1346 = vpop.f32.mrf.mxu0
      %v1347 = vadd.f32 0.0, %v1346
      %v1348 = vpop.f32.mrf.mxu0
      %v1349 = vadd.f32 0.0, %v1348
      %1350 = vmatmul.bf16.gmra.mxu0 %v924
      %v1351 = vpop.f32.mrf.mxu0
      %v1352 = vadd.f32 0.0, %v1351
      %v1353 = vpop.f32.mrf.mxu0
      %v1354 = vadd.f32 0.0, %v1353
      %1355 = vmatmul.bf16.gmra.mxu0 %v925
      %v1356 = vpop.f32.mrf.mxu0
      %v1357 = vadd.f32 0.0, %v1356
      %v1358 = vpop.f32.mrf.mxu0
      %v1359 = vadd.f32 0.0, %v1358
      %1360 = vmatmul.bf16.gmra.mxu0 %v926
      %v1361 = vpop.f32.mrf.mxu0
      %v1362 = vadd.f32 0.0, %v1361
      %v1363 = vpop.f32.mrf.mxu0
      %v1364 = vadd.f32 0.0, %v1363
      %1365 = vmatmul.bf16.gmra.mxu0 %v927
      %v1366 = vpop.f32.mrf.mxu0
      %v1367 = vadd.f32 0.0, %v1366
      %v1368 = vpop.f32.mrf.mxu0
      %v1369 = vadd.f32 0.0, %v1368
      %1370 = vmatmul.bf16.gmra.mxu0 %v928
      %v1371 = vpop.f32.mrf.mxu0
      %v1372 = vadd.f32 0.0, %v1371
      %v1373 = vpop.f32.mrf.mxu0
      %v1374 = vadd.f32 0.0, %v1373
      %1375 = vmatmul.bf16.gmra.mxu0 %v929
      %v1376 = vpop.f32.mrf.mxu0
      %v1377 = vadd.f32 0.0, %v1376
      %v1378 = vpop.f32.mrf.mxu0
      %v1379 = vadd.f32 0.0, %v1378
      %1380 = vmatmul.bf16.gmra.mxu0 %v930
      %v1381 = vpop.f32.mrf.mxu0
      %v1382 = vadd.f32 0.0, %v1381
      %v1383 = vpop.f32.mrf.mxu0
      %v1384 = vadd.f32 0.0, %v1383
      %1385 = vmatmul.bf16.gmra.mxu0 %v931
      %v1386 = vpop.f32.mrf.mxu0
      %v1387 = vadd.f32 0.0, %v1386
      %v1388 = vpop.f32.mrf.mxu0
      %v1389 = vadd.f32 0.0, %v1388
      %1390 = vdwg.mxu0
      %1391 = vmatpush.bf16.msra.mxu0 %v1091
      %1392 = vmatpush.bf16.msra.mxu0 %v1087
      %1393 = vmatpush.bf16.msra.mxu0 %v1083
      %1394 = vmatpush.bf16.msra.mxu0 %v1079
      %1395 = vmatpush.bf16.msra.mxu0 %v1075
      %1396 = vmatpush.bf16.msra.mxu0 %v1071
      %1397 = vmatpush.bf16.msra.mxu0 %v1067
      %1398 = vmatpush.bf16.msra.mxu0 %v1063
      %1399 = vmatmul.bf16.gmra.mxu0 %v916
      %v1400 = vpop.f32.mrf.mxu0
      %v1401 = vadd.f32 0.0, %v1400
      %v1402 = vpop.f32.mrf.mxu0
      %v1403 = vadd.f32 0.0, %v1402
      %1404 = vmatmul.bf16.gmra.mxu0 %v917
      %v1405 = vpop.f32.mrf.mxu0
      %v1406 = vadd.f32 0.0, %v1405
      %v1407 = vpop.f32.mrf.mxu0
      %v1408 = vadd.f32 0.0, %v1407
      %1409 = vmatmul.bf16.gmra.mxu0 %v918
      %v1410 = vpop.f32.mrf.mxu0
      %v1411 = vadd.f32 0.0, %v1410
      %v1412 = vpop.f32.mrf.mxu0
      %v1413 = vadd.f32 0.0, %v1412
      %1414 = vmatmul.bf16.gmra.mxu0 %v919
      %v1415 = vpop.f32.mrf.mxu0
      %v1416 = vadd.f32 0.0, %v1415
      %v1417 = vpop.f32.mrf.mxu0
      %v1418 = vadd.f32 0.0, %v1417
      %1419 = vmatmul.bf16.gmra.mxu0 %v920
      %v1420 = vpop.f32.mrf.mxu0
      %v1421 = vadd.f32 0.0, %v1420
      %v1422 = vpop.f32.mrf.mxu0
      %v1423 = vadd.f32 0.0, %v1422
      %1424 = vmatmul.bf16.gmra.mxu0 %v921
      %v1425 = vpop.f32.mrf.mxu0
      %v1426 = vadd.f32 0.0, %v1425
      %v1427 = vpop.f32.mrf.mxu0
      %v1428 = vadd.f32 0.0, %v1427
      %1429 = vmatmul.bf16.gmra.mxu0 %v922
      %v1430 = vpop.f32.mrf.mxu0
      %v1431 = vadd.f32 0.0, %v1430
      %v1432 = vpop.f32.mrf.mxu0
      %v1433 = vadd.f32 0.0, %v1432
      %1434 = vmatmul.bf16.gmra.mxu0 %v923
      %v1435 = vpop.f32.mrf.mxu0
      %v1436 = vadd.f32 0.0, %v1435
      %v1437 = vpop.f32.mrf.mxu0
      %v1438 = vadd.f32 0.0, %v1437
      %1439 = vmatmul.bf16.gmra.mxu0 %v924
      %v1440 = vpop.f32.mrf.mxu0
      %v1441 = vadd.f32 0.0, %v1440
      %v1442 = vpop.f32.mrf.mxu0
      %v1443 = vadd.f32 0.0, %v1442
      %1444 = vmatmul.bf16.gmra.mxu0 %v925
      %v1445 = vpop.f32.mrf.mxu0
      %v1446 = vadd.f32 0.0, %v1445
      %v1447 = vpop.f32.mrf.mxu0
      %v1448 = vadd.f32 0.0, %v1447
      %1449 = vmatmul.bf16.gmra.mxu0 %v926
      %v1450 = vpop.f32.mrf.mxu0
      %v1451 = vadd.f32 0.0, %v1450
      %v1452 = vpop.f32.mrf.mxu0
      %v1453 = vadd.f32 0.0, %v1452
      %1454 = vmatmul.bf16.gmra.mxu0 %v927
      %v1455 = vpop.f32.mrf.mxu0
      %v1456 = vadd.f32 0.0, %v1455
      %v1457 = vpop.f32.mrf.mxu0
      %v1458 = vadd.f32 0.0, %v1457
      %1459 = vmatmul.bf16.gmra.mxu0 %v928
      %v1460 = vpop.f32.mrf.mxu0
      %v1461 = vadd.f32 0.0, %v1460
      %v1462 = vpop.f32.mrf.mxu0
      %v1463 = vadd.f32 0.0, %v1462
      %1464 = vmatmul.bf16.gmra.mxu0 %v929
      %v1465 = vpop.f32.mrf.mxu0
      %v1466 = vadd.f32 0.0, %v1465
      %v1467 = vpop.f32.mrf.mxu0
      %v1468 = vadd.f32 0.0, %v1467
      %1469 = vmatmul.bf16.gmra.mxu0 %v930
      %v1470 = vpop.f32.mrf.mxu0
      %v1471 = vadd.f32 0.0, %v1470
      %v1472 = vpop.f32.mrf.mxu0
      %v1473 = vadd.f32 0.0, %v1472
      %1474 = vmatmul.bf16.gmra.mxu0 %v931
      %v1475 = vpop.f32.mrf.mxu0
      %v1476 = vadd.f32 0.0, %v1475
      %v1477 = vpop.f32.mrf.mxu0
      %v1478 = vadd.f32 0.0, %v1477
      %1479 = vdwg.mxu0
      %v1480 = vld [vmem:[%s2] ss:$2 sm:$0xf]
      %v1482 = vperm.slane %v1480, 0
      %v1483 = vperm.slane %v1480, 1
      %v1484 = vperm.slane %v1480, 2
      %v1485 = vperm.slane %v1480, 3
      %v1490 = vmul.f32 %v1134, %v1482
      %v1491 = vmul.f32 %v1223, %v1483
      %v1492 = vmul.f32 %v1312, %v1484
      %v1493 = vmul.f32 %v1401, %v1485
      %v1494 = vmul.f32 %v1136, %v1482
      %v1495 = vmul.f32 %v1225, %v1483
      %v1496 = vmul.f32 %v1314, %v1484
      %v1497 = vmul.f32 %v1403, %v1485
      %v1498 = vmul.f32 %v1139, %v1482
      %v1499 = vmul.f32 %v1228, %v1483
      %v1500 = vmul.f32 %v1317, %v1484
      %v1501 = vmul.f32 %v1406, %v1485
      %v1502 = vmul.f32 %v1141, %v1482
      %v1503 = vmul.f32 %v1230, %v1483
      %v1504 = vmul.f32 %v1319, %v1484
      %v1505 = vmul.f32 %v1408, %v1485
      %v1506 = vmul.f32 %v1144, %v1482
      %v1507 = vmul.f32 %v1233, %v1483
      %v1508 = vmul.f32 %v1322, %v1484
      %v1509 = vmul.f32 %v1411, %v1485
      %v1510 = vmul.f32 %v1146, %v1482
      %v1511 = vmul.f32 %v1235, %v1483
      %v1512 = vmul.f32 %v1324, %v1484
      %v1513 = vmul.f32 %v1413, %v1485
      %v1514 = vmul.f32 %v1149, %v1482
      %v1515 = vmul.f32 %v1238, %v1483
      %v1516 = vmul.f32 %v1327, %v1484
      %v1517 = vmul.f32 %v1416, %v1485
      %v1518 = vmul.f32 %v1151, %v1482
      %v1519 = vmul.f32 %v1240, %v1483
      %v1520 = vmul.f32 %v1329, %v1484
      %v1521 = vmul.f32 %v1418, %v1485
      %v1522 = vmul.f32 %v1154, %v1482
      %v1523 = vmul.f32 %v1243, %v1483
      %v1524 = vmul.f32 %v1332, %v1484
      %v1525 = vmul.f32 %v1421, %v1485
      %v1526 = vmul.f32 %v1156, %v1482
      %v1527 = vmul.f32 %v1245, %v1483
      %v1528 = vmul.f32 %v1334, %v1484
      %v1529 = vmul.f32 %v1423, %v1485
      %v1530 = vmul.f32 %v1159, %v1482
      %v1531 = vmul.f32 %v1248, %v1483
      %v1532 = vmul.f32 %v1337, %v1484
      %v1533 = vmul.f32 %v1426, %v1485
      %v1534 = vmul.f32 %v1161, %v1482
      %v1535 = vmul.f32 %v1250, %v1483
      %v1536 = vmul.f32 %v1339, %v1484
      %v1537 = vmul.f32 %v1428, %v1485
      %v1538 = vmul.f32 %v1164, %v1482
      %v1539 = vmul.f32 %v1253, %v1483
      %v1540 = vmul.f32 %v1342, %v1484
      %v1541 = vmul.f32 %v1431, %v1485
      %v1542 = vmul.f32 %v1166, %v1482
      %v1543 = vmul.f32 %v1255, %v1483
      %v1544 = vmul.f32 %v1344, %v1484
      %v1545 = vmul.f32 %v1433, %v1485
      %v1546 = vmul.f32 %v1169, %v1482
      %v1547 = vmul.f32 %v1258, %v1483
      %v1548 = vmul.f32 %v1347, %v1484
      %v1549 = vmul.f32 %v1436, %v1485
      %v1550 = vmul.f32 %v1171, %v1482
      %v1551 = vmul.f32 %v1260, %v1483
      %v1552 = vmul.f32 %v1349, %v1484
      %v1553 = vmul.f32 %v1438, %v1485
      %v1554 = vmul.f32 %v1174, %v1482
      %v1555 = vmul.f32 %v1263, %v1483
      %v1556 = vmul.f32 %v1352, %v1484
      %v1557 = vmul.f32 %v1441, %v1485
      %v1558 = vmul.f32 %v1176, %v1482
      %v1559 = vmul.f32 %v1265, %v1483
      %v1560 = vmul.f32 %v1354, %v1484
      %v1561 = vmul.f32 %v1443, %v1485
      %v1562 = vmul.f32 %v1179, %v1482
      %v1563 = vmul.f32 %v1268, %v1483
      %v1564 = vmul.f32 %v1357, %v1484
      %v1565 = vmul.f32 %v1446, %v1485
      %v1566 = vmul.f32 %v1181, %v1482
      %v1567 = vmul.f32 %v1270, %v1483
      %v1568 = vmul.f32 %v1359, %v1484
      %v1569 = vmul.f32 %v1448, %v1485
      %v1570 = vmul.f32 %v1184, %v1482
      %v1571 = vmul.f32 %v1273, %v1483
      %v1572 = vmul.f32 %v1362, %v1484
      %v1573 = vmul.f32 %v1451, %v1485
      %v1574 = vmul.f32 %v1186, %v1482
      %v1575 = vmul.f32 %v1275, %v1483
      %v1576 = vmul.f32 %v1364, %v1484
      %v1577 = vmul.f32 %v1453, %v1485
      %v1578 = vmul.f32 %v1189, %v1482
      %v1579 = vmul.f32 %v1278, %v1483
      %v1580 = vmul.f32 %v1367, %v1484
      %v1581 = vmul.f32 %v1456, %v1485
      %v1582 = vmul.f32 %v1191, %v1482
      %v1583 = vmul.f32 %v1280, %v1483
      %v1584 = vmul.f32 %v1369, %v1484
      %v1585 = vmul.f32 %v1458, %v1485
      %v1586 = vmul.f32 %v1194, %v1482
      %v1587 = vmul.f32 %v1283, %v1483
      %v1588 = vmul.f32 %v1372, %v1484
      %v1589 = vmul.f32 %v1461, %v1485
      %v1590 = vmul.f32 %v1196, %v1482
      %v1591 = vmul.f32 %v1285, %v1483
      %v1592 = vmul.f32 %v1374, %v1484
      %v1593 = vmul.f32 %v1463, %v1485
      %v1594 = vmul.f32 %v1199, %v1482
      %v1595 = vmul.f32 %v1288, %v1483
      %v1596 = vmul.f32 %v1377, %v1484
      %v1597 = vmul.f32 %v1466, %v1485
      %v1598 = vmul.f32 %v1201, %v1482
      %v1599 = vmul.f32 %v1290, %v1483
      %v1600 = vmul.f32 %v1379, %v1484
      %v1601 = vmul.f32 %v1468, %v1485
      %v1602 = vmul.f32 %v1204, %v1482
      %v1603 = vmul.f32 %v1293, %v1483
      %v1604 = vmul.f32 %v1382, %v1484
      %v1605 = vmul.f32 %v1471, %v1485
      %v1606 = vmul.f32 %v1206, %v1482
      %v1607 = vmul.f32 %v1295, %v1483
      %v1608 = vmul.f32 %v1384, %v1484
      %v1609 = vmul.f32 %v1473, %v1485
      %v1610 = vmul.f32 %v1209, %v1482
      %v1611 = vmul.f32 %v1298, %v1483
      %v1612 = vmul.f32 %v1387, %v1484
      %v1613 = vmul.f32 %v1476, %v1485
      %v1614 = vmul.f32 %v1211, %v1482
      %v1615 = vmul.f32 %v1300, %v1483
      %v1616 = vmul.f32 %v1389, %v1484
      %v1617 = vmul.f32 %v1478, %v1485
      %s1618 = scalar_lea.vmem %s2, 1
      %v1619 = vld [vmem:[%s1618] ss:$2 sm:$0xf]
      %v1621 = vperm.slane %v1619, 0
      %v1622 = vperm.slane %v1619, 1
      %v1623 = vperm.slane %v1619, 2
      %v1624 = vperm.slane %v1619, 3
      %v1629 = vadd.f32 %v1490, %v1621
      %v1630 = vadd.f32 %v1491, %v1622
      %v1631 = vadd.f32 %v1492, %v1623
      %v1632 = vadd.f32 %v1493, %v1624
      %v1633 = vadd.f32 %v1494, %v1621
      %v1634 = vadd.f32 %v1495, %v1622
      %v1635 = vadd.f32 %v1496, %v1623
      %v1636 = vadd.f32 %v1497, %v1624
      %v1637 = vadd.f32 %v1498, %v1621
      %v1638 = vadd.f32 %v1499, %v1622
      %v1639 = vadd.f32 %v1500, %v1623
      %v1640 = vadd.f32 %v1501, %v1624
      %v1641 = vadd.f32 %v1502, %v1621
      %v1642 = vadd.f32 %v1503, %v1622
      %v1643 = vadd.f32 %v1504, %v1623
      %v1644 = vadd.f32 %v1505, %v1624
      %v1645 = vadd.f32 %v1506, %v1621
      %v1646 = vadd.f32 %v1507, %v1622
      %v1647 = vadd.f32 %v1508, %v1623
      %v1648 = vadd.f32 %v1509, %v1624
      %v1649 = vadd.f32 %v1510, %v1621
      %v1650 = vadd.f32 %v1511, %v1622
      %v1651 = vadd.f32 %v1512, %v1623
      %v1652 = vadd.f32 %v1513, %v1624
      %v1653 = vadd.f32 %v1514, %v1621
      %v1654 = vadd.f32 %v1515, %v1622
      %v1655 = vadd.f32 %v1516, %v1623
      %v1656 = vadd.f32 %v1517, %v1624
      %v1657 = vadd.f32 %v1518, %v1621
      %v1658 = vadd.f32 %v1519, %v1622
      %v1659 = vadd.f32 %v1520, %v1623
      %v1660 = vadd.f32 %v1521, %v1624
      %v1661 = vadd.f32 %v1522, %v1621
      %v1662 = vadd.f32 %v1523, %v1622
      %v1663 = vadd.f32 %v1524, %v1623
      %v1664 = vadd.f32 %v1525, %v1624
      %v1665 = vadd.f32 %v1526, %v1621
      %v1666 = vadd.f32 %v1527, %v1622
      %v1667 = vadd.f32 %v1528, %v1623
      %v1668 = vadd.f32 %v1529, %v1624
      %v1669 = vadd.f32 %v1530, %v1621
      %v1670 = vadd.f32 %v1531, %v1622
      %v1671 = vadd.f32 %v1532, %v1623
      %v1672 = vadd.f32 %v1533, %v1624
      %v1673 = vadd.f32 %v1534, %v1621
      %v1674 = vadd.f32 %v1535, %v1622
      %v1675 = vadd.f32 %v1536, %v1623
      %v1676 = vadd.f32 %v1537, %v1624
      %v1677 = vadd.f32 %v1538, %v1621
      %v1678 = vadd.f32 %v1539, %v1622
      %v1679 = vadd.f32 %v1540, %v1623
      %v1680 = vadd.f32 %v1541, %v1624
      %v1681 = vadd.f32 %v1542, %v1621
      %v1682 = vadd.f32 %v1543, %v1622
      %v1683 = vadd.f32 %v1544, %v1623
      %v1684 = vadd.f32 %v1545, %v1624
      %v1685 = vadd.f32 %v1546, %v1621
      %v1686 = vadd.f32 %v1547, %v1622
      %v1687 = vadd.f32 %v1548, %v1623
      %v1688 = vadd.f32 %v1549, %v1624
      %v1689 = vadd.f32 %v1550, %v1621
      %v1690 = vadd.f32 %v1551, %v1622
      %v1691 = vadd.f32 %v1552, %v1623
      %v1692 = vadd.f32 %v1553, %v1624
      %v1693 = vadd.f32 %v1554, %v1621
      %v1694 = vadd.f32 %v1555, %v1622
      %v1695 = vadd.f32 %v1556, %v1623
      %v1696 = vadd.f32 %v1557, %v1624
      %v1697 = vadd.f32 %v1558, %v1621
      %v1698 = vadd.f32 %v1559, %v1622
      %v1699 = vadd.f32 %v1560, %v1623
      %v1700 = vadd.f32 %v1561, %v1624
      %v1701 = vadd.f32 %v1562, %v1621
      %v1702 = vadd.f32 %v1563, %v1622
      %v1703 = vadd.f32 %v1564, %v1623
      %v1704 = vadd.f32 %v1565, %v1624
      %v1705 = vadd.f32 %v1566, %v1621
      %v1706 = vadd.f32 %v1567, %v1622
      %v1707 = vadd.f32 %v1568, %v1623
      %v1708 = vadd.f32 %v1569, %v1624
      %v1709 = vadd.f32 %v1570, %v1621
      %v1710 = vadd.f32 %v1571, %v1622
      %v1711 = vadd.f32 %v1572, %v1623
      %v1712 = vadd.f32 %v1573, %v1624
      %v1713 = vadd.f32 %v1574, %v1621
      %v1714 = vadd.f32 %v1575, %v1622
      %v1715 = vadd.f32 %v1576, %v1623
      %v1716 = vadd.f32 %v1577, %v1624
      %v1717 = vadd.f32 %v1578, %v1621
      %v1718 = vadd.f32 %v1579, %v1622
      %v1719 = vadd.f32 %v1580, %v1623
      %v1720 = vadd.f32 %v1581, %v1624
      %v1721 = vadd.f32 %v1582, %v1621
      %v1722 = vadd.f32 %v1583, %v1622
      %v1723 = vadd.f32 %v1584, %v1623
      %v1724 = vadd.f32 %v1585, %v1624
      %v1725 = vadd.f32 %v1586, %v1621
      %v1726 = vadd.f32 %v1587, %v1622
      %v1727 = vadd.f32 %v1588, %v1623
      %v1728 = vadd.f32 %v1589, %v1624
      %v1729 = vadd.f32 %v1590, %v1621
      %v1730 = vadd.f32 %v1591, %v1622
      %v1731 = vadd.f32 %v1592, %v1623
      %v1732 = vadd.f32 %v1593, %v1624
      %v1733 = vadd.f32 %v1594, %v1621
      %v1734 = vadd.f32 %v1595, %v1622
      %v1735 = vadd.f32 %v1596, %v1623
      %v1736 = vadd.f32 %v1597, %v1624
      %v1737 = vadd.f32 %v1598, %v1621
      %v1738 = vadd.f32 %v1599, %v1622
      %v1739 = vadd.f32 %v1600, %v1623
      %v1740 = vadd.f32 %v1601, %v1624
      %v1741 = vadd.f32 %v1602, %v1621
      %v1742 = vadd.f32 %v1603, %v1622
      %v1743 = vadd.f32 %v1604, %v1623
      %v1744 = vadd.f32 %v1605, %v1624
      %v1745 = vadd.f32 %v1606, %v1621
      %v1746 = vadd.f32 %v1607, %v1622
      %v1747 = vadd.f32 %v1608, %v1623
      %v1748 = vadd.f32 %v1609, %v1624
      %v1749 = vadd.f32 %v1610, %v1621
      %v1750 = vadd.f32 %v1611, %v1622
      %v1751 = vadd.f32 %v1612, %v1623
      %v1752 = vadd.f32 %v1613, %v1624
      %v1753 = vadd.f32 %v1614, %v1621
      %v1754 = vadd.f32 %v1615, %v1622
      %v1755 = vadd.f32 %v1616, %v1623
      %v1756 = vadd.f32 %v1617, %v1624
      %v1757 = vmax.f32 %v1629, 0.0
      %v1758 = vmax.f32 %v1630, 0.0
      %v1759 = vmax.f32 %v1631, 0.0
      %v1760 = vmax.f32 %v1632, 0.0
      %v1761 = vmax.f32 %v1633, 0.0
      %v1762 = vmax.f32 %v1634, 0.0
      %v1763 = vmax.f32 %v1635, 0.0
      %v1764 = vmax.f32 %v1636, 0.0
      %v1765 = vmax.f32 %v1637, 0.0
      %v1766 = vmax.f32 %v1638, 0.0
      %v1767 = vmax.f32 %v1639, 0.0
      %v1768 = vmax.f32 %v1640, 0.0
      %v1769 = vmax.f32 %v1641, 0.0
      %v1770 = vmax.f32 %v1642, 0.0
      %v1771 = vmax.f32 %v1643, 0.0
      %v1772 = vmax.f32 %v1644, 0.0
      %v1773 = vmax.f32 %v1645, 0.0
      %v1774 = vmax.f32 %v1646, 0.0
      %v1775 = vmax.f32 %v1647, 0.0
      %v1776 = vmax.f32 %v1648, 0.0
      %v1777 = vmax.f32 %v1649, 0.0
      %v1778 = vmax.f32 %v1650, 0.0
      %v1779 = vmax.f32 %v1651, 0.0
      %v1780 = vmax.f32 %v1652, 0.0
      %v1781 = vmax.f32 %v1653, 0.0
      %v1782 = vmax.f32 %v1654, 0.0
      %v1783 = vmax.f32 %v1655, 0.0
      %v1784 = vmax.f32 %v1656, 0.0
      %v1785 = vmax.f32 %v1657, 0.0
      %v1786 = vmax.f32 %v1658, 0.0
      %v1787 = vmax.f32 %v1659, 0.0
      %v1788 = vmax.f32 %v1660, 0.0
      %v1789 = vmax.f32 %v1661, 0.0
      %v1790 = vmax.f32 %v1662, 0.0
      %v1791 = vmax.f32 %v1663, 0.0
      %v1792 = vmax.f32 %v1664, 0.0
      %v1793 = vmax.f32 %v1665, 0.0
      %v1794 = vmax.f32 %v1666, 0.0
      %v1795 = vmax.f32 %v1667, 0.0
      %v1796 = vmax.f32 %v1668, 0.0
      %v1797 = vmax.f32 %v1669, 0.0
      %v1798 = vmax.f32 %v1670, 0.0
      %v1799 = vmax.f32 %v1671, 0.0
      %v1800 = vmax.f32 %v1672, 0.0
      %v1801 = vmax.f32 %v1673, 0.0
      %v1802 = vmax.f32 %v1674, 0.0
      %v1803 = vmax.f32 %v1675, 0.0
      %v1804 = vmax.f32 %v1676, 0.0
      %v1805 = vmax.f32 %v1677, 0.0
      %v1806 = vmax.f32 %v1678, 0.0
      %v1807 = vmax.f32 %v1679, 0.0
      %v1808 = vmax.f32 %v1680, 0.0
      %v1809 = vmax.f32 %v1681, 0.0
      %v1810 = vmax.f32 %v1682, 0.0
      %v1811 = vmax.f32 %v1683, 0.0
      %v1812 = vmax.f32 %v1684, 0.0
      %v1813 = vmax.f32 %v1685, 0.0
      %v1814 = vmax.f32 %v1686, 0.0
      %v1815 = vmax.f32 %v1687, 0.0
      %v1816 = vmax.f32 %v1688, 0.0
      %v1817 = vmax.f32 %v1689, 0.0
      %v1818 = vmax.f32 %v1690, 0.0
      %v1819 = vmax.f32 %v1691, 0.0
      %v1820 = vmax.f32 %v1692, 0.0
      %v1821 = vmax.f32 %v1693, 0.0
      %v1822 = vmax.f32 %v1694, 0.0
      %v1823 = vmax.f32 %v1695, 0.0
      %v1824 = vmax.f32 %v1696, 0.0
      %v1825 = vmax.f32 %v1697, 0.0
      %v1826 = vmax.f32 %v1698, 0.0
      %v1827 = vmax.f32 %v1699, 0.0
      %v1828 = vmax.f32 %v1700, 0.0
      %v1829 = vmax.f32 %v1701, 0.0
      %v1830 = vmax.f32 %v1702, 0.0
      %v1831 = vmax.f32 %v1703, 0.0
      %v1832 = vmax.f32 %v1704, 0.0
      %v1833 = vmax.f32 %v1705, 0.0
      %v1834 = vmax.f32 %v1706, 0.0
      %v1835 = vmax.f32 %v1707, 0.0
      %v1836 = vmax.f32 %v1708, 0.0
      %v1837 = vmax.f32 %v1709, 0.0
      %v1838 = vmax.f32 %v1710, 0.0
      %v1839 = vmax.f32 %v1711, 0.0
      %v1840 = vmax.f32 %v1712, 0.0
      %v1841 = vmax.f32 %v1713, 0.0
      %v1842 = vmax.f32 %v1714, 0.0
      %v1843 = vmax.f32 %v1715, 0.0
      %v1844 = vmax.f32 %v1716, 0.0
      %v1845 = vmax.f32 %v1717, 0.0
      %v1846 = vmax.f32 %v1718, 0.0
      %v1847 = vmax.f32 %v1719, 0.0
      %v1848 = vmax.f32 %v1720, 0.0
      %v1849 = vmax.f32 %v1721, 0.0
      %v1850 = vmax.f32 %v1722, 0.0
      %v1851 = vmax.f32 %v1723, 0.0
      %v1852 = vmax.f32 %v1724, 0.0
      %v1853 = vmax.f32 %v1725, 0.0
      %v1854 = vmax.f32 %v1726, 0.0
      %v1855 = vmax.f32 %v1727, 0.0
      %v1856 = vmax.f32 %v1728, 0.0
      %v1857 = vmax.f32 %v1729, 0.0
      %v1858 = vmax.f32 %v1730, 0.0
      %v1859 = vmax.f32 %v1731, 0.0
      %v1860 = vmax.f32 %v1732, 0.0
      %v1861 = vmax.f32 %v1733, 0.0
      %v1862 = vmax.f32 %v1734, 0.0
      %v1863 = vmax.f32 %v1735, 0.0
      %v1864 = vmax.f32 %v1736, 0.0
      %v1865 = vmax.f32 %v1737, 0.0
      %v1866 = vmax.f32 %v1738, 0.0
      %v1867 = vmax.f32 %v1739, 0.0
      %v1868 = vmax.f32 %v1740, 0.0
      %v1869 = vmax.f32 %v1741, 0.0
      %v1870 = vmax.f32 %v1742, 0.0
      %v1871 = vmax.f32 %v1743, 0.0
      %v1872 = vmax.f32 %v1744, 0.0
      %v1873 = vmax.f32 %v1745, 0.0
      %v1874 = vmax.f32 %v1746, 0.0
      %v1875 = vmax.f32 %v1747, 0.0
      %v1876 = vmax.f32 %v1748, 0.0
      %v1877 = vmax.f32 %v1749, 0.0
      %v1878 = vmax.f32 %v1750, 0.0
      %v1879 = vmax.f32 %v1751, 0.0
      %v1880 = vmax.f32 %v1752, 0.0
      %v1881 = vmax.f32 %v1753, 0.0
      %v1882 = vmax.f32 %v1754, 0.0
      %v1883 = vmax.f32 %v1755, 0.0
      %v1884 = vmax.f32 %v1756, 0.0
      %v1885 = vmax.f32 %v1757, %v1758
      %v1886 = vmax.f32 %v1761, %v1762
      %v1887 = vmax.f32 %v1765, %v1766
      %v1888 = vmax.f32 %v1769, %v1770
      %v1889 = vmax.f32 %v1773, %v1774
      %v1890 = vmax.f32 %v1777, %v1778
      %v1891 = vmax.f32 %v1781, %v1782
      %v1892 = vmax.f32 %v1785, %v1786
      %v1893 = vmax.f32 %v1789, %v1790
      %v1894 = vmax.f32 %v1793, %v1794
      %v1895 = vmax.f32 %v1797, %v1798
      %v1896 = vmax.f32 %v1801, %v1802
      %v1897 = vmax.f32 %v1805, %v1806
      %v1898 = vmax.f32 %v1809, %v1810
      %v1899 = vmax.f32 %v1813, %v1814
      %v1900 = vmax.f32 %v1817, %v1818
      %v1901 = vmax.f32 %v1821, %v1822
      %v1902 = vmax.f32 %v1825, %v1826
      %v1903 = vmax.f32 %v1829, %v1830
      %v1904 = vmax.f32 %v1833, %v1834
      %v1905 = vmax.f32 %v1837, %v1838
      %v1906 = vmax.f32 %v1841, %v1842
      %v1907 = vmax.f32 %v1845, %v1846
      %v1908 = vmax.f32 %v1849, %v1850
      %v1909 = vmax.f32 %v1853, %v1854
      %v1910 = vmax.f32 %v1857, %v1858
      %v1911 = vmax.f32 %v1861, %v1862
      %v1912 = vmax.f32 %v1865, %v1866
      %v1913 = vmax.f32 %v1869, %v1870
      %v1914 = vmax.f32 %v1873, %v1874
      %v1915 = vmax.f32 %v1877, %v1878
      %v1916 = vmax.f32 %v1881, %v1882
      %v1917 = vmax.f32 %v1759, %v1760
      %v1918 = vmax.f32 %v1763, %v1764
      %v1919 = vmax.f32 %v1767, %v1768
      %v1920 = vmax.f32 %v1771, %v1772
      %v1921 = vmax.f32 %v1775, %v1776
      %v1922 = vmax.f32 %v1779, %v1780
      %v1923 = vmax.f32 %v1783, %v1784
      %v1924 = vmax.f32 %v1787, %v1788
      %v1925 = vmax.f32 %v1791, %v1792
      %v1926 = vmax.f32 %v1795, %v1796
      %v1927 = vmax.f32 %v1799, %v1800
      %v1928 = vmax.f32 %v1803, %v1804
      %v1929 = vmax.f32 %v1807, %v1808
      %v1930 = vmax.f32 %v1811, %v1812
      %v1931 = vmax.f32 %v1815, %v1816
      %v1932 = vmax.f32 %v1819, %v1820
      %v1933 = vmax.f32 %v1823, %v1824
      %v1934 = vmax.f32 %v1827, %v1828
      %v1935 = vmax.f32 %v1831, %v1832
      %v1936 = vmax.f32 %v1835, %v1836
      %v1937 = vmax.f32 %v1839, %v1840
      %v1938 = vmax.f32 %v1843, %v1844
      %v1939 = vmax.f32 %v1847, %v1848
      %v1940 = vmax.f32 %v1851, %v1852
      %v1941 = vmax.f32 %v1855, %v1856
      %v1942 = vmax.f32 %v1859, %v1860
      %v1943 = vmax.f32 %v1863, %v1864
      %v1944 = vmax.f32 %v1867, %v1868
      %v1945 = vmax.f32 %v1871, %v1872
      %v1946 = vmax.f32 %v1875, %v1876
      %v1947 = vmax.f32 %v1879, %v1880
      %v1948 = vmax.f32 %v1883, %v1884
      %v1949 = vmax.f32 %v1885, %v1917
      %v1950 = vmax.f32 %v1886, %v1918
      %v1951 = vmax.f32 %v1887, %v1919
      %v1952 = vmax.f32 %v1888, %v1920
      %v1953 = vmax.f32 %v1889, %v1921
      %v1954 = vmax.f32 %v1890, %v1922
      %v1955 = vmax.f32 %v1891, %v1923
      %v1956 = vmax.f32 %v1892, %v1924
      %v1957 = vmax.f32 %v1893, %v1925
      %v1958 = vmax.f32 %v1894, %v1926
      %v1959 = vmax.f32 %v1895, %v1927
      %v1960 = vmax.f32 %v1896, %v1928
      %v1961 = vmax.f32 %v1897, %v1929
      %v1962 = vmax.f32 %v1898, %v1930
      %v1963 = vmax.f32 %v1899, %v1931
      %v1964 = vmax.f32 %v1900, %v1932
      %v1965 = vmax.f32 %v1901, %v1933
      %v1966 = vmax.f32 %v1902, %v1934
      %v1967 = vmax.f32 %v1903, %v1935
      %v1968 = vmax.f32 %v1904, %v1936
      %v1969 = vmax.f32 %v1905, %v1937
      %v1970 = vmax.f32 %v1906, %v1938
      %v1971 = vmax.f32 %v1907, %v1939
      %v1972 = vmax.f32 %v1908, %v1940
      %v1973 = vmax.f32 %v1909, %v1941
      %v1974 = vmax.f32 %v1910, %v1942
      %v1975 = vmax.f32 %v1911, %v1943
      %v1976 = vmax.f32 %v1912, %v1944
      %v1977 = vmax.f32 %v1913, %v1945
      %v1978 = vmax.f32 %v1914, %v1946
      %v1979 = vmax.f32 %v1915, %v1947
      %v1980 = vmax.f32 %v1916, %v1948
      %v1981 = vlaneseq
      %v1982 = vshrl.u32 %v1981, 7
      %v1983 = vadd.s32 %v1982, 8
      %v1984 = vadd.s32 %v1982, 16
      %v1985 = vadd.s32 %v1982, 24
      %v1986 = vadd.s32 %v1982, 32
      %v1987 = vadd.s32 %v1982, 40
      %v1988 = vadd.s32 %v1982, 48
      %v1989 = vadd.s32 %v1982, 56
      %v1990 = vadd.s32 %v1982, 64
      %v1991 = vadd.s32 %v1982, 72
      %v1992 = vadd.s32 %v1982, 80
      %v1993 = vadd.s32 %v1982, 88
      %v1994 = vadd.s32 %v1982, 96
      %v1995 = vadd.s32 %v1982, 104
      %v1996 = vadd.s32 %v1982, 112
      %v1997 = vadd.s32 %v1982, 120
      %v1998 = vadd.s32 %v1982, 128
      %v1999 = vadd.s32 %v1982, 136
      %v2000 = vadd.s32 %v1982, 144
      %v2001 = vadd.s32 %v1982, 152
      %v2002 = vadd.s32 %v1982, 160
      %v2003 = vadd.s32 %v1982, 168
      %v2004 = vadd.s32 %v1982, 176
      %v2005 = vadd.s32 %v1982, 184
      %v2006 = vadd.s32 %v1982, 192
      %v2007 = vadd.s32 %v1982, 200
      %v2008 = vadd.s32 %v1982, 208
      %v2009 = vadd.s32 %v1982, 216
      %v2010 = vadd.s32 %v1982, 224
      %v2011 = vadd.s32 %v1982, 232
      %v2012 = vadd.s32 %v1982, 240
      %v2013 = vadd.s32 %v1982, 248
      %vm2014 = vcmp.eq.s32.totalorder %v1982, 0
      %vm2015 = vcmp.eq.s32.totalorder %v1983, 0
      %vm2016 = vcmp.eq.s32.totalorder %v1984, 0
      %vm2017 = vcmp.eq.s32.totalorder %v1985, 0
      %vm2018 = vcmp.eq.s32.totalorder %v1986, 0
      %vm2019 = vcmp.eq.s32.totalorder %v1987, 0
      %vm2020 = vcmp.eq.s32.totalorder %v1988, 0
      %vm2021 = vcmp.eq.s32.totalorder %v1989, 0
      %vm2022 = vcmp.eq.s32.totalorder %v1990, 0
      %vm2023 = vcmp.eq.s32.totalorder %v1991, 0
      %vm2024 = vcmp.eq.s32.totalorder %v1992, 0
      %vm2025 = vcmp.eq.s32.totalorder %v1993, 0
      %vm2026 = vcmp.eq.s32.totalorder %v1994, 0
      %vm2027 = vcmp.eq.s32.totalorder %v1995, 0
      %vm2028 = vcmp.eq.s32.totalorder %v1996, 0
      %vm2029 = vcmp.eq.s32.totalorder %v1997, 0
      %vm2030 = vcmp.eq.s32.totalorder %v1998, 0
      %vm2031 = vcmp.eq.s32.totalorder %v1999, 0
      %vm2032 = vcmp.eq.s32.totalorder %v2000, 0
      %vm2033 = vcmp.eq.s32.totalorder %v2001, 0
      %vm2034 = vcmp.eq.s32.totalorder %v2002, 0
      %vm2035 = vcmp.eq.s32.totalorder %v2003, 0
      %vm2036 = vcmp.eq.s32.totalorder %v2004, 0
      %vm2037 = vcmp.eq.s32.totalorder %v2005, 0
      %vm2038 = vcmp.eq.s32.totalorder %v2006, 0
      %vm2039 = vcmp.eq.s32.totalorder %v2007, 0
      %vm2040 = vcmp.eq.s32.totalorder %v2008, 0
      %vm2041 = vcmp.eq.s32.totalorder %v2009, 0
      %vm2042 = vcmp.eq.s32.totalorder %v2010, 0
      %vm2043 = vcmp.eq.s32.totalorder %v2011, 0
      %vm2044 = vcmp.eq.s32.totalorder %v2012, 0
      %vm2045 = vcmp.eq.s32.totalorder %v2013, 0
      %vm2046 = vcmp.eq.s32.totalorder %v1982, 127
      %vm2047 = vcmp.eq.s32.totalorder %v1983, 127
      %vm2048 = vcmp.eq.s32.totalorder %v1984, 127
      %vm2049 = vcmp.eq.s32.totalorder %v1985, 127
      %vm2050 = vcmp.eq.s32.totalorder %v1986, 127
      %vm2051 = vcmp.eq.s32.totalorder %v1987, 127
      %vm2052 = vcmp.eq.s32.totalorder %v1988, 127
      %vm2053 = vcmp.eq.s32.totalorder %v1989, 127
      %vm2054 = vcmp.eq.s32.totalorder %v1990, 127
      %vm2055 = vcmp.eq.s32.totalorder %v1991, 127
      %vm2056 = vcmp.eq.s32.totalorder %v1992, 127
      %vm2057 = vcmp.eq.s32.totalorder %v1993, 127
      %vm2058 = vcmp.eq.s32.totalorder %v1994, 127
      %vm2059 = vcmp.eq.s32.totalorder %v1995, 127
      %vm2060 = vcmp.eq.s32.totalorder %v1996, 127
      %vm2061 = vcmp.eq.s32.totalorder %v1997, 127
      %vm2062 = vcmp.eq.s32.totalorder %v1998, 127
      %vm2063 = vcmp.eq.s32.totalorder %v1999, 127
      %vm2064 = vcmp.eq.s32.totalorder %v2000, 127
      %vm2065 = vcmp.eq.s32.totalorder %v2001, 127
      %vm2066 = vcmp.eq.s32.totalorder %v2002, 127
      %vm2067 = vcmp.eq.s32.totalorder %v2003, 127
      %vm2068 = vcmp.eq.s32.totalorder %v2004, 127
      %vm2069 = vcmp.eq.s32.totalorder %v2005, 127
      %vm2070 = vcmp.eq.s32.totalorder %v2006, 127
      %vm2071 = vcmp.eq.s32.totalorder %v2007, 127
      %vm2072 = vcmp.eq.s32.totalorder %v2008, 127
      %vm2073 = vcmp.eq.s32.totalorder %v2009, 127
      %vm2074 = vcmp.eq.s32.totalorder %v2010, 127
      %vm2075 = vcmp.eq.s32.totalorder %v2011, 127
      %vm2076 = vcmp.eq.s32.totalorder %v2012, 127
      %vm2077 = vcmp.eq.s32.totalorder %v2013, 127
      %vm2078 = vcmp.eq.s32.totalorder %v1982, 128
      %vm2079 = vcmp.eq.s32.totalorder %v1983, 128
      %vm2080 = vcmp.eq.s32.totalorder %v1984, 128
      %vm2081 = vcmp.eq.s32.totalorder %v1985, 128
      %vm2082 = vcmp.eq.s32.totalorder %v1986, 128
      %vm2083 = vcmp.eq.s32.totalorder %v1987, 128
      %vm2084 = vcmp.eq.s32.totalorder %v1988, 128
      %vm2085 = vcmp.eq.s32.totalorder %v1989, 128
      %vm2086 = vcmp.eq.s32.totalorder %v1990, 128
      %vm2087 = vcmp.eq.s32.totalorder %v1991, 128
      %vm2088 = vcmp.eq.s32.totalorder %v1992, 128
      %vm2089 = vcmp.eq.s32.totalorder %v1993, 128
      %vm2090 = vcmp.eq.s32.totalorder %v1994, 128
      %vm2091 = vcmp.eq.s32.totalorder %v1995, 128
      %vm2092 = vcmp.eq.s32.totalorder %v1996, 128
      %vm2093 = vcmp.eq.s32.totalorder %v1997, 128
      %vm2094 = vcmp.eq.s32.totalorder %v1998, 128
      %vm2095 = vcmp.eq.s32.totalorder %v1999, 128
      %vm2096 = vcmp.eq.s32.totalorder %v2000, 128
      %vm2097 = vcmp.eq.s32.totalorder %v2001, 128
      %vm2098 = vcmp.eq.s32.totalorder %v2002, 128
      %vm2099 = vcmp.eq.s32.totalorder %v2003, 128
      %vm2100 = vcmp.eq.s32.totalorder %v2004, 128
      %vm2101 = vcmp.eq.s32.totalorder %v2005, 128
      %vm2102 = vcmp.eq.s32.totalorder %v2006, 128
      %vm2103 = vcmp.eq.s32.totalorder %v2007, 128
      %vm2104 = vcmp.eq.s32.totalorder %v2008, 128
      %vm2105 = vcmp.eq.s32.totalorder %v2009, 128
      %vm2106 = vcmp.eq.s32.totalorder %v2010, 128
      %vm2107 = vcmp.eq.s32.totalorder %v2011, 128
      %vm2108 = vcmp.eq.s32.totalorder %v2012, 128
      %vm2109 = vcmp.eq.s32.totalorder %v2013, 128
      %vm2110 = vmor %vm2014, %vm2078
      %vm2111 = vmor %vm2015, %vm2079
      %vm2112 = vmor %vm2016, %vm2080
      %vm2113 = vmor %vm2017, %vm2081
      %vm2114 = vmor %vm2018, %vm2082
      %vm2115 = vmor %vm2019, %vm2083
      %vm2116 = vmor %vm2020, %vm2084
      %vm2117 = vmor %vm2021, %vm2085
      %vm2118 = vmor %vm2022, %vm2086
      %vm2119 = vmor %vm2023, %vm2087
      %vm2120 = vmor %vm2024, %vm2088
      %vm2121 = vmor %vm2025, %vm2089
      %vm2122 = vmor %vm2026, %vm2090
      %vm2123 = vmor %vm2027, %vm2091
      %vm2124 = vmor %vm2028, %vm2092
      %vm2125 = vmor %vm2029, %vm2093
      %vm2126 = vmor %vm2030, %vm2094
      %vm2127 = vmor %vm2031, %vm2095
      %vm2128 = vmor %vm2032, %vm2096
      %vm2129 = vmor %vm2033, %vm2097
      %vm2130 = vmor %vm2034, %vm2098
      %vm2131 = vmor %vm2035, %vm2099
      %vm2132 = vmor %vm2036, %vm2100
      %vm2133 = vmor %vm2037, %vm2101
      %vm2134 = vmor %vm2038, %vm2102
      %vm2135 = vmor %vm2039, %vm2103
      %vm2136 = vmor %vm2040, %vm2104
      %vm2137 = vmor %vm2041, %vm2105
      %vm2138 = vmor %vm2042, %vm2106
      %vm2139 = vmor %vm2043, %vm2107
      %vm2140 = vmor %vm2044, %vm2108
      %vm2141 = vmor %vm2045, %vm2109
      %vm2142 = vcmp.eq.s32.totalorder %v1982, 255
      %vm2143 = vcmp.eq.s32.totalorder %v1983, 255
      %vm2144 = vcmp.eq.s32.totalorder %v1984, 255
      %vm2145 = vcmp.eq.s32.totalorder %v1985, 255
      %vm2146 = vcmp.eq.s32.totalorder %v1986, 255
      %vm2147 = vcmp.eq.s32.totalorder %v1987, 255
      %vm2148 = vcmp.eq.s32.totalorder %v1988, 255
      %vm2149 = vcmp.eq.s32.totalorder %v1989, 255
      %vm2150 = vcmp.eq.s32.totalorder %v1990, 255
      %vm2151 = vcmp.eq.s32.totalorder %v1991, 255
      %vm2152 = vcmp.eq.s32.totalorder %v1992, 255
      %vm2153 = vcmp.eq.s32.totalorder %v1993, 255
      %vm2154 = vcmp.eq.s32.totalorder %v1994, 255
      %vm2155 = vcmp.eq.s32.totalorder %v1995, 255
      %vm2156 = vcmp.eq.s32.totalorder %v1996, 255
      %vm2157 = vcmp.eq.s32.totalorder %v1997, 255
      %vm2158 = vcmp.eq.s32.totalorder %v1998, 255
      %vm2159 = vcmp.eq.s32.totalorder %v1999, 255
      %vm2160 = vcmp.eq.s32.totalorder %v2000, 255
      %vm2161 = vcmp.eq.s32.totalorder %v2001, 255
      %vm2162 = vcmp.eq.s32.totalorder %v2002, 255
      %vm2163 = vcmp.eq.s32.totalorder %v2003, 255
      %vm2164 = vcmp.eq.s32.totalorder %v2004, 255
      %vm2165 = vcmp.eq.s32.totalorder %v2005, 255
      %vm2166 = vcmp.eq.s32.totalorder %v2006, 255
      %vm2167 = vcmp.eq.s32.totalorder %v2007, 255
      %vm2168 = vcmp.eq.s32.totalorder %v2008, 255
      %vm2169 = vcmp.eq.s32.totalorder %v2009, 255
      %vm2170 = vcmp.eq.s32.totalorder %v2010, 255
      %vm2171 = vcmp.eq.s32.totalorder %v2011, 255
      %vm2172 = vcmp.eq.s32.totalorder %v2012, 255
      %vm2173 = vcmp.eq.s32.totalorder %v2013, 255
      %vm2174 = vmor %vm2046, %vm2142
      %vm2175 = vmor %vm2047, %vm2143
      %vm2176 = vmor %vm2048, %vm2144
      %vm2177 = vmor %vm2049, %vm2145
      %vm2178 = vmor %vm2050, %vm2146
      %vm2179 = vmor %vm2051, %vm2147
      %vm2180 = vmor %vm2052, %vm2148
      %vm2181 = vmor %vm2053, %vm2149
      %vm2182 = vmor %vm2054, %vm2150
      %vm2183 = vmor %vm2055, %vm2151
      %vm2184 = vmor %vm2056, %vm2152
      %vm2185 = vmor %vm2057, %vm2153
      %vm2186 = vmor %vm2058, %vm2154
      %vm2187 = vmor %vm2059, %vm2155
      %vm2188 = vmor %vm2060, %vm2156
      %vm2189 = vmor %vm2061, %vm2157
      %vm2190 = vmor %vm2062, %vm2158
      %vm2191 = vmor %vm2063, %vm2159
      %vm2192 = vmor %vm2064, %vm2160
      %vm2193 = vmor %vm2065, %vm2161
      %vm2194 = vmor %vm2066, %vm2162
      %vm2195 = vmor %vm2067, %vm2163
      %vm2196 = vmor %vm2068, %vm2164
      %vm2197 = vmor %vm2069, %vm2165
      %vm2198 = vmor %vm2070, %vm2166
      %vm2199 = vmor %vm2071, %vm2167
      %vm2200 = vmor %vm2072, %vm2168
      %vm2201 = vmor %vm2073, %vm2169
      %vm2202 = vmor %vm2074, %vm2170
      %vm2203 = vmor %vm2075, %vm2171
      %vm2204 = vmor %vm2076, %vm2172
      %vm2205 = vmor %vm2077, %vm2173
      %v2206 = vrot.slane %v1949, 7
      %v2207 = vrot.slane %v1950, 7
      %v2208 = vrot.slane %v1951, 7
      %v2209 = vrot.slane %v1952, 7
      %v2210 = vrot.slane %v1953, 7
      %v2211 = vrot.slane %v1954, 7
      %v2212 = vrot.slane %v1955, 7
      %v2213 = vrot.slane %v1956, 7
      %v2214 = vrot.slane %v1957, 7
      %v2215 = vrot.slane %v1958, 7
      %v2216 = vrot.slane %v1959, 7
      %v2217 = vrot.slane %v1960, 7
      %v2218 = vrot.slane %v1961, 7
      %v2219 = vrot.slane %v1962, 7
      %v2220 = vrot.slane %v1963, 7
      %v2221 = vrot.slane %v1964, 7
      %v2222 = vrot.slane %v1965, 7
      %v2223 = vrot.slane %v1966, 7
      %v2224 = vrot.slane %v1967, 7
      %v2225 = vrot.slane %v1968, 7
      %v2226 = vrot.slane %v1969, 7
      %v2227 = vrot.slane %v1970, 7
      %v2228 = vrot.slane %v1971, 7
      %v2229 = vrot.slane %v1972, 7
      %v2230 = vrot.slane %v1973, 7
      %v2231 = vrot.slane %v1974, 7
      %v2232 = vrot.slane %v1975, 7
      %v2233 = vrot.slane %v1976, 7
      %v2234 = vrot.slane %v1977, 7
      %v2235 = vrot.slane %v1978, 7
      %v2236 = vrot.slane %v1979, 7
      %v2237 = vrot.slane %v1980, 7
      %vm2238 = vcmp.lt.s32.totalorder %v1982, 1
      %v2239 = vsel %vm2238, %v2236, %v2237
      %v2240 = vsel %vm2238, %v2235, %v2236
      %v2241 = vsel %vm2238, %v2234, %v2235
      %v2242 = vsel %vm2238, %v2233, %v2234
      %v2243 = vsel %vm2238, %v2232, %v2233
      %v2244 = vsel %vm2238, %v2231, %v2232
      %v2245 = vsel %vm2238, %v2230, %v2231
      %v2246 = vsel %vm2238, %v2229, %v2230
      %v2247 = vsel %vm2238, %v2228, %v2229
      %v2248 = vsel %vm2238, %v2227, %v2228
      %v2249 = vsel %vm2238, %v2226, %v2227
      %v2250 = vsel %vm2238, %v2225, %v2226
      %v2251 = vsel %vm2238, %v2224, %v2225
      %v2252 = vsel %vm2238, %v2223, %v2224
      %v2253 = vsel %vm2238, %v2222, %v2223
      %v2254 = vsel %vm2238, %v2221, %v2222
      %v2255 = vsel %vm2238, %v2220, %v2221
      %v2256 = vsel %vm2238, %v2219, %v2220
      %v2257 = vsel %vm2238, %v2218, %v2219
      %v2258 = vsel %vm2238, %v2217, %v2218
      %v2259 = vsel %vm2238, %v2216, %v2217
      %v2260 = vsel %vm2238, %v2215, %v2216
      %v2261 = vsel %vm2238, %v2214, %v2215
      %v2262 = vsel %vm2238, %v2213, %v2214
      %v2263 = vsel %vm2238, %v2212, %v2213
      %v2264 = vsel %vm2238, %v2211, %v2212
      %v2265 = vsel %vm2238, %v2210, %v2211
      %v2266 = vsel %vm2238, %v2209, %v2210
      %v2267 = vsel %vm2238, %v2208, %v2209
      %v2268 = vsel %vm2238, %v2207, %v2208
      %v2269 = vsel %vm2238, %v2206, %v2207
      %v2270 = vsel %vm2238, %v2237, %v2206
      %v2271 = vsel %vm2110, 0.0, %v2270
      %v2272 = vsel %vm2111, 0.0, %v2269
      %v2273 = vsel %vm2112, 0.0, %v2268
      %v2274 = vsel %vm2113, 0.0, %v2267
      %v2275 = vsel %vm2114, 0.0, %v2266
      %v2276 = vsel %vm2115, 0.0, %v2265
      %v2277 = vsel %vm2116, 0.0, %v2264
      %v2278 = vsel %vm2117, 0.0, %v2263
      %v2279 = vsel %vm2118, 0.0, %v2262
      %v2280 = vsel %vm2119, 0.0, %v2261
      %v2281 = vsel %vm2120, 0.0, %v2260
      %v2282 = vsel %vm2121, 0.0, %v2259
      %v2283 = vsel %vm2122, 0.0, %v2258
      %v2284 = vsel %vm2123, 0.0, %v2257
      %v2285 = vsel %vm2124, 0.0, %v2256
      %v2286 = vsel %vm2125, 0.0, %v2255
      %v2287 = vsel %vm2126, 0.0, %v2254
      %v2288 = vsel %vm2127, 0.0, %v2253
      %v2289 = vsel %vm2128, 0.0, %v2252
      %v2290 = vsel %vm2129, 0.0, %v2251
      %v2291 = vsel %vm2130, 0.0, %v2250
      %v2292 = vsel %vm2131, 0.0, %v2249
      %v2293 = vsel %vm2132, 0.0, %v2248
      %v2294 = vsel %vm2133, 0.0, %v2247
      %v2295 = vsel %vm2134, 0.0, %v2246
      %v2296 = vsel %vm2135, 0.0, %v2245
      %v2297 = vsel %vm2136, 0.0, %v2244
      %v2298 = vsel %vm2137, 0.0, %v2243
      %v2299 = vsel %vm2138, 0.0, %v2242
      %v2300 = vsel %vm2139, 0.0, %v2241
      %v2301 = vsel %vm2140, 0.0, %v2240
      %v2302 = vsel %vm2141, 0.0, %v2239
      %v2303 = vrot.slane %v1949, 1
      %v2304 = vrot.slane %v1950, 1
      %v2305 = vrot.slane %v1951, 1
      %v2306 = vrot.slane %v1952, 1
      %v2307 = vrot.slane %v1953, 1
      %v2308 = vrot.slane %v1954, 1
      %v2309 = vrot.slane %v1955, 1
      %v2310 = vrot.slane %v1956, 1
      %v2311 = vrot.slane %v1957, 1
      %v2312 = vrot.slane %v1958, 1
      %v2313 = vrot.slane %v1959, 1
      %v2314 = vrot.slane %v1960, 1
      %v2315 = vrot.slane %v1961, 1
      %v2316 = vrot.slane %v1962, 1
      %v2317 = vrot.slane %v1963, 1
      %v2318 = vrot.slane %v1964, 1
      %v2319 = vrot.slane %v1965, 1
      %v2320 = vrot.slane %v1966, 1
      %v2321 = vrot.slane %v1967, 1
      %v2322 = vrot.slane %v1968, 1
      %v2323 = vrot.slane %v1969, 1
      %v2324 = vrot.slane %v1970, 1
      %v2325 = vrot.slane %v1971, 1
      %v2326 = vrot.slane %v1972, 1
      %v2327 = vrot.slane %v1973, 1
      %v2328 = vrot.slane %v1974, 1
      %v2329 = vrot.slane %v1975, 1
      %v2330 = vrot.slane %v1976, 1
      %v2331 = vrot.slane %v1977, 1
      %v2332 = vrot.slane %v1978, 1
      %v2333 = vrot.slane %v1979, 1
      %v2334 = vrot.slane %v1980, 1
      %vm2335 = vcmp.lt.s32.totalorder %v1982, 7
      %v2336 = vsel %vm2335, %v2333, %v2334
      %v2337 = vsel %vm2335, %v2332, %v2333
      %v2338 = vsel %vm2335, %v2331, %v2332
      %v2339 = vsel %vm2335, %v2330, %v2331
      %v2340 = vsel %vm2335, %v2329, %v2330
      %v2341 = vsel %vm2335, %v2328, %v2329
      %v2342 = vsel %vm2335, %v2327, %v2328
      %v2343 = vsel %vm2335, %v2326, %v2327
      %v2344 = vsel %vm2335, %v2325, %v2326
      %v2345 = vsel %vm2335, %v2324, %v2325
      %v2346 = vsel %vm2335, %v2323, %v2324
      %v2347 = vsel %vm2335, %v2322, %v2323
      %v2348 = vsel %vm2335, %v2321, %v2322
      %v2349 = vsel %vm2335, %v2320, %v2321
      %v2350 = vsel %vm2335, %v2319, %v2320
      %v2351 = vsel %vm2335, %v2318, %v2319
      %v2352 = vsel %vm2335, %v2317, %v2318
      %v2353 = vsel %vm2335, %v2316, %v2317
      %v2354 = vsel %vm2335, %v2315, %v2316
      %v2355 = vsel %vm2335, %v2314, %v2315
      %v2356 = vsel %vm2335, %v2313, %v2314
      %v2357 = vsel %vm2335, %v2312, %v2313
      %v2358 = vsel %vm2335, %v2311, %v2312
      %v2359 = vsel %vm2335, %v2310, %v2311
      %v2360 = vsel %vm2335, %v2309, %v2310
      %v2361 = vsel %vm2335, %v2308, %v2309
      %v2362 = vsel %vm2335, %v2307, %v2308
      %v2363 = vsel %vm2335, %v2306, %v2307
      %v2364 = vsel %vm2335, %v2305, %v2306
      %v2365 = vsel %vm2335, %v2304, %v2305
      %v2366 = vsel %vm2335, %v2303, %v2304
      %v2367 = vsel %vm2335, %v2334, %v2303
      %v2368 = vsel %vm2174, 0.0, %v2366
      %v2369 = vsel %vm2175, 0.0, %v2365
      %v2370 = vsel %vm2176, 0.0, %v2364
      %v2371 = vsel %vm2177, 0.0, %v2363
      %v2372 = vsel %vm2178, 0.0, %v2362
      %v2373 = vsel %vm2179, 0.0, %v2361
      %v2374 = vsel %vm2180, 0.0, %v2360
      %v2375 = vsel %vm2181, 0.0, %v2359
      %v2376 = vsel %vm2182, 0.0, %v2358
      %v2377 = vsel %vm2183, 0.0, %v2357
      %v2378 = vsel %vm2184, 0.0, %v2356
      %v2379 = vsel %vm2185, 0.0, %v2355
      %v2380 = vsel %vm2186, 0.0, %v2354
      %v2381 = vsel %vm2187, 0.0, %v2353
      %v2382 = vsel %vm2188, 0.0, %v2352
      %v2383 = vsel %vm2189, 0.0, %v2351
      %v2384 = vsel %vm2190, 0.0, %v2350
      %v2385 = vsel %vm2191, 0.0, %v2349
      %v2386 = vsel %vm2192, 0.0, %v2348
      %v2387 = vsel %vm2193, 0.0, %v2347
      %v2388 = vsel %vm2194, 0.0, %v2346
      %v2389 = vsel %vm2195, 0.0, %v2345
      %v2390 = vsel %vm2196, 0.0, %v2344
      %v2391 = vsel %vm2197, 0.0, %v2343
      %v2392 = vsel %vm2198, 0.0, %v2342
      %v2393 = vsel %vm2199, 0.0, %v2341
      %v2394 = vsel %vm2200, 0.0, %v2340
      %v2395 = vsel %vm2201, 0.0, %v2339
      %v2396 = vsel %vm2202, 0.0, %v2338
      %v2397 = vsel %vm2203, 0.0, %v2337
      %v2398 = vsel %vm2204, 0.0, %v2336
      %v2399 = vsel %vm2205, 0.0, %v2367
      %v2400 = vpack.c.bf16 %v2272, %v2271
      %v2401 = vpack.c.bf16 %v1950, %v1949
      %v2402 = vpack.c.bf16 %v2369, %v2368
      %v2403 = vpack.c.bf16 %v2274, %v2273
      %v2404 = vpack.c.bf16 %v1952, %v1951
      %v2405 = vpack.c.bf16 %v2371, %v2370
      %v2406 = vpack.c.bf16 %v2276, %v2275
      %v2407 = vpack.c.bf16 %v1954, %v1953
      %v2408 = vpack.c.bf16 %v2373, %v2372
      %v2409 = vpack.c.bf16 %v2278, %v2277
      %v2410 = vpack.c.bf16 %v1956, %v1955
      %v2411 = vpack.c.bf16 %v2375, %v2374
      %v2412 = vpack.c.bf16 %v2280, %v2279
      %v2413 = vpack.c.bf16 %v1958, %v1957
      %v2414 = vpack.c.bf16 %v2377, %v2376
      %v2415 = vpack.c.bf16 %v2282, %v2281
      %v2416 = vpack.c.bf16 %v1960, %v1959
      %v2417 = vpack.c.bf16 %v2379, %v2378
      %v2418 = vpack.c.bf16 %v2284, %v2283
      %v2419 = vpack.c.bf16 %v1962, %v1961
      %v2420 = vpack.c.bf16 %v2381, %v2380
      %v2421 = vpack.c.bf16 %v2286, %v2285
      %v2422 = vpack.c.bf16 %v1964, %v1963
      %v2423 = vpack.c.bf16 %v2383, %v2382
      %v2424 = vpack.c.bf16 %v2288, %v2287
      %v2425 = vpack.c.bf16 %v1966, %v1965
      %v2426 = vpack.c.bf16 %v2385, %v2384
      %v2427 = vpack.c.bf16 %v2290, %v2289
      %v2428 = vpack.c.bf16 %v1968, %v1967
      %v2429 = vpack.c.bf16 %v2387, %v2386
      %v2430 = vpack.c.bf16 %v2292, %v2291
      %v2431 = vpack.c.bf16 %v1970, %v1969
      %v2432 = vpack.c.bf16 %v2389, %v2388
      %v2433 = vpack.c.bf16 %v2294, %v2293
      %v2434 = vpack.c.bf16 %v1972, %v1971
      %v2435 = vpack.c.bf16 %v2391, %v2390
      %v2436 = vpack.c.bf16 %v2296, %v2295
      %v2437 = vpack.c.bf16 %v1974, %v1973
      %v2438 = vpack.c.bf16 %v2393, %v2392
      %v2439 = vpack.c.bf16 %v2298, %v2297
      %v2440 = vpack.c.bf16 %v1976, %v1975
      %v2441 = vpack.c.bf16 %v2395, %v2394
      %v2442 = vpack.c.bf16 %v2300, %v2299
      %v2443 = vpack.c.bf16 %v1978, %v1977
      %v2444 = vpack.c.bf16 %v2397, %v2396
      %v2445 = vpack.c.bf16 %v2302, %v2301
      %v2446 = vpack.c.bf16 %v1980, %v1979
      %v2447 = vpack.c.bf16 %v2399, %v2398
      %v2448 = vld [vmem:[%s3] sm:$0xff]
      %v2449 = vld [vmem:[%s3 + $0x8] sm:$0xff]
      %v2450 = vld [vmem:[%s3 + $0x10] sm:$0xff]
      %v2451 = vld [vmem:[%s3 + $0x18] sm:$0xff]
      %v2452 = vld [vmem:[%s3 + $0x20] sm:$0xff]
      %v2453 = vld [vmem:[%s3 + $0x28] sm:$0xff]
      %v2454 = vld [vmem:[%s3 + $0x30] sm:$0xff]
      %v2455 = vld [vmem:[%s3 + $0x38] sm:$0xff]
      %v2456 = vld [vmem:[%s3 + $0x40] sm:$0xff]
      %v2457 = vld [vmem:[%s3 + $0x48] sm:$0xff]
      %v2458 = vld [vmem:[%s3 + $0x50] sm:$0xff]
      %v2459 = vld [vmem:[%s3 + $0x58] sm:$0xff]
      %v2460 = vld [vmem:[%s3 + $0x60] sm:$0xff]
      %v2461 = vld [vmem:[%s3 + $0x68] sm:$0xff]
      %v2462 = vld [vmem:[%s3 + $0x70] sm:$0xff]
      %v2463 = vld [vmem:[%s3 + $0x78] sm:$0xff]
      %v2464 = vld [vmem:[%s3 + $0x80] sm:$0xff]
      %v2465 = vld [vmem:[%s3 + $0x88] sm:$0xff]
      %v2466 = vld [vmem:[%s3 + $0x90] sm:$0xff]
      %v2467 = vld [vmem:[%s3 + $0x98] sm:$0xff]
      %v2468 = vld [vmem:[%s3 + $0xa0] sm:$0xff]
      %v2469 = vld [vmem:[%s3 + $0xa8] sm:$0xff]
      %v2470 = vld [vmem:[%s3 + $0xb0] sm:$0xff]
      %v2471 = vld [vmem:[%s3 + $0xb8] sm:$0xff]
      %v2472 = vld [vmem:[%s3 + $0xc0] sm:$0xff]
      %v2473 = vld [vmem:[%s3 + $0xc8] sm:$0xff]
      %v2474 = vld [vmem:[%s3 + $0xd0] sm:$0xff]
      %v2475 = vld [vmem:[%s3 + $0xd8] sm:$0xff]
      %v2476 = vld [vmem:[%s3 + $0xe0] sm:$0xff]
      %v2477 = vld [vmem:[%s3 + $0xe8] sm:$0xff]
      %v2478 = vld [vmem:[%s3 + $0xf0] sm:$0xff]
      %v2479 = vld [vmem:[%s3 + $0xf8] sm:$0xff]
      %v2480 = vld [vmem:[%s3 + $0x100] sm:$0xff]
      %v2481 = vld [vmem:[%s3 + $0x108] sm:$0xff]
      %v2482 = vld [vmem:[%s3 + $0x110] sm:$0xff]
      %v2483 = vld [vmem:[%s3 + $0x118] sm:$0xff]
      %v2484 = vld [vmem:[%s3 + $0x120] sm:$0xff]
      %v2485 = vld [vmem:[%s3 + $0x128] sm:$0xff]
      %v2486 = vld [vmem:[%s3 + $0x130] sm:$0xff]
      %v2487 = vld [vmem:[%s3 + $0x138] sm:$0xff]
      %v2488 = vld [vmem:[%s3 + $0x140] sm:$0xff]
      %v2489 = vld [vmem:[%s3 + $0x148] sm:$0xff]
      %v2490 = vld [vmem:[%s3 + $0x150] sm:$0xff]
      %v2491 = vld [vmem:[%s3 + $0x158] sm:$0xff]
      %v2492 = vld [vmem:[%s3 + $0x160] sm:$0xff]
      %v2493 = vld [vmem:[%s3 + $0x168] sm:$0xff]
      %v2494 = vld [vmem:[%s3 + $0x170] sm:$0xff]
      %v2495 = vld [vmem:[%s3 + $0x178] sm:$0xff]
      %v2544 = vunpack.c.l.b16 %v2448
      %v2545 = vunpack.c.h.b16 %v2448
      %v2546 = vunpack.c.l.b16 %v2449
      %v2547 = vunpack.c.h.b16 %v2449
      %v2548 = vunpack.c.l.b16 %v2450
      %v2549 = vunpack.c.h.b16 %v2450
      %v2550 = vunpack.c.l.b16 %v2451
      %v2551 = vunpack.c.h.b16 %v2451
      %v2552 = vunpack.c.l.b16 %v2452
      %v2553 = vunpack.c.h.b16 %v2452
      %v2554 = vunpack.c.l.b16 %v2453
      %v2555 = vunpack.c.h.b16 %v2453
      %v2556 = vunpack.c.l.b16 %v2454
      %v2557 = vunpack.c.h.b16 %v2454
      %v2558 = vunpack.c.l.b16 %v2455
      %v2559 = vunpack.c.h.b16 %v2455
      %v2560 = vunpack.c.l.b16 %v2456
      %v2561 = vunpack.c.h.b16 %v2456
      %v2562 = vunpack.c.l.b16 %v2457
      %v2563 = vunpack.c.h.b16 %v2457
      %v2564 = vunpack.c.l.b16 %v2458
      %v2565 = vunpack.c.h.b16 %v2458
      %v2566 = vunpack.c.l.b16 %v2459
      %v2567 = vunpack.c.h.b16 %v2459
      %v2568 = vunpack.c.l.b16 %v2460
      %v2569 = vunpack.c.h.b16 %v2460
      %v2570 = vunpack.c.l.b16 %v2461
      %v2571 = vunpack.c.h.b16 %v2461
      %v2572 = vunpack.c.l.b16 %v2462
      %v2573 = vunpack.c.h.b16 %v2462
      %v2574 = vunpack.c.l.b16 %v2463
      %v2575 = vunpack.c.h.b16 %v2463
      %v2576 = vunpack.c.l.b16 %v2464
      %v2577 = vunpack.c.h.b16 %v2464
      %v2578 = vunpack.c.l.b16 %v2465
      %v2579 = vunpack.c.h.b16 %v2465
      %v2580 = vunpack.c.l.b16 %v2466
      %v2581 = vunpack.c.h.b16 %v2466
      %v2582 = vunpack.c.l.b16 %v2467
      %v2583 = vunpack.c.h.b16 %v2467
      %v2584 = vunpack.c.l.b16 %v2468
      %v2585 = vunpack.c.h.b16 %v2468
      %v2586 = vunpack.c.l.b16 %v2469
      %v2587 = vunpack.c.h.b16 %v2469
      %v2588 = vunpack.c.l.b16 %v2470
      %v2589 = vunpack.c.h.b16 %v2470
      %v2590 = vunpack.c.l.b16 %v2471
      %v2591 = vunpack.c.h.b16 %v2471
      %v2592 = vunpack.c.l.b16 %v2472
      %v2593 = vunpack.c.h.b16 %v2472
      %v2594 = vunpack.c.l.b16 %v2473
      %v2595 = vunpack.c.h.b16 %v2473
      %v2596 = vunpack.c.l.b16 %v2474
      %v2597 = vunpack.c.h.b16 %v2474
      %v2598 = vunpack.c.l.b16 %v2475
      %v2599 = vunpack.c.h.b16 %v2475
      %v2600 = vunpack.c.l.b16 %v2476
      %v2601 = vunpack.c.h.b16 %v2476
      %v2602 = vunpack.c.l.b16 %v2477
      %v2603 = vunpack.c.h.b16 %v2477
      %v2604 = vunpack.c.l.b16 %v2478
      %v2605 = vunpack.c.h.b16 %v2478
      %v2606 = vunpack.c.l.b16 %v2479
      %v2607 = vunpack.c.h.b16 %v2479
      %v2608 = vunpack.c.l.b16 %v2480
      %v2609 = vunpack.c.h.b16 %v2480
      %v2610 = vunpack.c.l.b16 %v2481
      %v2611 = vunpack.c.h.b16 %v2481
      %v2612 = vunpack.c.l.b16 %v2482
      %v2613 = vunpack.c.h.b16 %v2482
      %v2614 = vunpack.c.l.b16 %v2483
      %v2615 = vunpack.c.h.b16 %v2483
      %v2616 = vunpack.c.l.b16 %v2484
      %v2617 = vunpack.c.h.b16 %v2484
      %v2618 = vunpack.c.l.b16 %v2485
      %v2619 = vunpack.c.h.b16 %v2485
      %v2620 = vunpack.c.l.b16 %v2486
      %v2621 = vunpack.c.h.b16 %v2486
      %v2622 = vunpack.c.l.b16 %v2487
      %v2623 = vunpack.c.h.b16 %v2487
      %v2624 = vunpack.c.l.b16 %v2488
      %v2625 = vunpack.c.h.b16 %v2488
      %v2626 = vunpack.c.l.b16 %v2489
      %v2627 = vunpack.c.h.b16 %v2489
      %v2628 = vunpack.c.l.b16 %v2490
      %v2629 = vunpack.c.h.b16 %v2490
      %v2630 = vunpack.c.l.b16 %v2491
      %v2631 = vunpack.c.h.b16 %v2491
      %v2632 = vunpack.c.l.b16 %v2492
      %v2633 = vunpack.c.h.b16 %v2492
      %v2634 = vunpack.c.l.b16 %v2493
      %v2635 = vunpack.c.h.b16 %v2493
      %v2636 = vunpack.c.l.b16 %v2494
      %v2637 = vunpack.c.h.b16 %v2494
      %v2638 = vunpack.c.l.b16 %v2495
      %v2639 = vunpack.c.h.b16 %v2495
      %v2640 = vpack.c.b16 %v2546, %v2544
      %v2641 = vpack.c.b16 %v2547, %v2545
      %v2642 = vpack.c.b16 %v2550, %v2548
      %v2643 = vpack.c.b16 %v2551, %v2549
      %v2644 = vpack.c.b16 %v2554, %v2552
      %v2645 = vpack.c.b16 %v2555, %v2553
      %v2646 = vpack.c.b16 %v2558, %v2556
      %v2647 = vpack.c.b16 %v2559, %v2557
      %v2648 = vpack.c.b16 %v2562, %v2560
      %v2649 = vpack.c.b16 %v2563, %v2561
      %v2650 = vpack.c.b16 %v2566, %v2564
      %v2651 = vpack.c.b16 %v2567, %v2565
      %v2652 = vpack.c.b16 %v2570, %v2568
      %v2653 = vpack.c.b16 %v2571, %v2569
      %v2654 = vpack.c.b16 %v2574, %v2572
      %v2655 = vpack.c.b16 %v2575, %v2573
      %v2656 = vpack.c.b16 %v2578, %v2576
      %v2657 = vpack.c.b16 %v2579, %v2577
      %v2658 = vpack.c.b16 %v2582, %v2580
      %v2659 = vpack.c.b16 %v2583, %v2581
      %v2660 = vpack.c.b16 %v2586, %v2584
      %v2661 = vpack.c.b16 %v2587, %v2585
      %v2662 = vpack.c.b16 %v2590, %v2588
      %v2663 = vpack.c.b16 %v2591, %v2589
      %v2664 = vpack.c.b16 %v2594, %v2592
      %v2665 = vpack.c.b16 %v2595, %v2593
      %v2666 = vpack.c.b16 %v2598, %v2596
      %v2667 = vpack.c.b16 %v2599, %v2597
      %v2668 = vpack.c.b16 %v2602, %v2600
      %v2669 = vpack.c.b16 %v2603, %v2601
      %v2670 = vpack.c.b16 %v2606, %v2604
      %v2671 = vpack.c.b16 %v2607, %v2605
      %v2672 = vpack.c.b16 %v2610, %v2608
      %v2673 = vpack.c.b16 %v2611, %v2609
      %v2674 = vpack.c.b16 %v2614, %v2612
      %v2675 = vpack.c.b16 %v2615, %v2613
      %v2676 = vpack.c.b16 %v2618, %v2616
      %v2677 = vpack.c.b16 %v2619, %v2617
      %v2678 = vpack.c.b16 %v2622, %v2620
      %v2679 = vpack.c.b16 %v2623, %v2621
      %v2680 = vpack.c.b16 %v2626, %v2624
      %v2681 = vpack.c.b16 %v2627, %v2625
      %v2682 = vpack.c.b16 %v2630, %v2628
      %v2683 = vpack.c.b16 %v2631, %v2629
      %v2684 = vpack.c.b16 %v2634, %v2632
      %v2685 = vpack.c.b16 %v2635, %v2633
      %v2686 = vpack.c.b16 %v2638, %v2636
      %v2687 = vpack.c.b16 %v2639, %v2637
      %2736 = vmatpush.bf16.msra.mxu0 %v2654
      %2737 = vmatpush.bf16.msra.mxu0 %v2652
      %2738 = vmatpush.bf16.msra.mxu0 %v2650
      %2739 = vmatpush.bf16.msra.mxu0 %v2648
      %2740 = vmatpush.bf16.msra.mxu0 %v2646
      %2741 = vmatpush.bf16.msra.mxu0 %v2644
      %2742 = vmatpush.bf16.msra.mxu0 %v2642
      %2743 = vmatpush.bf16.msra.mxu0 %v2640
      %2744 = vmatmul.bf16.gmra.mxu0 %v2400
      %v2745 = vpop.f32.mrf.mxu0
      %v2746 = vadd.f32 0.0, %v2745
      %v2747 = vpop.f32.mrf.mxu0
      %v2748 = vadd.f32 0.0, %v2747
      %2749 = vmatmul.bf16.gmra.mxu0 %v2403
      %v2750 = vpop.f32.mrf.mxu0
      %v2751 = vadd.f32 0.0, %v2750
      %v2752 = vpop.f32.mrf.mxu0
      %v2753 = vadd.f32 0.0, %v2752
      %2754 = vmatmul.bf16.gmra.mxu0 %v2406
      %v2755 = vpop.f32.mrf.mxu0
      %v2756 = vadd.f32 0.0, %v2755
      %v2757 = vpop.f32.mrf.mxu0
      %v2758 = vadd.f32 0.0, %v2757
      %2759 = vmatmul.bf16.gmra.mxu0 %v2409
      %v2760 = vpop.f32.mrf.mxu0
      %v2761 = vadd.f32 0.0, %v2760
      %v2762 = vpop.f32.mrf.mxu0
      %v2763 = vadd.f32 0.0, %v2762
      %2764 = vmatmul.bf16.gmra.mxu0 %v2412
      %v2765 = vpop.f32.mrf.mxu0
      %v2766 = vadd.f32 0.0, %v2765
      %v2767 = vpop.f32.mrf.mxu0
      %v2768 = vadd.f32 0.0, %v2767
      %2769 = vmatmul.bf16.gmra.mxu0 %v2415
      %v2770 = vpop.f32.mrf.mxu0
      %v2771 = vadd.f32 0.0, %v2770
      %v2772 = vpop.f32.mrf.mxu0
      %v2773 = vadd.f32 0.0, %v2772
      %2774 = vmatmul.bf16.gmra.mxu0 %v2418
      %v2775 = vpop.f32.mrf.mxu0
      %v2776 = vadd.f32 0.0, %v2775
      %v2777 = vpop.f32.mrf.mxu0
      %v2778 = vadd.f32 0.0, %v2777
      %2779 = vmatmul.bf16.gmra.mxu0 %v2421
      %v2780 = vpop.f32.mrf.mxu0
      %v2781 = vadd.f32 0.0, %v2780
      %v2782 = vpop.f32.mrf.mxu0
      %v2783 = vadd.f32 0.0, %v2782
      %2784 = vmatmul.bf16.gmra.mxu0 %v2424
      %v2785 = vpop.f32.mrf.mxu0
      %v2786 = vadd.f32 0.0, %v2785
      %v2787 = vpop.f32.mrf.mxu0
      %v2788 = vadd.f32 0.0, %v2787
      %2789 = vmatmul.bf16.gmra.mxu0 %v2427
      %v2790 = vpop.f32.mrf.mxu0
      %v2791 = vadd.f32 0.0, %v2790
      %v2792 = vpop.f32.mrf.mxu0
      %v2793 = vadd.f32 0.0, %v2792
      %2794 = vmatmul.bf16.gmra.mxu0 %v2430
      %v2795 = vpop.f32.mrf.mxu0
      %v2796 = vadd.f32 0.0, %v2795
      %v2797 = vpop.f32.mrf.mxu0
      %v2798 = vadd.f32 0.0, %v2797
      %2799 = vmatmul.bf16.gmra.mxu0 %v2433
      %v2800 = vpop.f32.mrf.mxu0
      %v2801 = vadd.f32 0.0, %v2800
      %v2802 = vpop.f32.mrf.mxu0
      %v2803 = vadd.f32 0.0, %v2802
      %2804 = vmatmul.bf16.gmra.mxu0 %v2436
      %v2805 = vpop.f32.mrf.mxu0
      %v2806 = vadd.f32 0.0, %v2805
      %v2807 = vpop.f32.mrf.mxu0
      %v2808 = vadd.f32 0.0, %v2807
      %2809 = vmatmul.bf16.gmra.mxu0 %v2439
      %v2810 = vpop.f32.mrf.mxu0
      %v2811 = vadd.f32 0.0, %v2810
      %v2812 = vpop.f32.mrf.mxu0
      %v2813 = vadd.f32 0.0, %v2812
      %2814 = vmatmul.bf16.gmra.mxu0 %v2442
      %v2815 = vpop.f32.mrf.mxu0
      %v2816 = vadd.f32 0.0, %v2815
      %v2817 = vpop.f32.mrf.mxu0
      %v2818 = vadd.f32 0.0, %v2817
      %2819 = vmatmul.bf16.gmra.mxu0 %v2445
      %v2820 = vpop.f32.mrf.mxu0
      %v2821 = vadd.f32 0.0, %v2820
      %v2822 = vpop.f32.mrf.mxu0
      %v2823 = vadd.f32 0.0, %v2822
      %2824 = vdwg.mxu0
      %2825 = vmatpush.bf16.msra.mxu0 %v2670
      %2826 = vmatpush.bf16.msra.mxu0 %v2668
      %2827 = vmatpush.bf16.msra.mxu0 %v2666
      %2828 = vmatpush.bf16.msra.mxu0 %v2664
      %2829 = vmatpush.bf16.msra.mxu0 %v2662
      %2830 = vmatpush.bf16.msra.mxu0 %v2660
      %2831 = vmatpush.bf16.msra.mxu0 %v2658
      %2832 = vmatpush.bf16.msra.mxu0 %v2656
      %2833 = vmatmul.bf16.gmra.mxu0 %v2401
      %v2834 = vpop.f32.mrf.mxu0
      %v2835 = vadd.f32 %v2746, %v2834
      %v2836 = vpop.f32.mrf.mxu0
      %v2837 = vadd.f32 %v2748, %v2836
      %2838 = vmatmul.bf16.gmra.mxu0 %v2404
      %v2839 = vpop.f32.mrf.mxu0
      %v2840 = vadd.f32 %v2751, %v2839
      %v2841 = vpop.f32.mrf.mxu0
      %v2842 = vadd.f32 %v2753, %v2841
      %2843 = vmatmul.bf16.gmra.mxu0 %v2407
      %v2844 = vpop.f32.mrf.mxu0
      %v2845 = vadd.f32 %v2756, %v2844
      %v2846 = vpop.f32.mrf.mxu0
      %v2847 = vadd.f32 %v2758, %v2846
      %2848 = vmatmul.bf16.gmra.mxu0 %v2410
      %v2849 = vpop.f32.mrf.mxu0
      %v2850 = vadd.f32 %v2761, %v2849
      %v2851 = vpop.f32.mrf.mxu0
      %v2852 = vadd.f32 %v2763, %v2851
      %2853 = vmatmul.bf16.gmra.mxu0 %v2413
      %v2854 = vpop.f32.mrf.mxu0
      %v2855 = vadd.f32 %v2766, %v2854
      %v2856 = vpop.f32.mrf.mxu0
      %v2857 = vadd.f32 %v2768, %v2856
      %2858 = vmatmul.bf16.gmra.mxu0 %v2416
      %v2859 = vpop.f32.mrf.mxu0
      %v2860 = vadd.f32 %v2771, %v2859
      %v2861 = vpop.f32.mrf.mxu0
      %v2862 = vadd.f32 %v2773, %v2861
      %2863 = vmatmul.bf16.gmra.mxu0 %v2419
      %v2864 = vpop.f32.mrf.mxu0
      %v2865 = vadd.f32 %v2776, %v2864
      %v2866 = vpop.f32.mrf.mxu0
      %v2867 = vadd.f32 %v2778, %v2866
      %2868 = vmatmul.bf16.gmra.mxu0 %v2422
      %v2869 = vpop.f32.mrf.mxu0
      %v2870 = vadd.f32 %v2781, %v2869
      %v2871 = vpop.f32.mrf.mxu0
      %v2872 = vadd.f32 %v2783, %v2871
      %2873 = vmatmul.bf16.gmra.mxu0 %v2425
      %v2874 = vpop.f32.mrf.mxu0
      %v2875 = vadd.f32 %v2786, %v2874
      %v2876 = vpop.f32.mrf.mxu0
      %v2877 = vadd.f32 %v2788, %v2876
      %2878 = vmatmul.bf16.gmra.mxu0 %v2428
      %v2879 = vpop.f32.mrf.mxu0
      %v2880 = vadd.f32 %v2791, %v2879
      %v2881 = vpop.f32.mrf.mxu0
      %v2882 = vadd.f32 %v2793, %v2881
      %2883 = vmatmul.bf16.gmra.mxu0 %v2431
      %v2884 = vpop.f32.mrf.mxu0
      %v2885 = vadd.f32 %v2796, %v2884
      %v2886 = vpop.f32.mrf.mxu0
      %v2887 = vadd.f32 %v2798, %v2886
      %2888 = vmatmul.bf16.gmra.mxu0 %v2434
      %v2889 = vpop.f32.mrf.mxu0
      %v2890 = vadd.f32 %v2801, %v2889
      %v2891 = vpop.f32.mrf.mxu0
      %v2892 = vadd.f32 %v2803, %v2891
      %2893 = vmatmul.bf16.gmra.mxu0 %v2437
      %v2894 = vpop.f32.mrf.mxu0
      %v2895 = vadd.f32 %v2806, %v2894
      %v2896 = vpop.f32.mrf.mxu0
      %v2897 = vadd.f32 %v2808, %v2896
      %2898 = vmatmul.bf16.gmra.mxu0 %v2440
      %v2899 = vpop.f32.mrf.mxu0
      %v2900 = vadd.f32 %v2811, %v2899
      %v2901 = vpop.f32.mrf.mxu0
      %v2902 = vadd.f32 %v2813, %v2901
      %2903 = vmatmul.bf16.gmra.mxu0 %v2443
      %v2904 = vpop.f32.mrf.mxu0
      %v2905 = vadd.f32 %v2816, %v2904
      %v2906 = vpop.f32.mrf.mxu0
      %v2907 = vadd.f32 %v2818, %v2906
      %2908 = vmatmul.bf16.gmra.mxu0 %v2446
      %v2909 = vpop.f32.mrf.mxu0
      %v2910 = vadd.f32 %v2821, %v2909
      %v2911 = vpop.f32.mrf.mxu0
      %v2912 = vadd.f32 %v2823, %v2911
      %2913 = vdwg.mxu0
      %2914 = vmatpush.bf16.msra.mxu0 %v2686
      %2915 = vmatpush.bf16.msra.mxu0 %v2684
      %2916 = vmatpush.bf16.msra.mxu0 %v2682
      %2917 = vmatpush.bf16.msra.mxu0 %v2680
      %2918 = vmatpush.bf16.msra.mxu0 %v2678
      %2919 = vmatpush.bf16.msra.mxu0 %v2676
      %2920 = vmatpush.bf16.msra.mxu0 %v2674
      %2921 = vmatpush.bf16.msra.mxu0 %v2672
      %2922 = vmatmul.bf16.gmra.mxu0 %v2402
      %v2923 = vpop.f32.mrf.mxu0
      %v2924 = vadd.f32 %v2835, %v2923
      %v2925 = vpop.f32.mrf.mxu0
      %v2926 = vadd.f32 %v2837, %v2925
      %2927 = vmatmul.bf16.gmra.mxu0 %v2405
      %v2928 = vpop.f32.mrf.mxu0
      %v2929 = vadd.f32 %v2840, %v2928
      %v2930 = vpop.f32.mrf.mxu0
      %v2931 = vadd.f32 %v2842, %v2930
      %2932 = vmatmul.bf16.gmra.mxu0 %v2408
      %v2933 = vpop.f32.mrf.mxu0
      %v2934 = vadd.f32 %v2845, %v2933
      %v2935 = vpop.f32.mrf.mxu0
      %v2936 = vadd.f32 %v2847, %v2935
      %2937 = vmatmul.bf16.gmra.mxu0 %v2411
      %v2938 = vpop.f32.mrf.mxu0
      %v2939 = vadd.f32 %v2850, %v2938
      %v2940 = vpop.f32.mrf.mxu0
      %v2941 = vadd.f32 %v2852, %v2940
      %2942 = vmatmul.bf16.gmra.mxu0 %v2414
      %v2943 = vpop.f32.mrf.mxu0
      %v2944 = vadd.f32 %v2855, %v2943
      %v2945 = vpop.f32.mrf.mxu0
      %v2946 = vadd.f32 %v2857, %v2945
      %2947 = vmatmul.bf16.gmra.mxu0 %v2417
      %v2948 = vpop.f32.mrf.mxu0
      %v2949 = vadd.f32 %v2860, %v2948
      %v2950 = vpop.f32.mrf.mxu0
      %v2951 = vadd.f32 %v2862, %v2950
      %2952 = vmatmul.bf16.gmra.mxu0 %v2420
      %v2953 = vpop.f32.mrf.mxu0
      %v2954 = vadd.f32 %v2865, %v2953
      %v2955 = vpop.f32.mrf.mxu0
      %v2956 = vadd.f32 %v2867, %v2955
      %2957 = vmatmul.bf16.gmra.mxu0 %v2423
      %v2958 = vpop.f32.mrf.mxu0
      %v2959 = vadd.f32 %v2870, %v2958
      %v2960 = vpop.f32.mrf.mxu0
      %v2961 = vadd.f32 %v2872, %v2960
      %2962 = vmatmul.bf16.gmra.mxu0 %v2426
      %v2963 = vpop.f32.mrf.mxu0
      %v2964 = vadd.f32 %v2875, %v2963
      %v2965 = vpop.f32.mrf.mxu0
      %v2966 = vadd.f32 %v2877, %v2965
      %2967 = vmatmul.bf16.gmra.mxu0 %v2429
      %v2968 = vpop.f32.mrf.mxu0
      %v2969 = vadd.f32 %v2880, %v2968
      %v2970 = vpop.f32.mrf.mxu0
      %v2971 = vadd.f32 %v2882, %v2970
      %2972 = vmatmul.bf16.gmra.mxu0 %v2432
      %v2973 = vpop.f32.mrf.mxu0
      %v2974 = vadd.f32 %v2885, %v2973
      %v2975 = vpop.f32.mrf.mxu0
      %v2976 = vadd.f32 %v2887, %v2975
      %2977 = vmatmul.bf16.gmra.mxu0 %v2435
      %v2978 = vpop.f32.mrf.mxu0
      %v2979 = vadd.f32 %v2890, %v2978
      %v2980 = vpop.f32.mrf.mxu0
      %v2981 = vadd.f32 %v2892, %v2980
      %2982 = vmatmul.bf16.gmra.mxu0 %v2438
      %v2983 = vpop.f32.mrf.mxu0
      %v2984 = vadd.f32 %v2895, %v2983
      %v2985 = vpop.f32.mrf.mxu0
      %v2986 = vadd.f32 %v2897, %v2985
      %2987 = vmatmul.bf16.gmra.mxu0 %v2441
      %v2988 = vpop.f32.mrf.mxu0
      %v2989 = vadd.f32 %v2900, %v2988
      %v2990 = vpop.f32.mrf.mxu0
      %v2991 = vadd.f32 %v2902, %v2990
      %2992 = vmatmul.bf16.gmra.mxu0 %v2444
      %v2993 = vpop.f32.mrf.mxu0
      %v2994 = vadd.f32 %v2905, %v2993
      %v2995 = vpop.f32.mrf.mxu0
      %v2996 = vadd.f32 %v2907, %v2995
      %2997 = vmatmul.bf16.gmra.mxu0 %v2447
      %v2998 = vpop.f32.mrf.mxu0
      %v2999 = vadd.f32 %v2910, %v2998
      %v3000 = vpop.f32.mrf.mxu0
      %v3001 = vadd.f32 %v2912, %v3000
      %3002 = vdwg.mxu0
      %3003 = vmatpush.bf16.msra.mxu0 %v2655
      %3004 = vmatpush.bf16.msra.mxu0 %v2653
      %3005 = vmatpush.bf16.msra.mxu0 %v2651
      %3006 = vmatpush.bf16.msra.mxu0 %v2649
      %3007 = vmatpush.bf16.msra.mxu0 %v2647
      %3008 = vmatpush.bf16.msra.mxu0 %v2645
      %3009 = vmatpush.bf16.msra.mxu0 %v2643
      %3010 = vmatpush.bf16.msra.mxu0 %v2641
      %3011 = vmatmul.bf16.gmra.mxu0 %v2400
      %v3012 = vpop.f32.mrf.mxu0
      %v3013 = vadd.f32 0.0, %v3012
      %v3014 = vpop.f32.mrf.mxu0
      %v3015 = vadd.f32 0.0, %v3014
      %3016 = vmatmul.bf16.gmra.mxu0 %v2403
      %v3017 = vpop.f32.mrf.mxu0
      %v3018 = vadd.f32 0.0, %v3017
      %v3019 = vpop.f32.mrf.mxu0
      %v3020 = vadd.f32 0.0, %v3019
      %3021 = vmatmul.bf16.gmra.mxu0 %v2406
      %v3022 = vpop.f32.mrf.mxu0
      %v3023 = vadd.f32 0.0, %v3022
      %v3024 = vpop.f32.mrf.mxu0
      %v3025 = vadd.f32 0.0, %v3024
      %3026 = vmatmul.bf16.gmra.mxu0 %v2409
      %v3027 = vpop.f32.mrf.mxu0
      %v3028 = vadd.f32 0.0, %v3027
      %v3029 = vpop.f32.mrf.mxu0
      %v3030 = vadd.f32 0.0, %v3029
      %3031 = vmatmul.bf16.gmra.mxu0 %v2412
      %v3032 = vpop.f32.mrf.mxu0
      %v3033 = vadd.f32 0.0, %v3032
      %v3034 = vpop.f32.mrf.mxu0
      %v3035 = vadd.f32 0.0, %v3034
      %3036 = vmatmul.bf16.gmra.mxu0 %v2415
      %v3037 = vpop.f32.mrf.mxu0
      %v3038 = vadd.f32 0.0, %v3037
      %v3039 = vpop.f32.mrf.mxu0
      %v3040 = vadd.f32 0.0, %v3039
      %3041 = vmatmul.bf16.gmra.mxu0 %v2418
      %v3042 = vpop.f32.mrf.mxu0
      %v3043 = vadd.f32 0.0, %v3042
      %v3044 = vpop.f32.mrf.mxu0
      %v3045 = vadd.f32 0.0, %v3044
      %3046 = vmatmul.bf16.gmra.mxu0 %v2421
      %v3047 = vpop.f32.mrf.mxu0
      %v3048 = vadd.f32 0.0, %v3047
      %v3049 = vpop.f32.mrf.mxu0
      %v3050 = vadd.f32 0.0, %v3049
      %3051 = vmatmul.bf16.gmra.mxu0 %v2424
      %v3052 = vpop.f32.mrf.mxu0
      %v3053 = vadd.f32 0.0, %v3052
      %v3054 = vpop.f32.mrf.mxu0
      %v3055 = vadd.f32 0.0, %v3054
      %3056 = vmatmul.bf16.gmra.mxu0 %v2427
      %v3057 = vpop.f32.mrf.mxu0
      %v3058 = vadd.f32 0.0, %v3057
      %v3059 = vpop.f32.mrf.mxu0
      %v3060 = vadd.f32 0.0, %v3059
      %3061 = vmatmul.bf16.gmra.mxu0 %v2430
      %v3062 = vpop.f32.mrf.mxu0
      %v3063 = vadd.f32 0.0, %v3062
      %v3064 = vpop.f32.mrf.mxu0
      %v3065 = vadd.f32 0.0, %v3064
      %3066 = vmatmul.bf16.gmra.mxu0 %v2433
      %v3067 = vpop.f32.mrf.mxu0
      %v3068 = vadd.f32 0.0, %v3067
      %v3069 = vpop.f32.mrf.mxu0
      %v3070 = vadd.f32 0.0, %v3069
      %3071 = vmatmul.bf16.gmra.mxu0 %v2436
      %v3072 = vpop.f32.mrf.mxu0
      %v3073 = vadd.f32 0.0, %v3072
      %v3074 = vpop.f32.mrf.mxu0
      %v3075 = vadd.f32 0.0, %v3074
      %3076 = vmatmul.bf16.gmra.mxu0 %v2439
      %v3077 = vpop.f32.mrf.mxu0
      %v3078 = vadd.f32 0.0, %v3077
      %v3079 = vpop.f32.mrf.mxu0
      %v3080 = vadd.f32 0.0, %v3079
      %3081 = vmatmul.bf16.gmra.mxu0 %v2442
      %v3082 = vpop.f32.mrf.mxu0
      %v3083 = vadd.f32 0.0, %v3082
      %v3084 = vpop.f32.mrf.mxu0
      %v3085 = vadd.f32 0.0, %v3084
      %3086 = vmatmul.bf16.gmra.mxu0 %v2445
      %v3087 = vpop.f32.mrf.mxu0
      %v3088 = vadd.f32 0.0, %v3087
      %v3089 = vpop.f32.mrf.mxu0
      %v3090 = vadd.f32 0.0, %v3089
      %3091 = vdwg.mxu0
      %3092 = vmatpush.bf16.msra.mxu0 %v2671
      %3093 = vmatpush.bf16.msra.mxu0 %v2669
      %3094 = vmatpush.bf16.msra.mxu0 %v2667
      %3095 = vmatpush.bf16.msra.mxu0 %v2665
      %3096 = vmatpush.bf16.msra.mxu0 %v2663
      %3097 = vmatpush.bf16.msra.mxu0 %v2661
      %3098 = vmatpush.bf16.msra.mxu0 %v2659
      %3099 = vmatpush.bf16.msra.mxu0 %v2657
      %3100 = vmatmul.bf16.gmra.mxu0 %v2401
      %v3101 = vpop.f32.mrf.mxu0
      %v3102 = vadd.f32 %v3013, %v3101
      %v3103 = vpop.f32.mrf.mxu0
      %v3104 = vadd.f32 %v3015, %v3103
      %3105 = vmatmul.bf16.gmra.mxu0 %v2404
      %v3106 = vpop.f32.mrf.mxu0
      %v3107 = vadd.f32 %v3018, %v3106
      %v3108 = vpop.f32.mrf.mxu0
      %v3109 = vadd.f32 %v3020, %v3108
      %3110 = vmatmul.bf16.gmra.mxu0 %v2407
      %v3111 = vpop.f32.mrf.mxu0
      %v3112 = vadd.f32 %v3023, %v3111
      %v3113 = vpop.f32.mrf.mxu0
      %v3114 = vadd.f32 %v3025, %v3113
      %3115 = vmatmul.bf16.gmra.mxu0 %v2410
      %v3116 = vpop.f32.mrf.mxu0
      %v3117 = vadd.f32 %v3028, %v3116
      %v3118 = vpop.f32.mrf.mxu0
      %v3119 = vadd.f32 %v3030, %v3118
      %3120 = vmatmul.bf16.gmra.mxu0 %v2413
      %v3121 = vpop.f32.mrf.mxu0
      %v3122 = vadd.f32 %v3033, %v3121
      %v3123 = vpop.f32.mrf.mxu0
      %v3124 = vadd.f32 %v3035, %v3123
      %3125 = vmatmul.bf16.gmra.mxu0 %v2416
      %v3126 = vpop.f32.mrf.mxu0
      %v3127 = vadd.f32 %v3038, %v3126
      %v3128 = vpop.f32.mrf.mxu0
      %v3129 = vadd.f32 %v3040, %v3128
      %3130 = vmatmul.bf16.gmra.mxu0 %v2419
      %v3131 = vpop.f32.mrf.mxu0
      %v3132 = vadd.f32 %v3043, %v3131
      %v3133 = vpop.f32.mrf.mxu0
      %v3134 = vadd.f32 %v3045, %v3133
      %3135 = vmatmul.bf16.gmra.mxu0 %v2422
      %v3136 = vpop.f32.mrf.mxu0
      %v3137 = vadd.f32 %v3048, %v3136
      %v3138 = vpop.f32.mrf.mxu0
      %v3139 = vadd.f32 %v3050, %v3138
      %3140 = vmatmul.bf16.gmra.mxu0 %v2425
      %v3141 = vpop.f32.mrf.mxu0
      %v3142 = vadd.f32 %v3053, %v3141
      %v3143 = vpop.f32.mrf.mxu0
      %v3144 = vadd.f32 %v3055, %v3143
      %3145 = vmatmul.bf16.gmra.mxu0 %v2428
      %v3146 = vpop.f32.mrf.mxu0
      %v3147 = vadd.f32 %v3058, %v3146
      %v3148 = vpop.f32.mrf.mxu0
      %v3149 = vadd.f32 %v3060, %v3148
      %3150 = vmatmul.bf16.gmra.mxu0 %v2431
      %v3151 = vpop.f32.mrf.mxu0
      %v3152 = vadd.f32 %v3063, %v3151
      %v3153 = vpop.f32.mrf.mxu0
      %v3154 = vadd.f32 %v3065, %v3153
      %3155 = vmatmul.bf16.gmra.mxu0 %v2434
      %v3156 = vpop.f32.mrf.mxu0
      %v3157 = vadd.f32 %v3068, %v3156
      %v3158 = vpop.f32.mrf.mxu0
      %v3159 = vadd.f32 %v3070, %v3158
      %3160 = vmatmul.bf16.gmra.mxu0 %v2437
      %v3161 = vpop.f32.mrf.mxu0
      %v3162 = vadd.f32 %v3073, %v3161
      %v3163 = vpop.f32.mrf.mxu0
      %v3164 = vadd.f32 %v3075, %v3163
      %3165 = vmatmul.bf16.gmra.mxu0 %v2440
      %v3166 = vpop.f32.mrf.mxu0
      %v3167 = vadd.f32 %v3078, %v3166
      %v3168 = vpop.f32.mrf.mxu0
      %v3169 = vadd.f32 %v3080, %v3168
      %3170 = vmatmul.bf16.gmra.mxu0 %v2443
      %v3171 = vpop.f32.mrf.mxu0
      %v3172 = vadd.f32 %v3083, %v3171
      %v3173 = vpop.f32.mrf.mxu0
      %v3174 = vadd.f32 %v3085, %v3173
      %3175 = vmatmul.bf16.gmra.mxu0 %v2446
      %v3176 = vpop.f32.mrf.mxu0
      %v3177 = vadd.f32 %v3088, %v3176
      %v3178 = vpop.f32.mrf.mxu0
      %v3179 = vadd.f32 %v3090, %v3178
      %3180 = vdwg.mxu0
      %3181 = vmatpush.bf16.msra.mxu0 %v2687
      %3182 = vmatpush.bf16.msra.mxu0 %v2685
      %3183 = vmatpush.bf16.msra.mxu0 %v2683
      %3184 = vmatpush.bf16.msra.mxu0 %v2681
      %3185 = vmatpush.bf16.msra.mxu0 %v2679
      %3186 = vmatpush.bf16.msra.mxu0 %v2677
      %3187 = vmatpush.bf16.msra.mxu0 %v2675
      %3188 = vmatpush.bf16.msra.mxu0 %v2673
      %3189 = vmatmul.bf16.gmra.mxu0 %v2402
      %v3190 = vpop.f32.mrf.mxu0
      %v3191 = vadd.f32 %v3102, %v3190
      %v3192 = vpop.f32.mrf.mxu0
      %v3193 = vadd.f32 %v3104, %v3192
      %3194 = vmatmul.bf16.gmra.mxu0 %v2405
      %v3195 = vpop.f32.mrf.mxu0
      %v3196 = vadd.f32 %v3107, %v3195
      %v3197 = vpop.f32.mrf.mxu0
      %v3198 = vadd.f32 %v3109, %v3197
      %3199 = vmatmul.bf16.gmra.mxu0 %v2408
      %v3200 = vpop.f32.mrf.mxu0
      %v3201 = vadd.f32 %v3112, %v3200
      %v3202 = vpop.f32.mrf.mxu0
      %v3203 = vadd.f32 %v3114, %v3202
      %3204 = vmatmul.bf16.gmra.mxu0 %v2411
      %v3205 = vpop.f32.mrf.mxu0
      %v3206 = vadd.f32 %v3117, %v3205
      %v3207 = vpop.f32.mrf.mxu0
      %v3208 = vadd.f32 %v3119, %v3207
      %3209 = vmatmul.bf16.gmra.mxu0 %v2414
      %v3210 = vpop.f32.mrf.mxu0
      %v3211 = vadd.f32 %v3122, %v3210
      %v3212 = vpop.f32.mrf.mxu0
      %v3213 = vadd.f32 %v3124, %v3212
      %3214 = vmatmul.bf16.gmra.mxu0 %v2417
      %v3215 = vpop.f32.mrf.mxu0
      %v3216 = vadd.f32 %v3127, %v3215
      %v3217 = vpop.f32.mrf.mxu0
      %v3218 = vadd.f32 %v3129, %v3217
      %3219 = vmatmul.bf16.gmra.mxu0 %v2420
      %v3220 = vpop.f32.mrf.mxu0
      %v3221 = vadd.f32 %v3132, %v3220
      %v3222 = vpop.f32.mrf.mxu0
      %v3223 = vadd.f32 %v3134, %v3222
      %3224 = vmatmul.bf16.gmra.mxu0 %v2423
      %v3225 = vpop.f32.mrf.mxu0
      %v3226 = vadd.f32 %v3137, %v3225
      %v3227 = vpop.f32.mrf.mxu0
      %v3228 = vadd.f32 %v3139, %v3227
      %3229 = vmatmul.bf16.gmra.mxu0 %v2426
      %v3230 = vpop.f32.mrf.mxu0
      %v3231 = vadd.f32 %v3142, %v3230
      %v3232 = vpop.f32.mrf.mxu0
      %v3233 = vadd.f32 %v3144, %v3232
      %3234 = vmatmul.bf16.gmra.mxu0 %v2429
      %v3235 = vpop.f32.mrf.mxu0
      %v3236 = vadd.f32 %v3147, %v3235
      %v3237 = vpop.f32.mrf.mxu0
      %v3238 = vadd.f32 %v3149, %v3237
      %3239 = vmatmul.bf16.gmra.mxu0 %v2432
      %v3240 = vpop.f32.mrf.mxu0
      %v3241 = vadd.f32 %v3152, %v3240
      %v3242 = vpop.f32.mrf.mxu0
      %v3243 = vadd.f32 %v3154, %v3242
      %3244 = vmatmul.bf16.gmra.mxu0 %v2435
      %v3245 = vpop.f32.mrf.mxu0
      %v3246 = vadd.f32 %v3157, %v3245
      %v3247 = vpop.f32.mrf.mxu0
      %v3248 = vadd.f32 %v3159, %v3247
      %3249 = vmatmul.bf16.gmra.mxu0 %v2438
      %v3250 = vpop.f32.mrf.mxu0
      %v3251 = vadd.f32 %v3162, %v3250
      %v3252 = vpop.f32.mrf.mxu0
      %v3253 = vadd.f32 %v3164, %v3252
      %3254 = vmatmul.bf16.gmra.mxu0 %v2441
      %v3255 = vpop.f32.mrf.mxu0
      %v3256 = vadd.f32 %v3167, %v3255
      %v3257 = vpop.f32.mrf.mxu0
      %v3258 = vadd.f32 %v3169, %v3257
      %3259 = vmatmul.bf16.gmra.mxu0 %v2444
      %v3260 = vpop.f32.mrf.mxu0
      %v3261 = vadd.f32 %v3172, %v3260
      %v3262 = vpop.f32.mrf.mxu0
      %v3263 = vadd.f32 %v3174, %v3262
      %3264 = vmatmul.bf16.gmra.mxu0 %v2447
      %v3265 = vpop.f32.mrf.mxu0
      %v3266 = vadd.f32 %v3177, %v3265
      %v3267 = vpop.f32.mrf.mxu0
      %v3268 = vadd.f32 %v3179, %v3267
      %3269 = vdwg.mxu0
      %v3270 = vld [vmem:[%s5] ss:$4 sm:$0x3]
      %v3272 = vperm.slane %v3270, 0
      %v3273 = vperm.slane %v3270, 1
      %v3276 = vmul.f32 %v2924, %v3272
      %v3277 = vmul.f32 %v3191, %v3273
      %v3278 = vmul.f32 %v2926, %v3272
      %v3279 = vmul.f32 %v3193, %v3273
      %v3280 = vmul.f32 %v2929, %v3272
      %v3281 = vmul.f32 %v3196, %v3273
      %v3282 = vmul.f32 %v2931, %v3272
      %v3283 = vmul.f32 %v3198, %v3273
      %v3284 = vmul.f32 %v2934, %v3272
      %v3285 = vmul.f32 %v3201, %v3273
      %v3286 = vmul.f32 %v2936, %v3272
      %v3287 = vmul.f32 %v3203, %v3273
      %v3288 = vmul.f32 %v2939, %v3272
      %v3289 = vmul.f32 %v3206, %v3273
      %v3290 = vmul.f32 %v2941, %v3272
      %v3291 = vmul.f32 %v3208, %v3273
      %v3292 = vmul.f32 %v2944, %v3272
      %v3293 = vmul.f32 %v3211, %v3273
      %v3294 = vmul.f32 %v2946, %v3272
      %v3295 = vmul.f32 %v3213, %v3273
      %v3296 = vmul.f32 %v2949, %v3272
      %v3297 = vmul.f32 %v3216, %v3273
      %v3298 = vmul.f32 %v2951, %v3272
      %v3299 = vmul.f32 %v3218, %v3273
      %v3300 = vmul.f32 %v2954, %v3272
      %v3301 = vmul.f32 %v3221, %v3273
      %v3302 = vmul.f32 %v2956, %v3272
      %v3303 = vmul.f32 %v3223, %v3273
      %v3304 = vmul.f32 %v2959, %v3272
      %v3305 = vmul.f32 %v3226, %v3273
      %v3306 = vmul.f32 %v2961, %v3272
      %v3307 = vmul.f32 %v3228, %v3273
      %v3308 = vmul.f32 %v2964, %v3272
      %v3309 = vmul.f32 %v3231, %v3273
      %v3310 = vmul.f32 %v2966, %v3272
      %v3311 = vmul.f32 %v3233, %v3273
      %v3312 = vmul.f32 %v2969, %v3272
      %v3313 = vmul.f32 %v3236, %v3273
      %v3314 = vmul.f32 %v2971, %v3272
      %v3315 = vmul.f32 %v3238, %v3273
      %v3316 = vmul.f32 %v2974, %v3272
      %v3317 = vmul.f32 %v3241, %v3273
      %v3318 = vmul.f32 %v2976, %v3272
      %v3319 = vmul.f32 %v3243, %v3273
      %v3320 = vmul.f32 %v2979, %v3272
      %v3321 = vmul.f32 %v3246, %v3273
      %v3322 = vmul.f32 %v2981, %v3272
      %v3323 = vmul.f32 %v3248, %v3273
      %v3324 = vmul.f32 %v2984, %v3272
      %v3325 = vmul.f32 %v3251, %v3273
      %v3326 = vmul.f32 %v2986, %v3272
      %v3327 = vmul.f32 %v3253, %v3273
      %v3328 = vmul.f32 %v2989, %v3272
      %v3329 = vmul.f32 %v3256, %v3273
      %v3330 = vmul.f32 %v2991, %v3272
      %v3331 = vmul.f32 %v3258, %v3273
      %v3332 = vmul.f32 %v2994, %v3272
      %v3333 = vmul.f32 %v3261, %v3273
      %v3334 = vmul.f32 %v2996, %v3272
      %v3335 = vmul.f32 %v3263, %v3273
      %v3336 = vmul.f32 %v2999, %v3272
      %v3337 = vmul.f32 %v3266, %v3273
      %v3338 = vmul.f32 %v3001, %v3272
      %v3339 = vmul.f32 %v3268, %v3273
      %s3340 = scalar_lea.vmem %s5, 1
      %v3341 = vld [vmem:[%s3340] ss:$4 sm:$0x3]
      %v3343 = vperm.slane %v3341, 0
      %v3344 = vperm.slane %v3341, 1
      %v3347 = vadd.f32 %v3276, %v3343
      %v3348 = vadd.f32 %v3277, %v3344
      %v3349 = vadd.f32 %v3278, %v3343
      %v3350 = vadd.f32 %v3279, %v3344
      %v3351 = vadd.f32 %v3280, %v3343
      %v3352 = vadd.f32 %v3281, %v3344
      %v3353 = vadd.f32 %v3282, %v3343
      %v3354 = vadd.f32 %v3283, %v3344
      %v3355 = vadd.f32 %v3284, %v3343
      %v3356 = vadd.f32 %v3285, %v3344
      %v3357 = vadd.f32 %v3286, %v3343
      %v3358 = vadd.f32 %v3287, %v3344
      %v3359 = vadd.f32 %v3288, %v3343
      %v3360 = vadd.f32 %v3289, %v3344
      %v3361 = vadd.f32 %v3290, %v3343
      %v3362 = vadd.f32 %v3291, %v3344
      %v3363 = vadd.f32 %v3292, %v3343
      %v3364 = vadd.f32 %v3293, %v3344
      %v3365 = vadd.f32 %v3294, %v3343
      %v3366 = vadd.f32 %v3295, %v3344
      %v3367 = vadd.f32 %v3296, %v3343
      %v3368 = vadd.f32 %v3297, %v3344
      %v3369 = vadd.f32 %v3298, %v3343
      %v3370 = vadd.f32 %v3299, %v3344
      %v3371 = vadd.f32 %v3300, %v3343
      %v3372 = vadd.f32 %v3301, %v3344
      %v3373 = vadd.f32 %v3302, %v3343
      %v3374 = vadd.f32 %v3303, %v3344
      %v3375 = vadd.f32 %v3304, %v3343
      %v3376 = vadd.f32 %v3305, %v3344
      %v3377 = vadd.f32 %v3306, %v3343
      %v3378 = vadd.f32 %v3307, %v3344
      %v3379 = vadd.f32 %v3308, %v3343
      %v3380 = vadd.f32 %v3309, %v3344
      %v3381 = vadd.f32 %v3310, %v3343
      %v3382 = vadd.f32 %v3311, %v3344
      %v3383 = vadd.f32 %v3312, %v3343
      %v3384 = vadd.f32 %v3313, %v3344
      %v3385 = vadd.f32 %v3314, %v3343
      %v3386 = vadd.f32 %v3315, %v3344
      %v3387 = vadd.f32 %v3316, %v3343
      %v3388 = vadd.f32 %v3317, %v3344
      %v3389 = vadd.f32 %v3318, %v3343
      %v3390 = vadd.f32 %v3319, %v3344
      %v3391 = vadd.f32 %v3320, %v3343
      %v3392 = vadd.f32 %v3321, %v3344
      %v3393 = vadd.f32 %v3322, %v3343
      %v3394 = vadd.f32 %v3323, %v3344
      %v3395 = vadd.f32 %v3324, %v3343
      %v3396 = vadd.f32 %v3325, %v3344
      %v3397 = vadd.f32 %v3326, %v3343
      %v3398 = vadd.f32 %v3327, %v3344
      %v3399 = vadd.f32 %v3328, %v3343
      %v3400 = vadd.f32 %v3329, %v3344
      %v3401 = vadd.f32 %v3330, %v3343
      %v3402 = vadd.f32 %v3331, %v3344
      %v3403 = vadd.f32 %v3332, %v3343
      %v3404 = vadd.f32 %v3333, %v3344
      %v3405 = vadd.f32 %v3334, %v3343
      %v3406 = vadd.f32 %v3335, %v3344
      %v3407 = vadd.f32 %v3336, %v3343
      %v3408 = vadd.f32 %v3337, %v3344
      %v3409 = vadd.f32 %v3338, %v3343
      %v3410 = vadd.f32 %v3339, %v3344
      %v3411 = vmax.f32 %v3347, 0.0
      %v3412 = vmax.f32 %v3348, 0.0
      %v3413 = vmax.f32 %v3349, 0.0
      %v3414 = vmax.f32 %v3350, 0.0
      %v3415 = vmax.f32 %v3351, 0.0
      %v3416 = vmax.f32 %v3352, 0.0
      %v3417 = vmax.f32 %v3353, 0.0
      %v3418 = vmax.f32 %v3354, 0.0
      %v3419 = vmax.f32 %v3355, 0.0
      %v3420 = vmax.f32 %v3356, 0.0
      %v3421 = vmax.f32 %v3357, 0.0
      %v3422 = vmax.f32 %v3358, 0.0
      %v3423 = vmax.f32 %v3359, 0.0
      %v3424 = vmax.f32 %v3360, 0.0
      %v3425 = vmax.f32 %v3361, 0.0
      %v3426 = vmax.f32 %v3362, 0.0
      %v3427 = vmax.f32 %v3363, 0.0
      %v3428 = vmax.f32 %v3364, 0.0
      %v3429 = vmax.f32 %v3365, 0.0
      %v3430 = vmax.f32 %v3366, 0.0
      %v3431 = vmax.f32 %v3367, 0.0
      %v3432 = vmax.f32 %v3368, 0.0
      %v3433 = vmax.f32 %v3369, 0.0
      %v3434 = vmax.f32 %v3370, 0.0
      %v3435 = vmax.f32 %v3371, 0.0
      %v3436 = vmax.f32 %v3372, 0.0
      %v3437 = vmax.f32 %v3373, 0.0
      %v3438 = vmax.f32 %v3374, 0.0
      %v3439 = vmax.f32 %v3375, 0.0
      %v3440 = vmax.f32 %v3376, 0.0
      %v3441 = vmax.f32 %v3377, 0.0
      %v3442 = vmax.f32 %v3378, 0.0
      %v3443 = vmax.f32 %v3379, 0.0
      %v3444 = vmax.f32 %v3380, 0.0
      %v3445 = vmax.f32 %v3381, 0.0
      %v3446 = vmax.f32 %v3382, 0.0
      %v3447 = vmax.f32 %v3383, 0.0
      %v3448 = vmax.f32 %v3384, 0.0
      %v3449 = vmax.f32 %v3385, 0.0
      %v3450 = vmax.f32 %v3386, 0.0
      %v3451 = vmax.f32 %v3387, 0.0
      %v3452 = vmax.f32 %v3388, 0.0
      %v3453 = vmax.f32 %v3389, 0.0
      %v3454 = vmax.f32 %v3390, 0.0
      %v3455 = vmax.f32 %v3391, 0.0
      %v3456 = vmax.f32 %v3392, 0.0
      %v3457 = vmax.f32 %v3393, 0.0
      %v3458 = vmax.f32 %v3394, 0.0
      %v3459 = vmax.f32 %v3395, 0.0
      %v3460 = vmax.f32 %v3396, 0.0
      %v3461 = vmax.f32 %v3397, 0.0
      %v3462 = vmax.f32 %v3398, 0.0
      %v3463 = vmax.f32 %v3399, 0.0
      %v3464 = vmax.f32 %v3400, 0.0
      %v3465 = vmax.f32 %v3401, 0.0
      %v3466 = vmax.f32 %v3402, 0.0
      %v3467 = vmax.f32 %v3403, 0.0
      %v3468 = vmax.f32 %v3404, 0.0
      %v3469 = vmax.f32 %v3405, 0.0
      %v3470 = vmax.f32 %v3406, 0.0
      %v3471 = vmax.f32 %v3407, 0.0
      %v3472 = vmax.f32 %v3408, 0.0
      %v3473 = vmax.f32 %v3409, 0.0
      %v3474 = vmax.f32 %v3410, 0.0
      %v3475 = vsel %vm574, %v3412, 0.0
      %v3476 = vsel %vm574, %v3414, 0.0
      %v3477 = vsel %vm574, %v3416, 0.0
      %v3478 = vsel %vm574, %v3418, 0.0
      %v3479 = vsel %vm574, %v3420, 0.0
      %v3480 = vsel %vm574, %v3422, 0.0
      %v3481 = vsel %vm574, %v3424, 0.0
      %v3482 = vsel %vm574, %v3426, 0.0
      %v3483 = vsel %vm574, %v3428, 0.0
      %v3484 = vsel %vm574, %v3430, 0.0
      %v3485 = vsel %vm574, %v3432, 0.0
      %v3486 = vsel %vm574, %v3434, 0.0
      %v3487 = vsel %vm574, %v3436, 0.0
      %v3488 = vsel %vm574, %v3438, 0.0
      %v3489 = vsel %vm574, %v3440, 0.0
      %v3490 = vsel %vm574, %v3442, 0.0
      %v3491 = vsel %vm574, %v3444, 0.0
      %v3492 = vsel %vm574, %v3446, 0.0
      %v3493 = vsel %vm574, %v3448, 0.0
      %v3494 = vsel %vm574, %v3450, 0.0
      %v3495 = vsel %vm574, %v3452, 0.0
      %v3496 = vsel %vm574, %v3454, 0.0
      %v3497 = vsel %vm574, %v3456, 0.0
      %v3498 = vsel %vm574, %v3458, 0.0
      %v3499 = vsel %vm574, %v3460, 0.0
      %v3500 = vsel %vm574, %v3462, 0.0
      %v3501 = vsel %vm574, %v3464, 0.0
      %v3502 = vsel %vm574, %v3466, 0.0
      %v3503 = vsel %vm574, %v3468, 0.0
      %v3504 = vsel %vm574, %v3470, 0.0
      %v3505 = vsel %vm574, %v3472, 0.0
      %v3506 = vsel %vm574, %v3474, 0.0
      %v3507 = vrot.slane %v3411, 7
      %v3508 = vrot.slane %v3475, 7
      %v3509 = vrot.slane %v3413, 7
      %v3510 = vrot.slane %v3476, 7
      %v3511 = vrot.slane %v3415, 7
      %v3512 = vrot.slane %v3477, 7
      %v3513 = vrot.slane %v3417, 7
      %v3514 = vrot.slane %v3478, 7
      %v3515 = vrot.slane %v3419, 7
      %v3516 = vrot.slane %v3479, 7
      %v3517 = vrot.slane %v3421, 7
      %v3518 = vrot.slane %v3480, 7
      %v3519 = vrot.slane %v3423, 7
      %v3520 = vrot.slane %v3481, 7
      %v3521 = vrot.slane %v3425, 7
      %v3522 = vrot.slane %v3482, 7
      %v3523 = vrot.slane %v3427, 7
      %v3524 = vrot.slane %v3483, 7
      %v3525 = vrot.slane %v3429, 7
      %v3526 = vrot.slane %v3484, 7
      %v3527 = vrot.slane %v3431, 7
      %v3528 = vrot.slane %v3485, 7
      %v3529 = vrot.slane %v3433, 7
      %v3530 = vrot.slane %v3486, 7
      %v3531 = vrot.slane %v3435, 7
      %v3532 = vrot.slane %v3487, 7
      %v3533 = vrot.slane %v3437, 7
      %v3534 = vrot.slane %v3488, 7
      %v3535 = vrot.slane %v3439, 7
      %v3536 = vrot.slane %v3489, 7
      %v3537 = vrot.slane %v3441, 7
      %v3538 = vrot.slane %v3490, 7
      %v3539 = vrot.slane %v3443, 7
      %v3540 = vrot.slane %v3491, 7
      %v3541 = vrot.slane %v3445, 7
      %v3542 = vrot.slane %v3492, 7
      %v3543 = vrot.slane %v3447, 7
      %v3544 = vrot.slane %v3493, 7
      %v3545 = vrot.slane %v3449, 7
      %v3546 = vrot.slane %v3494, 7
      %v3547 = vrot.slane %v3451, 7
      %v3548 = vrot.slane %v3495, 7
      %v3549 = vrot.slane %v3453, 7
      %v3550 = vrot.slane %v3496, 7
      %v3551 = vrot.slane %v3455, 7
      %v3552 = vrot.slane %v3497, 7
      %v3553 = vrot.slane %v3457, 7
      %v3554 = vrot.slane %v3498, 7
      %v3555 = vrot.slane %v3459, 7
      %v3556 = vrot.slane %v3499, 7
      %v3557 = vrot.slane %v3461, 7
      %v3558 = vrot.slane %v3500, 7
      %v3559 = vrot.slane %v3463, 7
      %v3560 = vrot.slane %v3501, 7
      %v3561 = vrot.slane %v3465, 7
      %v3562 = vrot.slane %v3502, 7
      %v3563 = vrot.slane %v3467, 7
      %v3564 = vrot.slane %v3503, 7
      %v3565 = vrot.slane %v3469, 7
      %v3566 = vrot.slane %v3504, 7
      %v3567 = vrot.slane %v3471, 7
      %v3568 = vrot.slane %v3505, 7
      %v3569 = vrot.slane %v3473, 7
      %v3570 = vrot.slane %v3506, 7
      %v3571 = vsel %vm2238, %v3567, %v3569
      %v3572 = vsel %vm2238, %v3568, %v3570
      %v3573 = vsel %vm2238, %v3565, %v3567
      %v3574 = vsel %vm2238, %v3566, %v3568
      %v3575 = vsel %vm2238, %v3563, %v3565
      %v3576 = vsel %vm2238, %v3564, %v3566
      %v3577 = vsel %vm2238, %v3561, %v3563
      %v3578 = vsel %vm2238, %v3562, %v3564
      %v3579 = vsel %vm2238, %v3559, %v3561
      %v3580 = vsel %vm2238, %v3560, %v3562
      %v3581 = vsel %vm2238, %v3557, %v3559
      %v3582 = vsel %vm2238, %v3558, %v3560
      %v3583 = vsel %vm2238, %v3555, %v3557
      %v3584 = vsel %vm2238, %v3556, %v3558
      %v3585 = vsel %vm2238, %v3553, %v3555
      %v3586 = vsel %vm2238, %v3554, %v3556
      %v3587 = vsel %vm2238, %v3551, %v3553
      %v3588 = vsel %vm2238, %v3552, %v3554
      %v3589 = vsel %vm2238, %v3549, %v3551
      %v3590 = vsel %vm2238, %v3550, %v3552
      %v3591 = vsel %vm2238, %v3547, %v3549
      %v3592 = vsel %vm2238, %v3548, %v3550
      %v3593 = vsel %vm2238, %v3545, %v3547
      %v3594 = vsel %vm2238, %v3546, %v3548
      %v3595 = vsel %vm2238, %v3543, %v3545
      %v3596 = vsel %vm2238, %v3544, %v3546
      %v3597 = vsel %vm2238, %v3541, %v3543
      %v3598 = vsel %vm2238, %v3542, %v3544
      %v3599 = vsel %vm2238, %v3539, %v3541
      %v3600 = vsel %vm2238, %v3540, %v3542
      %v3601 = vsel %vm2238, %v3537, %v3539
      %v3602 = vsel %vm2238, %v3538, %v3540
      %v3603 = vsel %vm2238, %v3535, %v3537
      %v3604 = vsel %vm2238, %v3536, %v3538
      %v3605 = vsel %vm2238, %v3533, %v3535
      %v3606 = vsel %vm2238, %v3534, %v3536
      %v3607 = vsel %vm2238, %v3531, %v3533
      %v3608 = vsel %vm2238, %v3532, %v3534
      %v3609 = vsel %vm2238, %v3529, %v3531
      %v3610 = vsel %vm2238, %v3530, %v3532
      %v3611 = vsel %vm2238, %v3527, %v3529
      %v3612 = vsel %vm2238, %v3528, %v3530
      %v3613 = vsel %vm2238, %v3525, %v3527
      %v3614 = vsel %vm2238, %v3526, %v3528
      %v3615 = vsel %vm2238, %v3523, %v3525
      %v3616 = vsel %vm2238, %v3524, %v3526
      %v3617 = vsel %vm2238, %v3521, %v3523
      %v3618 = vsel %vm2238, %v3522, %v3524
      %v3619 = vsel %vm2238, %v3519, %v3521
      %v3620 = vsel %vm2238, %v3520, %v3522
      %v3621 = vsel %vm2238, %v3517, %v3519
      %v3622 = vsel %vm2238, %v3518, %v3520
      %v3623 = vsel %vm2238, %v3515, %v3517
      %v3624 = vsel %vm2238, %v3516, %v3518
      %v3625 = vsel %vm2238, %v3513, %v3515
      %v3626 = vsel %vm2238, %v3514, %v3516
      %v3627 = vsel %vm2238, %v3511, %v3513
      %v3628 = vsel %vm2238, %v3512, %v3514
      %v3629 = vsel %vm2238, %v3509, %v3511
      %v3630 = vsel %vm2238, %v3510, %v3512
      %v3631 = vsel %vm2238, %v3507, %v3509
      %v3632 = vsel %vm2238, %v3508, %v3510
      %v3633 = vsel %vm2238, %v3569, %v3507
      %v3634 = vsel %vm2238, %v3570, %v3508
      %v3635 = vsel %vm2110, 0.0, %v3633
      %v3636 = vsel %vm2110, 0.0, %v3634
      %v3637 = vsel %vm2111, 0.0, %v3631
      %v3638 = vsel %vm2111, 0.0, %v3632
      %v3639 = vsel %vm2112, 0.0, %v3629
      %v3640 = vsel %vm2112, 0.0, %v3630
      %v3641 = vsel %vm2113, 0.0, %v3627
      %v3642 = vsel %vm2113, 0.0, %v3628
      %v3643 = vsel %vm2114, 0.0, %v3625
      %v3644 = vsel %vm2114, 0.0, %v3626
      %v3645 = vsel %vm2115, 0.0, %v3623
      %v3646 = vsel %vm2115, 0.0, %v3624
      %v3647 = vsel %vm2116, 0.0, %v3621
      %v3648 = vsel %vm2116, 0.0, %v3622
      %v3649 = vsel %vm2117, 0.0, %v3619
      %v3650 = vsel %vm2117, 0.0, %v3620
      %v3651 = vsel %vm2118, 0.0, %v3617
      %v3652 = vsel %vm2118, 0.0, %v3618
      %v3653 = vsel %vm2119, 0.0, %v3615
      %v3654 = vsel %vm2119, 0.0, %v3616
      %v3655 = vsel %vm2120, 0.0, %v3613
      %v3656 = vsel %vm2120, 0.0, %v3614
      %v3657 = vsel %vm2121, 0.0, %v3611
      %v3658 = vsel %vm2121, 0.0, %v3612
      %v3659 = vsel %vm2122, 0.0, %v3609
      %v3660 = vsel %vm2122, 0.0, %v3610
      %v3661 = vsel %vm2123, 0.0, %v3607
      %v3662 = vsel %vm2123, 0.0, %v3608
      %v3663 = vsel %vm2124, 0.0, %v3605
      %v3664 = vsel %vm2124, 0.0, %v3606
      %v3665 = vsel %vm2125, 0.0, %v3603
      %v3666 = vsel %vm2125, 0.0, %v3604
      %v3667 = vsel %vm2126, 0.0, %v3601
      %v3668 = vsel %vm2126, 0.0, %v3602
      %v3669 = vsel %vm2127, 0.0, %v3599
      %v3670 = vsel %vm2127, 0.0, %v3600
      %v3671 = vsel %vm2128, 0.0, %v3597
      %v3672 = vsel %vm2128, 0.0, %v3598
      %v3673 = vsel %vm2129, 0.0, %v3595
      %v3674 = vsel %vm2129, 0.0, %v3596
      %v3675 = vsel %vm2130, 0.0, %v3593
      %v3676 = vsel %vm2130, 0.0, %v3594
      %v3677 = vsel %vm2131, 0.0, %v3591
      %v3678 = vsel %vm2131, 0.0, %v3592
      %v3679 = vsel %vm2132, 0.0, %v3589
      %v3680 = vsel %vm2132, 0.0, %v3590
      %v3681 = vsel %vm2133, 0.0, %v3587
      %v3682 = vsel %vm2133, 0.0, %v3588
      %v3683 = vsel %vm2134, 0.0, %v3585
      %v3684 = vsel %vm2134, 0.0, %v3586
      %v3685 = vsel %vm2135, 0.0, %v3583
      %v3686 = vsel %vm2135, 0.0, %v3584
      %v3687 = vsel %vm2136, 0.0, %v3581
      %v3688 = vsel %vm2136, 0.0, %v3582
      %v3689 = vsel %vm2137, 0.0, %v3579
      %v3690 = vsel %vm2137, 0.0, %v3580
      %v3691 = vsel %vm2138, 0.0, %v3577
      %v3692 = vsel %vm2138, 0.0, %v3578
      %v3693 = vsel %vm2139, 0.0, %v3575
      %v3694 = vsel %vm2139, 0.0, %v3576
      %v3695 = vsel %vm2140, 0.0, %v3573
      %v3696 = vsel %vm2140, 0.0, %v3574
      %v3697 = vsel %vm2141, 0.0, %v3571
      %v3698 = vsel %vm2141, 0.0, %v3572
      %v3699 = vrot.slane %v3411, 1
      %v3700 = vrot.slane %v3475, 1
      %v3701 = vrot.slane %v3413, 1
      %v3702 = vrot.slane %v3476, 1
      %v3703 = vrot.slane %v3415, 1
      %v3704 = vrot.slane %v3477, 1
      %v3705 = vrot.slane %v3417, 1
      %v3706 = vrot.slane %v3478, 1
      %v3707 = vrot.slane %v3419, 1
      %v3708 = vrot.slane %v3479, 1
      %v3709 = vrot.slane %v3421, 1
      %v3710 = vrot.slane %v3480, 1
      %v3711 = vrot.slane %v3423, 1
      %v3712 = vrot.slane %v3481, 1
      %v3713 = vrot.slane %v3425, 1
      %v3714 = vrot.slane %v3482, 1
      %v3715 = vrot.slane %v3427, 1
      %v3716 = vrot.slane %v3483, 1
      %v3717 = vrot.slane %v3429, 1
      %v3718 = vrot.slane %v3484, 1
      %v3719 = vrot.slane %v3431, 1
      %v3720 = vrot.slane %v3485, 1
      %v3721 = vrot.slane %v3433, 1
      %v3722 = vrot.slane %v3486, 1
      %v3723 = vrot.slane %v3435, 1
      %v3724 = vrot.slane %v3487, 1
      %v3725 = vrot.slane %v3437, 1
      %v3726 = vrot.slane %v3488, 1
      %v3727 = vrot.slane %v3439, 1
      %v3728 = vrot.slane %v3489, 1
      %v3729 = vrot.slane %v3441, 1
      %v3730 = vrot.slane %v3490, 1
      %v3731 = vrot.slane %v3443, 1
      %v3732 = vrot.slane %v3491, 1
      %v3733 = vrot.slane %v3445, 1
      %v3734 = vrot.slane %v3492, 1
      %v3735 = vrot.slane %v3447, 1
      %v3736 = vrot.slane %v3493, 1
      %v3737 = vrot.slane %v3449, 1
      %v3738 = vrot.slane %v3494, 1
      %v3739 = vrot.slane %v3451, 1
      %v3740 = vrot.slane %v3495, 1
      %v3741 = vrot.slane %v3453, 1
      %v3742 = vrot.slane %v3496, 1
      %v3743 = vrot.slane %v3455, 1
      %v3744 = vrot.slane %v3497, 1
      %v3745 = vrot.slane %v3457, 1
      %v3746 = vrot.slane %v3498, 1
      %v3747 = vrot.slane %v3459, 1
      %v3748 = vrot.slane %v3499, 1
      %v3749 = vrot.slane %v3461, 1
      %v3750 = vrot.slane %v3500, 1
      %v3751 = vrot.slane %v3463, 1
      %v3752 = vrot.slane %v3501, 1
      %v3753 = vrot.slane %v3465, 1
      %v3754 = vrot.slane %v3502, 1
      %v3755 = vrot.slane %v3467, 1
      %v3756 = vrot.slane %v3503, 1
      %v3757 = vrot.slane %v3469, 1
      %v3758 = vrot.slane %v3504, 1
      %v3759 = vrot.slane %v3471, 1
      %v3760 = vrot.slane %v3505, 1
      %v3761 = vrot.slane %v3473, 1
      %v3762 = vrot.slane %v3506, 1
      %v3763 = vsel %vm2335, %v3759, %v3761
      %v3764 = vsel %vm2335, %v3760, %v3762
      %v3765 = vsel %vm2335, %v3757, %v3759
      %v3766 = vsel %vm2335, %v3758, %v3760
      %v3767 = vsel %vm2335, %v3755, %v3757
      %v3768 = vsel %vm2335, %v3756, %v3758
      %v3769 = vsel %vm2335, %v3753, %v3755
      %v3770 = vsel %vm2335, %v3754, %v3756
      %v3771 = vsel %vm2335, %v3751, %v3753
      %v3772 = vsel %vm2335, %v3752, %v3754
      %v3773 = vsel %vm2335, %v3749, %v3751
      %v3774 = vsel %vm2335, %v3750, %v3752
      %v3775 = vsel %vm2335, %v3747, %v3749
      %v3776 = vsel %vm2335, %v3748, %v3750
      %v3777 = vsel %vm2335, %v3745, %v3747
      %v3778 = vsel %vm2335, %v3746, %v3748
      %v3779 = vsel %vm2335, %v3743, %v3745
      %v3780 = vsel %vm2335, %v3744, %v3746
      %v3781 = vsel %vm2335, %v3741, %v3743
      %v3782 = vsel %vm2335, %v3742, %v3744
      %v3783 = vsel %vm2335, %v3739, %v3741
      %v3784 = vsel %vm2335, %v3740, %v3742
      %v3785 = vsel %vm2335, %v3737, %v3739
      %v3786 = vsel %vm2335, %v3738, %v3740
      %v3787 = vsel %vm2335, %v3735, %v3737
      %v3788 = vsel %vm2335, %v3736, %v3738
      %v3789 = vsel %vm2335, %v3733, %v3735
      %v3790 = vsel %vm2335, %v3734, %v3736
      %v3791 = vsel %vm2335, %v3731, %v3733
      %v3792 = vsel %vm2335, %v3732, %v3734
      %v3793 = vsel %vm2335, %v3729, %v3731
      %v3794 = vsel %vm2335, %v3730, %v3732
      %v3795 = vsel %vm2335, %v3727, %v3729
      %v3796 = vsel %vm2335, %v3728, %v3730
      %v3797 = vsel %vm2335, %v3725, %v3727
      %v3798 = vsel %vm2335, %v3726, %v3728
      %v3799 = vsel %vm2335, %v3723, %v3725
      %v3800 = vsel %vm2335, %v3724, %v3726
      %v3801 = vsel %vm2335, %v3721, %v3723
      %v3802 = vsel %vm2335, %v3722, %v3724
      %v3803 = vsel %vm2335, %v3719, %v3721
      %v3804 = vsel %vm2335, %v3720, %v3722
      %v3805 = vsel %vm2335, %v3717, %v3719
      %v3806 = vsel %vm2335, %v3718, %v3720
      %v3807 = vsel %vm2335, %v3715, %v3717
      %v3808 = vsel %vm2335, %v3716, %v3718
      %v3809 = vsel %vm2335, %v3713, %v3715
      %v3810 = vsel %vm2335, %v3714, %v3716
      %v3811 = vsel %vm2335, %v3711, %v3713
      %v3812 = vsel %vm2335, %v3712, %v3714
      %v3813 = vsel %vm2335, %v3709, %v3711
      %v3814 = vsel %vm2335, %v3710, %v3712
      %v3815 = vsel %vm2335, %v3707, %v3709
      %v3816 = vsel %vm2335, %v3708, %v3710
      %v3817 = vsel %vm2335, %v3705, %v3707
      %v3818 = vsel %vm2335, %v3706, %v3708
      %v3819 = vsel %vm2335, %v3703, %v3705
      %v3820 = vsel %vm2335, %v3704, %v3706
      %v3821 = vsel %vm2335, %v3701, %v3703
      %v3822 = vsel %vm2335, %v3702, %v3704
      %v3823 = vsel %vm2335, %v3699, %v3701
      %v3824 = vsel %vm2335, %v3700, %v3702
      %v3825 = vsel %vm2335, %v3761, %v3699
      %v3826 = vsel %vm2335, %v3762, %v3700
      %v3827 = vsel %vm2174, 0.0, %v3823
      %v3828 = vsel %vm2174, 0.0, %v3824
      %v3829 = vsel %vm2175, 0.0, %v3821
      %v3830 = vsel %vm2175, 0.0, %v3822
      %v3831 = vsel %vm2176, 0.0, %v3819
      %v3832 = vsel %vm2176, 0.0, %v3820
      %v3833 = vsel %vm2177, 0.0, %v3817
      %v3834 = vsel %vm2177, 0.0, %v3818
      %v3835 = vsel %vm2178, 0.0, %v3815
      %v3836 = vsel %vm2178, 0.0, %v3816
      %v3837 = vsel %vm2179, 0.0, %v3813
      %v3838 = vsel %vm2179, 0.0, %v3814
      %v3839 = vsel %vm2180, 0.0, %v3811
      %v3840 = vsel %vm2180, 0.0, %v3812
      %v3841 = vsel %vm2181, 0.0, %v3809
      %v3842 = vsel %vm2181, 0.0, %v3810
      %v3843 = vsel %vm2182, 0.0, %v3807
      %v3844 = vsel %vm2182, 0.0, %v3808
      %v3845 = vsel %vm2183, 0.0, %v3805
      %v3846 = vsel %vm2183, 0.0, %v3806
      %v3847 = vsel %vm2184, 0.0, %v3803
      %v3848 = vsel %vm2184, 0.0, %v3804
      %v3849 = vsel %vm2185, 0.0, %v3801
      %v3850 = vsel %vm2185, 0.0, %v3802
      %v3851 = vsel %vm2186, 0.0, %v3799
      %v3852 = vsel %vm2186, 0.0, %v3800
      %v3853 = vsel %vm2187, 0.0, %v3797
      %v3854 = vsel %vm2187, 0.0, %v3798
      %v3855 = vsel %vm2188, 0.0, %v3795
      %v3856 = vsel %vm2188, 0.0, %v3796
      %v3857 = vsel %vm2189, 0.0, %v3793
      %v3858 = vsel %vm2189, 0.0, %v3794
      %v3859 = vsel %vm2190, 0.0, %v3791
      %v3860 = vsel %vm2190, 0.0, %v3792
      %v3861 = vsel %vm2191, 0.0, %v3789
      %v3862 = vsel %vm2191, 0.0, %v3790
      %v3863 = vsel %vm2192, 0.0, %v3787
      %v3864 = vsel %vm2192, 0.0, %v3788
      %v3865 = vsel %vm2193, 0.0, %v3785
      %v3866 = vsel %vm2193, 0.0, %v3786
      %v3867 = vsel %vm2194, 0.0, %v3783
      %v3868 = vsel %vm2194, 0.0, %v3784
      %v3869 = vsel %vm2195, 0.0, %v3781
      %v3870 = vsel %vm2195, 0.0, %v3782
      %v3871 = vsel %vm2196, 0.0, %v3779
      %v3872 = vsel %vm2196, 0.0, %v3780
      %v3873 = vsel %vm2197, 0.0, %v3777
      %v3874 = vsel %vm2197, 0.0, %v3778
      %v3875 = vsel %vm2198, 0.0, %v3775
      %v3876 = vsel %vm2198, 0.0, %v3776
      %v3877 = vsel %vm2199, 0.0, %v3773
      %v3878 = vsel %vm2199, 0.0, %v3774
      %v3879 = vsel %vm2200, 0.0, %v3771
      %v3880 = vsel %vm2200, 0.0, %v3772
      %v3881 = vsel %vm2201, 0.0, %v3769
      %v3882 = vsel %vm2201, 0.0, %v3770
      %v3883 = vsel %vm2202, 0.0, %v3767
      %v3884 = vsel %vm2202, 0.0, %v3768
      %v3885 = vsel %vm2203, 0.0, %v3765
      %v3886 = vsel %vm2203, 0.0, %v3766
      %v3887 = vsel %vm2204, 0.0, %v3763
      %v3888 = vsel %vm2204, 0.0, %v3764
      %v3889 = vsel %vm2205, 0.0, %v3825
      %v3890 = vsel %vm2205, 0.0, %v3826
      %v3891 = vpack.c.bf16 %v3637, %v3635
      %v3892 = vpack.c.bf16 %v3638, %v3636
      %v3893 = vpack.c.bf16 %v3413, %v3411
      %v3894 = vpack.c.bf16 %v3476, %v3475
      %v3895 = vpack.c.bf16 %v3829, %v3827
      %v3896 = vpack.c.bf16 %v3830, %v3828
      %v3897 = vpack.c.bf16 %v3641, %v3639
      %v3898 = vpack.c.bf16 %v3642, %v3640
      %v3899 = vpack.c.bf16 %v3417, %v3415
      %v3900 = vpack.c.bf16 %v3478, %v3477
      %v3901 = vpack.c.bf16 %v3833, %v3831
      %v3902 = vpack.c.bf16 %v3834, %v3832
      %v3903 = vpack.c.bf16 %v3645, %v3643
      %v3904 = vpack.c.bf16 %v3646, %v3644
      %v3905 = vpack.c.bf16 %v3421, %v3419
      %v3906 = vpack.c.bf16 %v3480, %v3479
      %v3907 = vpack.c.bf16 %v3837, %v3835
      %v3908 = vpack.c.bf16 %v3838, %v3836
      %v3909 = vpack.c.bf16 %v3649, %v3647
      %v3910 = vpack.c.bf16 %v3650, %v3648
      %v3911 = vpack.c.bf16 %v3425, %v3423
      %v3912 = vpack.c.bf16 %v3482, %v3481
      %v3913 = vpack.c.bf16 %v3841, %v3839
      %v3914 = vpack.c.bf16 %v3842, %v3840
      %v3915 = vpack.c.bf16 %v3653, %v3651
      %v3916 = vpack.c.bf16 %v3654, %v3652
      %v3917 = vpack.c.bf16 %v3429, %v3427
      %v3918 = vpack.c.bf16 %v3484, %v3483
      %v3919 = vpack.c.bf16 %v3845, %v3843
      %v3920 = vpack.c.bf16 %v3846, %v3844
      %v3921 = vpack.c.bf16 %v3657, %v3655
      %v3922 = vpack.c.bf16 %v3658, %v3656
      %v3923 = vpack.c.bf16 %v3433, %v3431
      %v3924 = vpack.c.bf16 %v3486, %v3485
      %v3925 = vpack.c.bf16 %v3849, %v3847
      %v3926 = vpack.c.bf16 %v3850, %v3848
      %v3927 = vpack.c.bf16 %v3661, %v3659
      %v3928 = vpack.c.bf16 %v3662, %v3660
      %v3929 = vpack.c.bf16 %v3437, %v3435
      %v3930 = vpack.c.bf16 %v3488, %v3487
      %v3931 = vpack.c.bf16 %v3853, %v3851
      %v3932 = vpack.c.bf16 %v3854, %v3852
      %v3933 = vpack.c.bf16 %v3665, %v3663
      %v3934 = vpack.c.bf16 %v3666, %v3664
      %v3935 = vpack.c.bf16 %v3441, %v3439
      %v3936 = vpack.c.bf16 %v3490, %v3489
      %v3937 = vpack.c.bf16 %v3857, %v3855
      %v3938 = vpack.c.bf16 %v3858, %v3856
      %v3939 = vpack.c.bf16 %v3669, %v3667
      %v3940 = vpack.c.bf16 %v3670, %v3668
      %v3941 = vpack.c.bf16 %v3445, %v3443
      %v3942 = vpack.c.bf16 %v3492, %v3491
      %v3943 = vpack.c.bf16 %v3861, %v3859
      %v3944 = vpack.c.bf16 %v3862, %v3860
      %v3945 = vpack.c.bf16 %v3673, %v3671
      %v3946 = vpack.c.bf16 %v3674, %v3672
      %v3947 = vpack.c.bf16 %v3449, %v3447
      %v3948 = vpack.c.bf16 %v3494, %v3493
      %v3949 = vpack.c.bf16 %v3865, %v3863
      %v3950 = vpack.c.bf16 %v3866, %v3864
      %v3951 = vpack.c.bf16 %v3677, %v3675
      %v3952 = vpack.c.bf16 %v3678, %v3676
      %v3953 = vpack.c.bf16 %v3453, %v3451
      %v3954 = vpack.c.bf16 %v3496, %v3495
      %v3955 = vpack.c.bf16 %v3869, %v3867
      %v3956 = vpack.c.bf16 %v3870, %v3868
      %v3957 = vpack.c.bf16 %v3681, %v3679
      %v3958 = vpack.c.bf16 %v3682, %v3680
      %v3959 = vpack.c.bf16 %v3457, %v3455
      %v3960 = vpack.c.bf16 %v3498, %v3497
      %v3961 = vpack.c.bf16 %v3873, %v3871
      %v3962 = vpack.c.bf16 %v3874, %v3872
      %v3963 = vpack.c.bf16 %v3685, %v3683
      %v3964 = vpack.c.bf16 %v3686, %v3684
      %v3965 = vpack.c.bf16 %v3461, %v3459
      %v3966 = vpack.c.bf16 %v3500, %v3499
      %v3967 = vpack.c.bf16 %v3877, %v3875
      %v3968 = vpack.c.bf16 %v3878, %v3876
      %v3969 = vpack.c.bf16 %v3689, %v3687
      %v3970 = vpack.c.bf16 %v3690, %v3688
      %v3971 = vpack.c.bf16 %v3465, %v3463
      %v3972 = vpack.c.bf16 %v3502, %v3501
      %v3973 = vpack.c.bf16 %v3881, %v3879
      %v3974 = vpack.c.bf16 %v3882, %v3880
      %v3975 = vpack.c.bf16 %v3693, %v3691
      %v3976 = vpack.c.bf16 %v3694, %v3692
      %v3977 = vpack.c.bf16 %v3469, %v3467
      %v3978 = vpack.c.bf16 %v3504, %v3503
      %v3979 = vpack.c.bf16 %v3885, %v3883
      %v3980 = vpack.c.bf16 %v3886, %v3884
      %v3981 = vpack.c.bf16 %v3697, %v3695
      %v3982 = vpack.c.bf16 %v3698, %v3696
      %v3983 = vpack.c.bf16 %v3473, %v3471
      %v3984 = vpack.c.bf16 %v3506, %v3505
      %v3985 = vpack.c.bf16 %v3889, %v3887
      %v3986 = vpack.c.bf16 %v3890, %v3888
      %v3987 = vld [vmem:[%s4] sm:$0xff]
      %v3988 = vld [vmem:[%s4 + $0x8] sm:$0xff]
      %v3989 = vld [vmem:[%s4 + $0x10] sm:$0xff]
      %v3990 = vld [vmem:[%s4 + $0x18] sm:$0xff]
      %v3991 = vld [vmem:[%s4 + $0x20] sm:$0xff]
      %v3992 = vld [vmem:[%s4 + $0x28] sm:$0xff]
      %v3993 = vld [vmem:[%s4 + $0x30] sm:$0xff]
      %v3994 = vld [vmem:[%s4 + $0x38] sm:$0xff]
      %v3995 = vld [vmem:[%s4 + $0x40] sm:$0xff]
      %v3996 = vld [vmem:[%s4 + $0x48] sm:$0xff]
      %v3997 = vld [vmem:[%s4 + $0x50] sm:$0xff]
      %v3998 = vld [vmem:[%s4 + $0x58] sm:$0xff]
      %v3999 = vld [vmem:[%s4 + $0x60] sm:$0xff]
      %v4000 = vld [vmem:[%s4 + $0x68] sm:$0xff]
      %v4001 = vld [vmem:[%s4 + $0x70] sm:$0xff]
      %v4002 = vld [vmem:[%s4 + $0x78] sm:$0xff]
      %v4003 = vld [vmem:[%s4 + $0x80] sm:$0xff]
      %v4004 = vld [vmem:[%s4 + $0x88] sm:$0xff]
      %v4005 = vld [vmem:[%s4 + $0x90] sm:$0xff]
      %v4006 = vld [vmem:[%s4 + $0x98] sm:$0xff]
      %v4007 = vld [vmem:[%s4 + $0xa0] sm:$0xff]
      %v4008 = vld [vmem:[%s4 + $0xa8] sm:$0xff]
      %v4009 = vld [vmem:[%s4 + $0xb0] sm:$0xff]
      %v4010 = vld [vmem:[%s4 + $0xb8] sm:$0xff]
      %v4011 = vld [vmem:[%s4 + $0xc0] sm:$0xff]
      %v4012 = vld [vmem:[%s4 + $0xc8] sm:$0xff]
      %v4013 = vld [vmem:[%s4 + $0xd0] sm:$0xff]
      %v4014 = vld [vmem:[%s4 + $0xd8] sm:$0xff]
      %v4015 = vld [vmem:[%s4 + $0xe0] sm:$0xff]
      %v4016 = vld [vmem:[%s4 + $0xe8] sm:$0xff]
      %v4017 = vld [vmem:[%s4 + $0xf0] sm:$0xff]
      %v4018 = vld [vmem:[%s4 + $0xf8] sm:$0xff]
      %v4019 = vld [vmem:[%s4 + $0x100] sm:$0xff]
      %v4020 = vld [vmem:[%s4 + $0x108] sm:$0xff]
      %v4021 = vld [vmem:[%s4 + $0x110] sm:$0xff]
      %v4022 = vld [vmem:[%s4 + $0x118] sm:$0xff]
      %v4023 = vld [vmem:[%s4 + $0x120] sm:$0xff]
      %v4024 = vld [vmem:[%s4 + $0x128] sm:$0xff]
      %v4025 = vld [vmem:[%s4 + $0x130] sm:$0xff]
      %v4026 = vld [vmem:[%s4 + $0x138] sm:$0xff]
      %v4027 = vld [vmem:[%s4 + $0x140] sm:$0xff]
      %v4028 = vld [vmem:[%s4 + $0x148] sm:$0xff]
      %v4029 = vld [vmem:[%s4 + $0x150] sm:$0xff]
      %v4030 = vld [vmem:[%s4 + $0x158] sm:$0xff]
      %v4031 = vld [vmem:[%s4 + $0x160] sm:$0xff]
      %v4032 = vld [vmem:[%s4 + $0x168] sm:$0xff]
      %v4033 = vld [vmem:[%s4 + $0x170] sm:$0xff]
      %v4034 = vld [vmem:[%s4 + $0x178] sm:$0xff]
      %v4035 = vld [vmem:[%s4 + $0x180] sm:$0xff]
      %v4036 = vld [vmem:[%s4 + $0x188] sm:$0xff]
      %v4037 = vld [vmem:[%s4 + $0x190] sm:$0xff]
      %v4038 = vld [vmem:[%s4 + $0x198] sm:$0xff]
      %v4039 = vld [vmem:[%s4 + $0x1a0] sm:$0xff]
      %v4040 = vld [vmem:[%s4 + $0x1a8] sm:$0xff]
      %v4041 = vld [vmem:[%s4 + $0x1b0] sm:$0xff]
      %v4042 = vld [vmem:[%s4 + $0x1b8] sm:$0xff]
      %v4043 = vld [vmem:[%s4 + $0x1c0] sm:$0xff]
      %v4044 = vld [vmem:[%s4 + $0x1c8] sm:$0xff]
      %v4045 = vld [vmem:[%s4 + $0x1d0] sm:$0xff]
      %v4046 = vld [vmem:[%s4 + $0x1d8] sm:$0xff]
      %v4047 = vld [vmem:[%s4 + $0x1e0] sm:$0xff]
      %v4048 = vld [vmem:[%s4 + $0x1e8] sm:$0xff]
      %v4049 = vld [vmem:[%s4 + $0x1f0] sm:$0xff]
      %v4050 = vld [vmem:[%s4 + $0x1f8] sm:$0xff]
      %v4051 = vld [vmem:[%s4 + $0x200] sm:$0xff]
      %v4052 = vld [vmem:[%s4 + $0x208] sm:$0xff]
      %v4053 = vld [vmem:[%s4 + $0x210] sm:$0xff]
      %v4054 = vld [vmem:[%s4 + $0x218] sm:$0xff]
      %v4055 = vld [vmem:[%s4 + $0x220] sm:$0xff]
      %v4056 = vld [vmem:[%s4 + $0x228] sm:$0xff]
      %v4057 = vld [vmem:[%s4 + $0x230] sm:$0xff]
      %v4058 = vld [vmem:[%s4 + $0x238] sm:$0xff]
      %v4059 = vld [vmem:[%s4 + $0x240] sm:$0xff]
      %v4060 = vld [vmem:[%s4 + $0x248] sm:$0xff]
      %v4061 = vld [vmem:[%s4 + $0x250] sm:$0xff]
      %v4062 = vld [vmem:[%s4 + $0x258] sm:$0xff]
      %v4063 = vld [vmem:[%s4 + $0x260] sm:$0xff]
      %v4064 = vld [vmem:[%s4 + $0x268] sm:$0xff]
      %v4065 = vld [vmem:[%s4 + $0x270] sm:$0xff]
      %v4066 = vld [vmem:[%s4 + $0x278] sm:$0xff]
      %v4067 = vld [vmem:[%s4 + $0x280] sm:$0xff]
      %v4068 = vld [vmem:[%s4 + $0x288] sm:$0xff]
      %v4069 = vld [vmem:[%s4 + $0x290] sm:$0xff]
      %v4070 = vld [vmem:[%s4 + $0x298] sm:$0xff]
      %v4071 = vld [vmem:[%s4 + $0x2a0] sm:$0xff]
      %v4072 = vld [vmem:[%s4 + $0x2a8] sm:$0xff]
      %v4073 = vld [vmem:[%s4 + $0x2b0] sm:$0xff]
      %v4074 = vld [vmem:[%s4 + $0x2b8] sm:$0xff]
      %v4075 = vld [vmem:[%s4 + $0x2c0] sm:$0xff]
      %v4076 = vld [vmem:[%s4 + $0x2c8] sm:$0xff]
      %v4077 = vld [vmem:[%s4 + $0x2d0] sm:$0xff]
      %v4078 = vld [vmem:[%s4 + $0x2d8] sm:$0xff]
      %v4079 = vld [vmem:[%s4 + $0x2e0] sm:$0xff]
      %v4080 = vld [vmem:[%s4 + $0x2e8] sm:$0xff]
      %v4081 = vld [vmem:[%s4 + $0x2f0] sm:$0xff]
      %v4082 = vld [vmem:[%s4 + $0x2f8] sm:$0xff]
      %v4179 = vunpack.c.l.b16 %v3987
      %v4180 = vunpack.c.h.b16 %v3987
      %v4181 = vunpack.c.l.b16 %v3988
      %v4182 = vunpack.c.h.b16 %v3988
      %v4183 = vunpack.c.l.b16 %v3989
      %v4184 = vunpack.c.h.b16 %v3989
      %v4185 = vunpack.c.l.b16 %v3990
      %v4186 = vunpack.c.h.b16 %v3990
      %v4187 = vunpack.c.l.b16 %v3991
      %v4188 = vunpack.c.h.b16 %v3991
      %v4189 = vunpack.c.l.b16 %v3992
      %v4190 = vunpack.c.h.b16 %v3992
      %v4191 = vunpack.c.l.b16 %v3993
      %v4192 = vunpack.c.h.b16 %v3993
      %v4193 = vunpack.c.l.b16 %v3994
      %v4194 = vunpack.c.h.b16 %v3994
      %v4195 = vunpack.c.l.b16 %v3995
      %v4196 = vunpack.c.h.b16 %v3995
      %v4197 = vunpack.c.l.b16 %v3996
      %v4198 = vunpack.c.h.b16 %v3996
      %v4199 = vunpack.c.l.b16 %v3997
      %v4200 = vunpack.c.h.b16 %v3997
      %v4201 = vunpack.c.l.b16 %v3998
      %v4202 = vunpack.c.h.b16 %v3998
      %v4203 = vunpack.c.l.b16 %v3999
      %v4204 = vunpack.c.h.b16 %v3999
      %v4205 = vunpack.c.l.b16 %v4000
      %v4206 = vunpack.c.h.b16 %v4000
      %v4207 = vunpack.c.l.b16 %v4001
      %v4208 = vunpack.c.h.b16 %v4001
      %v4209 = vunpack.c.l.b16 %v4002
      %v4210 = vunpack.c.h.b16 %v4002
      %v4211 = vunpack.c.l.b16 %v4003
      %v4212 = vunpack.c.h.b16 %v4003
      %v4213 = vunpack.c.l.b16 %v4004
      %v4214 = vunpack.c.h.b16 %v4004
      %v4215 = vunpack.c.l.b16 %v4005
      %v4216 = vunpack.c.h.b16 %v4005
      %v4217 = vunpack.c.l.b16 %v4006
      %v4218 = vunpack.c.h.b16 %v4006
      %v4219 = vunpack.c.l.b16 %v4007
      %v4220 = vunpack.c.h.b16 %v4007
      %v4221 = vunpack.c.l.b16 %v4008
      %v4222 = vunpack.c.h.b16 %v4008
      %v4223 = vunpack.c.l.b16 %v4009
      %v4224 = vunpack.c.h.b16 %v4009
      %v4225 = vunpack.c.l.b16 %v4010
      %v4226 = vunpack.c.h.b16 %v4010
      %v4227 = vunpack.c.l.b16 %v4011
      %v4228 = vunpack.c.h.b16 %v4011
      %v4229 = vunpack.c.l.b16 %v4012
      %v4230 = vunpack.c.h.b16 %v4012
      %v4231 = vunpack.c.l.b16 %v4013
      %v4232 = vunpack.c.h.b16 %v4013
      %v4233 = vunpack.c.l.b16 %v4014
      %v4234 = vunpack.c.h.b16 %v4014
      %v4235 = vunpack.c.l.b16 %v4015
      %v4236 = vunpack.c.h.b16 %v4015
      %v4237 = vunpack.c.l.b16 %v4016
      %v4238 = vunpack.c.h.b16 %v4016
      %v4239 = vunpack.c.l.b16 %v4017
      %v4240 = vunpack.c.h.b16 %v4017
      %v4241 = vunpack.c.l.b16 %v4018
      %v4242 = vunpack.c.h.b16 %v4018
      %v4243 = vunpack.c.l.b16 %v4019
      %v4244 = vunpack.c.h.b16 %v4019
      %v4245 = vunpack.c.l.b16 %v4020
      %v4246 = vunpack.c.h.b16 %v4020
      %v4247 = vunpack.c.l.b16 %v4021
      %v4248 = vunpack.c.h.b16 %v4021
      %v4249 = vunpack.c.l.b16 %v4022
      %v4250 = vunpack.c.h.b16 %v4022
      %v4251 = vunpack.c.l.b16 %v4023
      %v4252 = vunpack.c.h.b16 %v4023
      %v4253 = vunpack.c.l.b16 %v4024
      %v4254 = vunpack.c.h.b16 %v4024
      %v4255 = vunpack.c.l.b16 %v4025
      %v4256 = vunpack.c.h.b16 %v4025
      %v4257 = vunpack.c.l.b16 %v4026
      %v4258 = vunpack.c.h.b16 %v4026
      %v4259 = vunpack.c.l.b16 %v4027
      %v4260 = vunpack.c.h.b16 %v4027
      %v4261 = vunpack.c.l.b16 %v4028
      %v4262 = vunpack.c.h.b16 %v4028
      %v4263 = vunpack.c.l.b16 %v4029
      %v4264 = vunpack.c.h.b16 %v4029
      %v4265 = vunpack.c.l.b16 %v4030
      %v4266 = vunpack.c.h.b16 %v4030
      %v4267 = vunpack.c.l.b16 %v4031
      %v4268 = vunpack.c.h.b16 %v4031
      %v4269 = vunpack.c.l.b16 %v4032
      %v4270 = vunpack.c.h.b16 %v4032
      %v4271 = vunpack.c.l.b16 %v4033
      %v4272 = vunpack.c.h.b16 %v4033
      %v4273 = vunpack.c.l.b16 %v4034
      %v4274 = vunpack.c.h.b16 %v4034
      %v4275 = vunpack.c.l.b16 %v4035
      %v4276 = vunpack.c.h.b16 %v4035
      %v4277 = vunpack.c.l.b16 %v4036
      %v4278 = vunpack.c.h.b16 %v4036
      %v4279 = vunpack.c.l.b16 %v4037
      %v4280 = vunpack.c.h.b16 %v4037
      %v4281 = vunpack.c.l.b16 %v4038
      %v4282 = vunpack.c.h.b16 %v4038
      %v4283 = vunpack.c.l.b16 %v4039
      %v4284 = vunpack.c.h.b16 %v4039
      %v4285 = vunpack.c.l.b16 %v4040
      %v4286 = vunpack.c.h.b16 %v4040
      %v4287 = vunpack.c.l.b16 %v4041
      %v4288 = vunpack.c.h.b16 %v4041
      %v4289 = vunpack.c.l.b16 %v4042
      %v4290 = vunpack.c.h.b16 %v4042
      %v4291 = vunpack.c.l.b16 %v4043
      %v4292 = vunpack.c.h.b16 %v4043
      %v4293 = vunpack.c.l.b16 %v4044
      %v4294 = vunpack.c.h.b16 %v4044
      %v4295 = vunpack.c.l.b16 %v4045
      %v4296 = vunpack.c.h.b16 %v4045
      %v4297 = vunpack.c.l.b16 %v4046
      %v4298 = vunpack.c.h.b16 %v4046
      %v4299 = vunpack.c.l.b16 %v4047
      %v4300 = vunpack.c.h.b16 %v4047
      %v4301 = vunpack.c.l.b16 %v4048
      %v4302 = vunpack.c.h.b16 %v4048
      %v4303 = vunpack.c.l.b16 %v4049
      %v4304 = vunpack.c.h.b16 %v4049
      %v4305 = vunpack.c.l.b16 %v4050
      %v4306 = vunpack.c.h.b16 %v4050
      %v4307 = vunpack.c.l.b16 %v4051
      %v4308 = vunpack.c.h.b16 %v4051
      %v4309 = vunpack.c.l.b16 %v4052
      %v4310 = vunpack.c.h.b16 %v4052
      %v4311 = vunpack.c.l.b16 %v4053
      %v4312 = vunpack.c.h.b16 %v4053
      %v4313 = vunpack.c.l.b16 %v4054
      %v4314 = vunpack.c.h.b16 %v4054
      %v4315 = vunpack.c.l.b16 %v4055
      %v4316 = vunpack.c.h.b16 %v4055
      %v4317 = vunpack.c.l.b16 %v4056
      %v4318 = vunpack.c.h.b16 %v4056
      %v4319 = vunpack.c.l.b16 %v4057
      %v4320 = vunpack.c.h.b16 %v4057
      %v4321 = vunpack.c.l.b16 %v4058
      %v4322 = vunpack.c.h.b16 %v4058
      %v4323 = vunpack.c.l.b16 %v4059
      %v4324 = vunpack.c.h.b16 %v4059
      %v4325 = vunpack.c.l.b16 %v4060
      %v4326 = vunpack.c.h.b16 %v4060
      %v4327 = vunpack.c.l.b16 %v4061
      %v4328 = vunpack.c.h.b16 %v4061
      %v4329 = vunpack.c.l.b16 %v4062
      %v4330 = vunpack.c.h.b16 %v4062
      %v4331 = vunpack.c.l.b16 %v4063
      %v4332 = vunpack.c.h.b16 %v4063
      %v4333 = vunpack.c.l.b16 %v4064
      %v4334 = vunpack.c.h.b16 %v4064
      %v4335 = vunpack.c.l.b16 %v4065
      %v4336 = vunpack.c.h.b16 %v4065
      %v4337 = vunpack.c.l.b16 %v4066
      %v4338 = vunpack.c.h.b16 %v4066
      %v4339 = vunpack.c.l.b16 %v4067
      %v4340 = vunpack.c.h.b16 %v4067
      %v4341 = vunpack.c.l.b16 %v4068
      %v4342 = vunpack.c.h.b16 %v4068
      %v4343 = vunpack.c.l.b16 %v4069
      %v4344 = vunpack.c.h.b16 %v4069
      %v4345 = vunpack.c.l.b16 %v4070
      %v4346 = vunpack.c.h.b16 %v4070
      %v4347 = vunpack.c.l.b16 %v4071
      %v4348 = vunpack.c.h.b16 %v4071
      %v4349 = vunpack.c.l.b16 %v4072
      %v4350 = vunpack.c.h.b16 %v4072
      %v4351 = vunpack.c.l.b16 %v4073
      %v4352 = vunpack.c.h.b16 %v4073
      %v4353 = vunpack.c.l.b16 %v4074
      %v4354 = vunpack.c.h.b16 %v4074
      %v4355 = vunpack.c.l.b16 %v4075
      %v4356 = vunpack.c.h.b16 %v4075
      %v4357 = vunpack.c.l.b16 %v4076
      %v4358 = vunpack.c.h.b16 %v4076
      %v4359 = vunpack.c.l.b16 %v4077
      %v4360 = vunpack.c.h.b16 %v4077
      %v4361 = vunpack.c.l.b16 %v4078
      %v4362 = vunpack.c.h.b16 %v4078
      %v4363 = vunpack.c.l.b16 %v4079
      %v4364 = vunpack.c.h.b16 %v4079
      %v4365 = vunpack.c.l.b16 %v4080
      %v4366 = vunpack.c.h.b16 %v4080
      %v4367 = vunpack.c.l.b16 %v4081
      %v4368 = vunpack.c.h.b16 %v4081
      %v4369 = vunpack.c.l.b16 %v4082
      %v4370 = vunpack.c.h.b16 %v4082
      %v4371 = vpack.c.b16 %v4181, %v4179
      %v4372 = vpack.c.b16 %v4182, %v4180
      %v4373 = vpack.c.b16 %v4185, %v4183
      %v4374 = vpack.c.b16 %v4186, %v4184
      %v4375 = vpack.c.b16 %v4189, %v4187
      %v4376 = vpack.c.b16 %v4190, %v4188
      %v4377 = vpack.c.b16 %v4193, %v4191
      %v4378 = vpack.c.b16 %v4194, %v4192
      %v4379 = vpack.c.b16 %v4197, %v4195
      %v4380 = vpack.c.b16 %v4198, %v4196
      %v4381 = vpack.c.b16 %v4201, %v4199
      %v4382 = vpack.c.b16 %v4202, %v4200
      %v4383 = vpack.c.b16 %v4205, %v4203
      %v4384 = vpack.c.b16 %v4206, %v4204
      %v4385 = vpack.c.b16 %v4209, %v4207
      %v4386 = vpack.c.b16 %v4210, %v4208
      %v4387 = vpack.c.b16 %v4213, %v4211
      %v4388 = vpack.c.b16 %v4214, %v4212
      %v4389 = vpack.c.b16 %v4217, %v4215
      %v4390 = vpack.c.b16 %v4218, %v4216
      %v4391 = vpack.c.b16 %v4221, %v4219
      %v4392 = vpack.c.b16 %v4222, %v4220
      %v4393 = vpack.c.b16 %v4225, %v4223
      %v4394 = vpack.c.b16 %v4226, %v4224
      %v4395 = vpack.c.b16 %v4229, %v4227
      %v4396 = vpack.c.b16 %v4230, %v4228
      %v4397 = vpack.c.b16 %v4233, %v4231
      %v4398 = vpack.c.b16 %v4234, %v4232
      %v4399 = vpack.c.b16 %v4237, %v4235
      %v4400 = vpack.c.b16 %v4238, %v4236
      %v4401 = vpack.c.b16 %v4241, %v4239
      %v4402 = vpack.c.b16 %v4242, %v4240
      %v4403 = vpack.c.b16 %v4245, %v4243
      %v4404 = vpack.c.b16 %v4246, %v4244
      %v4405 = vpack.c.b16 %v4249, %v4247
      %v4406 = vpack.c.b16 %v4250, %v4248
      %v4407 = vpack.c.b16 %v4253, %v4251
      %v4408 = vpack.c.b16 %v4254, %v4252
      %v4409 = vpack.c.b16 %v4257, %v4255
      %v4410 = vpack.c.b16 %v4258, %v4256
      %v4411 = vpack.c.b16 %v4261, %v4259
      %v4412 = vpack.c.b16 %v4262, %v4260
      %v4413 = vpack.c.b16 %v4265, %v4263
      %v4414 = vpack.c.b16 %v4266, %v4264
      %v4415 = vpack.c.b16 %v4269, %v4267
      %v4416 = vpack.c.b16 %v4270, %v4268
      %v4417 = vpack.c.b16 %v4273, %v4271
      %v4418 = vpack.c.b16 %v4274, %v4272
      %v4419 = vpack.c.b16 %v4277, %v4275
      %v4420 = vpack.c.b16 %v4278, %v4276
      %v4421 = vpack.c.b16 %v4281, %v4279
      %v4422 = vpack.c.b16 %v4282, %v4280
      %v4423 = vpack.c.b16 %v4285, %v4283
      %v4424 = vpack.c.b16 %v4286, %v4284
      %v4425 = vpack.c.b16 %v4289, %v4287
      %v4426 = vpack.c.b16 %v4290, %v4288
      %v4427 = vpack.c.b16 %v4293, %v4291
      %v4428 = vpack.c.b16 %v4294, %v4292
      %v4429 = vpack.c.b16 %v4297, %v4295
      %v4430 = vpack.c.b16 %v4298, %v4296
      %v4431 = vpack.c.b16 %v4301, %v4299
      %v4432 = vpack.c.b16 %v4302, %v4300
      %v4433 = vpack.c.b16 %v4305, %v4303
      %v4434 = vpack.c.b16 %v4306, %v4304
      %v4435 = vpack.c.b16 %v4309, %v4307
      %v4436 = vpack.c.b16 %v4310, %v4308
      %v4437 = vpack.c.b16 %v4313, %v4311
      %v4438 = vpack.c.b16 %v4314, %v4312
      %v4439 = vpack.c.b16 %v4317, %v4315
      %v4440 = vpack.c.b16 %v4318, %v4316
      %v4441 = vpack.c.b16 %v4321, %v4319
      %v4442 = vpack.c.b16 %v4322, %v4320
      %v4443 = vpack.c.b16 %v4325, %v4323
      %v4444 = vpack.c.b16 %v4326, %v4324
      %v4445 = vpack.c.b16 %v4329, %v4327
      %v4446 = vpack.c.b16 %v4330, %v4328
      %v4447 = vpack.c.b16 %v4333, %v4331
      %v4448 = vpack.c.b16 %v4334, %v4332
      %v4449 = vpack.c.b16 %v4337, %v4335
      %v4450 = vpack.c.b16 %v4338, %v4336
      %v4451 = vpack.c.b16 %v4341, %v4339
      %v4452 = vpack.c.b16 %v4342, %v4340
      %v4453 = vpack.c.b16 %v4345, %v4343
      %v4454 = vpack.c.b16 %v4346, %v4344
      %v4455 = vpack.c.b16 %v4349, %v4347
      %v4456 = vpack.c.b16 %v4350, %v4348
      %v4457 = vpack.c.b16 %v4353, %v4351
      %v4458 = vpack.c.b16 %v4354, %v4352
      %v4459 = vpack.c.b16 %v4357, %v4355
      %v4460 = vpack.c.b16 %v4358, %v4356
      %v4461 = vpack.c.b16 %v4361, %v4359
      %v4462 = vpack.c.b16 %v4362, %v4360
      %v4463 = vpack.c.b16 %v4365, %v4363
      %v4464 = vpack.c.b16 %v4366, %v4364
      %v4465 = vpack.c.b16 %v4369, %v4367
      %v4466 = vpack.c.b16 %v4370, %v4368
      %4563 = vmatpush.bf16.msra.mxu0 %v4385
      %4564 = vmatpush.bf16.msra.mxu0 %v4383
      %4565 = vmatpush.bf16.msra.mxu0 %v4381
      %4566 = vmatpush.bf16.msra.mxu0 %v4379
      %4567 = vmatpush.bf16.msra.mxu0 %v4377
      %4568 = vmatpush.bf16.msra.mxu0 %v4375
      %4569 = vmatpush.bf16.msra.mxu0 %v4373
      %4570 = vmatpush.bf16.msra.mxu0 %v4371
      %4571 = vmatmul.bf16.gmra.mxu0 %v3891
      %v4572 = vpop.f32.mrf.mxu0
      %v4573 = vadd.f32 0.0, %v4572
      %v4574 = vpop.f32.mrf.mxu0
      %v4575 = vadd.f32 0.0, %v4574
      %4576 = vmatmul.bf16.gmra.mxu0 %v3897
      %v4577 = vpop.f32.mrf.mxu0
      %v4578 = vadd.f32 0.0, %v4577
      %v4579 = vpop.f32.mrf.mxu0
      %v4580 = vadd.f32 0.0, %v4579
      %4581 = vmatmul.bf16.gmra.mxu0 %v3903
      %v4582 = vpop.f32.mrf.mxu0
      %v4583 = vadd.f32 0.0, %v4582
      %v4584 = vpop.f32.mrf.mxu0
      %v4585 = vadd.f32 0.0, %v4584
      %4586 = vmatmul.bf16.gmra.mxu0 %v3909
      %v4587 = vpop.f32.mrf.mxu0
      %v4588 = vadd.f32 0.0, %v4587
      %v4589 = vpop.f32.mrf.mxu0
      %v4590 = vadd.f32 0.0, %v4589
      %4591 = vmatmul.bf16.gmra.mxu0 %v3915
      %v4592 = vpop.f32.mrf.mxu0
      %v4593 = vadd.f32 0.0, %v4592
      %v4594 = vpop.f32.mrf.mxu0
      %v4595 = vadd.f32 0.0, %v4594
      %4596 = vmatmul.bf16.gmra.mxu0 %v3921
      %v4597 = vpop.f32.mrf.mxu0
      %v4598 = vadd.f32 0.0, %v4597
      %v4599 = vpop.f32.mrf.mxu0
      %v4600 = vadd.f32 0.0, %v4599
      %4601 = vmatmul.bf16.gmra.mxu0 %v3927
      %v4602 = vpop.f32.mrf.mxu0
      %v4603 = vadd.f32 0.0, %v4602
      %v4604 = vpop.f32.mrf.mxu0
      %v4605 = vadd.f32 0.0, %v4604
      %4606 = vmatmul.bf16.gmra.mxu0 %v3933
      %v4607 = vpop.f32.mrf.mxu0
      %v4608 = vadd.f32 0.0, %v4607
      %v4609 = vpop.f32.mrf.mxu0
      %v4610 = vadd.f32 0.0, %v4609
      %4611 = vmatmul.bf16.gmra.mxu0 %v3939
      %v4612 = vpop.f32.mrf.mxu0
      %v4613 = vadd.f32 0.0, %v4612
      %v4614 = vpop.f32.mrf.mxu0
      %v4615 = vadd.f32 0.0, %v4614
      %4616 = vmatmul.bf16.gmra.mxu0 %v3945
      %v4617 = vpop.f32.mrf.mxu0
      %v4618 = vadd.f32 0.0, %v4617
      %v4619 = vpop.f32.mrf.mxu0
      %v4620 = vadd.f32 0.0, %v4619
      %4621 = vmatmul.bf16.gmra.mxu0 %v3951
      %v4622 = vpop.f32.mrf.mxu0
      %v4623 = vadd.f32 0.0, %v4622
      %v4624 = vpop.f32.mrf.mxu0
      %v4625 = vadd.f32 0.0, %v4624
      %4626 = vmatmul.bf16.gmra.mxu0 %v3957
      %v4627 = vpop.f32.mrf.mxu0
      %v4628 = vadd.f32 0.0, %v4627
      %v4629 = vpop.f32.mrf.mxu0
      %v4630 = vadd.f32 0.0, %v4629
      %4631 = vmatmul.bf16.gmra.mxu0 %v3963
      %v4632 = vpop.f32.mrf.mxu0
      %v4633 = vadd.f32 0.0, %v4632
      %v4634 = vpop.f32.mrf.mxu0
      %v4635 = vadd.f32 0.0, %v4634
      %4636 = vmatmul.bf16.gmra.mxu0 %v3969
      %v4637 = vpop.f32.mrf.mxu0
      %v4638 = vadd.f32 0.0, %v4637
      %v4639 = vpop.f32.mrf.mxu0
      %v4640 = vadd.f32 0.0, %v4639
      %4641 = vmatmul.bf16.gmra.mxu0 %v3975
      %v4642 = vpop.f32.mrf.mxu0
      %v4643 = vadd.f32 0.0, %v4642
      %v4644 = vpop.f32.mrf.mxu0
      %v4645 = vadd.f32 0.0, %v4644
      %4646 = vmatmul.bf16.gmra.mxu0 %v3981
      %v4647 = vpop.f32.mrf.mxu0
      %v4648 = vadd.f32 0.0, %v4647
      %v4649 = vpop.f32.mrf.mxu0
      %v4650 = vadd.f32 0.0, %v4649
      %4651 = vdwg.mxu0
      %4652 = vmatpush.bf16.msra.mxu0 %v4401
      %4653 = vmatpush.bf16.msra.mxu0 %v4399
      %4654 = vmatpush.bf16.msra.mxu0 %v4397
      %4655 = vmatpush.bf16.msra.mxu0 %v4395
      %4656 = vmatpush.bf16.msra.mxu0 %v4393
      %4657 = vmatpush.bf16.msra.mxu0 %v4391
      %4658 = vmatpush.bf16.msra.mxu0 %v4389
      %4659 = vmatpush.bf16.msra.mxu0 %v4387
      %4660 = vmatmul.bf16.gmra.mxu0 %v3892
      %v4661 = vpop.f32.mrf.mxu0
      %v4662 = vadd.f32 %v4573, %v4661
      %v4663 = vpop.f32.mrf.mxu0
      %v4664 = vadd.f32 %v4575, %v4663
      %4665 = vmatmul.bf16.gmra.mxu0 %v3898
      %v4666 = vpop.f32.mrf.mxu0
      %v4667 = vadd.f32 %v4578, %v4666
      %v4668 = vpop.f32.mrf.mxu0
      %v4669 = vadd.f32 %v4580, %v4668
      %4670 = vmatmul.bf16.gmra.mxu0 %v3904
      %v4671 = vpop.f32.mrf.mxu0
      %v4672 = vadd.f32 %v4583, %v4671
      %v4673 = vpop.f32.mrf.mxu0
      %v4674 = vadd.f32 %v4585, %v4673
      %4675 = vmatmul.bf16.gmra.mxu0 %v3910
      %v4676 = vpop.f32.mrf.mxu0
      %v4677 = vadd.f32 %v4588, %v4676
      %v4678 = vpop.f32.mrf.mxu0
      %v4679 = vadd.f32 %v4590, %v4678
      %4680 = vmatmul.bf16.gmra.mxu0 %v3916
      %v4681 = vpop.f32.mrf.mxu0
      %v4682 = vadd.f32 %v4593, %v4681
      %v4683 = vpop.f32.mrf.mxu0
      %v4684 = vadd.f32 %v4595, %v4683
      %4685 = vmatmul.bf16.gmra.mxu0 %v3922
      %v4686 = vpop.f32.mrf.mxu0
      %v4687 = vadd.f32 %v4598, %v4686
      %v4688 = vpop.f32.mrf.mxu0
      %v4689 = vadd.f32 %v4600, %v4688
      %4690 = vmatmul.bf16.gmra.mxu0 %v3928
      %v4691 = vpop.f32.mrf.mxu0
      %v4692 = vadd.f32 %v4603, %v4691
      %v4693 = vpop.f32.mrf.mxu0
      %v4694 = vadd.f32 %v4605, %v4693
      %4695 = vmatmul.bf16.gmra.mxu0 %v3934
      %v4696 = vpop.f32.mrf.mxu0
      %v4697 = vadd.f32 %v4608, %v4696
      %v4698 = vpop.f32.mrf.mxu0
      %v4699 = vadd.f32 %v4610, %v4698
      %4700 = vmatmul.bf16.gmra.mxu0 %v3940
      %v4701 = vpop.f32.mrf.mxu0
      %v4702 = vadd.f32 %v4613, %v4701
      %v4703 = vpop.f32.mrf.mxu0
      %v4704 = vadd.f32 %v4615, %v4703
      %4705 = vmatmul.bf16.gmra.mxu0 %v3946
      %v4706 = vpop.f32.mrf.mxu0
      %v4707 = vadd.f32 %v4618, %v4706
      %v4708 = vpop.f32.mrf.mxu0
      %v4709 = vadd.f32 %v4620, %v4708
      %4710 = vmatmul.bf16.gmra.mxu0 %v3952
      %v4711 = vpop.f32.mrf.mxu0
      %v4712 = vadd.f32 %v4623, %v4711
      %v4713 = vpop.f32.mrf.mxu0
      %v4714 = vadd.f32 %v4625, %v4713
      %4715 = vmatmul.bf16.gmra.mxu0 %v3958
      %v4716 = vpop.f32.mrf.mxu0
      %v4717 = vadd.f32 %v4628, %v4716
      %v4718 = vpop.f32.mrf.mxu0
      %v4719 = vadd.f32 %v4630, %v4718
      %4720 = vmatmul.bf16.gmra.mxu0 %v3964
      %v4721 = vpop.f32.mrf.mxu0
      %v4722 = vadd.f32 %v4633, %v4721
      %v4723 = vpop.f32.mrf.mxu0
      %v4724 = vadd.f32 %v4635, %v4723
      %4725 = vmatmul.bf16.gmra.mxu0 %v3970
      %v4726 = vpop.f32.mrf.mxu0
      %v4727 = vadd.f32 %v4638, %v4726
      %v4728 = vpop.f32.mrf.mxu0
      %v4729 = vadd.f32 %v4640, %v4728
      %4730 = vmatmul.bf16.gmra.mxu0 %v3976
      %v4731 = vpop.f32.mrf.mxu0
      %v4732 = vadd.f32 %v4643, %v4731
      %v4733 = vpop.f32.mrf.mxu0
      %v4734 = vadd.f32 %v4645, %v4733
      %4735 = vmatmul.bf16.gmra.mxu0 %v3982
      %v4736 = vpop.f32.mrf.mxu0
      %v4737 = vadd.f32 %v4648, %v4736
      %v4738 = vpop.f32.mrf.mxu0
      %v4739 = vadd.f32 %v4650, %v4738
      %4740 = vdwg.mxu0
      %4741 = vmatpush.bf16.msra.mxu0 %v4417
      %4742 = vmatpush.bf16.msra.mxu0 %v4415
      %4743 = vmatpush.bf16.msra.mxu0 %v4413
      %4744 = vmatpush.bf16.msra.mxu0 %v4411
      %4745 = vmatpush.bf16.msra.mxu0 %v4409
      %4746 = vmatpush.bf16.msra.mxu0 %v4407
      %4747 = vmatpush.bf16.msra.mxu0 %v4405
      %4748 = vmatpush.bf16.msra.mxu0 %v4403
      %4749 = vmatmul.bf16.gmra.mxu0 %v3893
      %v4750 = vpop.f32.mrf.mxu0
      %v4751 = vadd.f32 %v4662, %v4750
      %v4752 = vpop.f32.mrf.mxu0
      %v4753 = vadd.f32 %v4664, %v4752
      %4754 = vmatmul.bf16.gmra.mxu0 %v3899
      %v4755 = vpop.f32.mrf.mxu0
      %v4756 = vadd.f32 %v4667, %v4755
      %v4757 = vpop.f32.mrf.mxu0
      %v4758 = vadd.f32 %v4669, %v4757
      %4759 = vmatmul.bf16.gmra.mxu0 %v3905
      %v4760 = vpop.f32.mrf.mxu0
      %v4761 = vadd.f32 %v4672, %v4760
      %v4762 = vpop.f32.mrf.mxu0
      %v4763 = vadd.f32 %v4674, %v4762
      %4764 = vmatmul.bf16.gmra.mxu0 %v3911
      %v4765 = vpop.f32.mrf.mxu0
      %v4766 = vadd.f32 %v4677, %v4765
      %v4767 = vpop.f32.mrf.mxu0
      %v4768 = vadd.f32 %v4679, %v4767
      %4769 = vmatmul.bf16.gmra.mxu0 %v3917
      %v4770 = vpop.f32.mrf.mxu0
      %v4771 = vadd.f32 %v4682, %v4770
      %v4772 = vpop.f32.mrf.mxu0
      %v4773 = vadd.f32 %v4684, %v4772
      %4774 = vmatmul.bf16.gmra.mxu0 %v3923
      %v4775 = vpop.f32.mrf.mxu0
      %v4776 = vadd.f32 %v4687, %v4775
      %v4777 = vpop.f32.mrf.mxu0
      %v4778 = vadd.f32 %v4689, %v4777
      %4779 = vmatmul.bf16.gmra.mxu0 %v3929
      %v4780 = vpop.f32.mrf.mxu0
      %v4781 = vadd.f32 %v4692, %v4780
      %v4782 = vpop.f32.mrf.mxu0
      %v4783 = vadd.f32 %v4694, %v4782
      %4784 = vmatmul.bf16.gmra.mxu0 %v3935
      %v4785 = vpop.f32.mrf.mxu0
      %v4786 = vadd.f32 %v4697, %v4785
      %v4787 = vpop.f32.mrf.mxu0
      %v4788 = vadd.f32 %v4699, %v4787
      %4789 = vmatmul.bf16.gmra.mxu0 %v3941
      %v4790 = vpop.f32.mrf.mxu0
      %v4791 = vadd.f32 %v4702, %v4790
      %v4792 = vpop.f32.mrf.mxu0
      %v4793 = vadd.f32 %v4704, %v4792
      %4794 = vmatmul.bf16.gmra.mxu0 %v3947
      %v4795 = vpop.f32.mrf.mxu0
      %v4796 = vadd.f32 %v4707, %v4795
      %v4797 = vpop.f32.mrf.mxu0
      %v4798 = vadd.f32 %v4709, %v4797
      %4799 = vmatmul.bf16.gmra.mxu0 %v3953
      %v4800 = vpop.f32.mrf.mxu0
      %v4801 = vadd.f32 %v4712, %v4800
      %v4802 = vpop.f32.mrf.mxu0
      %v4803 = vadd.f32 %v4714, %v4802
      %4804 = vmatmul.bf16.gmra.mxu0 %v3959
      %v4805 = vpop.f32.mrf.mxu0
      %v4806 = vadd.f32 %v4717, %v4805
      %v4807 = vpop.f32.mrf.mxu0
      %v4808 = vadd.f32 %v4719, %v4807
      %4809 = vmatmul.bf16.gmra.mxu0 %v3965
      %v4810 = vpop.f32.mrf.mxu0
      %v4811 = vadd.f32 %v4722, %v4810
      %v4812 = vpop.f32.mrf.mxu0
      %v4813 = vadd.f32 %v4724, %v4812
      %4814 = vmatmul.bf16.gmra.mxu0 %v3971
      %v4815 = vpop.f32.mrf.mxu0
      %v4816 = vadd.f32 %v4727, %v4815
      %v4817 = vpop.f32.mrf.mxu0
      %v4818 = vadd.f32 %v4729, %v4817
      %4819 = vmatmul.bf16.gmra.mxu0 %v3977
      %v4820 = vpop.f32.mrf.mxu0
      %v4821 = vadd.f32 %v4732, %v4820
      %v4822 = vpop.f32.mrf.mxu0
      %v4823 = vadd.f32 %v4734, %v4822
      %4824 = vmatmul.bf16.gmra.mxu0 %v3983
      %v4825 = vpop.f32.mrf.mxu0
      %v4826 = vadd.f32 %v4737, %v4825
      %v4827 = vpop.f32.mrf.mxu0
      %v4828 = vadd.f32 %v4739, %v4827
      %4829 = vdwg.mxu0
      %4830 = vmatpush.bf16.msra.mxu0 %v4433
      %4831 = vmatpush.bf16.msra.mxu0 %v4431
      %4832 = vmatpush.bf16.msra.mxu0 %v4429
      %4833 = vmatpush.bf16.msra.mxu0 %v4427
      %4834 = vmatpush.bf16.msra.mxu0 %v4425
      %4835 = vmatpush.bf16.msra.mxu0 %v4423
      %4836 = vmatpush.bf16.msra.mxu0 %v4421
      %4837 = vmatpush.bf16.msra.mxu0 %v4419
      %4838 = vmatmul.bf16.gmra.mxu0 %v3894
      %v4839 = vpop.f32.mrf.mxu0
      %v4840 = vadd.f32 %v4751, %v4839
      %v4841 = vpop.f32.mrf.mxu0
      %v4842 = vadd.f32 %v4753, %v4841
      %4843 = vmatmul.bf16.gmra.mxu0 %v3900
      %v4844 = vpop.f32.mrf.mxu0
      %v4845 = vadd.f32 %v4756, %v4844
      %v4846 = vpop.f32.mrf.mxu0
      %v4847 = vadd.f32 %v4758, %v4846
      %4848 = vmatmul.bf16.gmra.mxu0 %v3906
      %v4849 = vpop.f32.mrf.mxu0
      %v4850 = vadd.f32 %v4761, %v4849
      %v4851 = vpop.f32.mrf.mxu0
      %v4852 = vadd.f32 %v4763, %v4851
      %4853 = vmatmul.bf16.gmra.mxu0 %v3912
      %v4854 = vpop.f32.mrf.mxu0
      %v4855 = vadd.f32 %v4766, %v4854
      %v4856 = vpop.f32.mrf.mxu0
      %v4857 = vadd.f32 %v4768, %v4856
      %4858 = vmatmul.bf16.gmra.mxu0 %v3918
      %v4859 = vpop.f32.mrf.mxu0
      %v4860 = vadd.f32 %v4771, %v4859
      %v4861 = vpop.f32.mrf.mxu0
      %v4862 = vadd.f32 %v4773, %v4861
      %4863 = vmatmul.bf16.gmra.mxu0 %v3924
      %v4864 = vpop.f32.mrf.mxu0
      %v4865 = vadd.f32 %v4776, %v4864
      %v4866 = vpop.f32.mrf.mxu0
      %v4867 = vadd.f32 %v4778, %v4866
      %4868 = vmatmul.bf16.gmra.mxu0 %v3930
      %v4869 = vpop.f32.mrf.mxu0
      %v4870 = vadd.f32 %v4781, %v4869
      %v4871 = vpop.f32.mrf.mxu0
      %v4872 = vadd.f32 %v4783, %v4871
      %4873 = vmatmul.bf16.gmra.mxu0 %v3936
      %v4874 = vpop.f32.mrf.mxu0
      %v4875 = vadd.f32 %v4786, %v4874
      %v4876 = vpop.f32.mrf.mxu0
      %v4877 = vadd.f32 %v4788, %v4876
      %4878 = vmatmul.bf16.gmra.mxu0 %v3942
      %v4879 = vpop.f32.mrf.mxu0
      %v4880 = vadd.f32 %v4791, %v4879
      %v4881 = vpop.f32.mrf.mxu0
      %v4882 = vadd.f32 %v4793, %v4881
      %4883 = vmatmul.bf16.gmra.mxu0 %v3948
      %v4884 = vpop.f32.mrf.mxu0
      %v4885 = vadd.f32 %v4796, %v4884
      %v4886 = vpop.f32.mrf.mxu0
      %v4887 = vadd.f32 %v4798, %v4886
      %4888 = vmatmul.bf16.gmra.mxu0 %v3954
      %v4889 = vpop.f32.mrf.mxu0
      %v4890 = vadd.f32 %v4801, %v4889
      %v4891 = vpop.f32.mrf.mxu0
      %v4892 = vadd.f32 %v4803, %v4891
      %4893 = vmatmul.bf16.gmra.mxu0 %v3960
      %v4894 = vpop.f32.mrf.mxu0
      %v4895 = vadd.f32 %v4806, %v4894
      %v4896 = vpop.f32.mrf.mxu0
      %v4897 = vadd.f32 %v4808, %v4896
      %4898 = vmatmul.bf16.gmra.mxu0 %v3966
      %v4899 = vpop.f32.mrf.mxu0
      %v4900 = vadd.f32 %v4811, %v4899
      %v4901 = vpop.f32.mrf.mxu0
      %v4902 = vadd.f32 %v4813, %v4901
      %4903 = vmatmul.bf16.gmra.mxu0 %v3972
      %v4904 = vpop.f32.mrf.mxu0
      %v4905 = vadd.f32 %v4816, %v4904
      %v4906 = vpop.f32.mrf.mxu0
      %v4907 = vadd.f32 %v4818, %v4906
      %4908 = vmatmul.bf16.gmra.mxu0 %v3978
      %v4909 = vpop.f32.mrf.mxu0
      %v4910 = vadd.f32 %v4821, %v4909
      %v4911 = vpop.f32.mrf.mxu0
      %v4912 = vadd.f32 %v4823, %v4911
      %4913 = vmatmul.bf16.gmra.mxu0 %v3984
      %v4914 = vpop.f32.mrf.mxu0
      %v4915 = vadd.f32 %v4826, %v4914
      %v4916 = vpop.f32.mrf.mxu0
      %v4917 = vadd.f32 %v4828, %v4916
      %4918 = vdwg.mxu0
      %4919 = vmatpush.bf16.msra.mxu0 %v4449
      %4920 = vmatpush.bf16.msra.mxu0 %v4447
      %4921 = vmatpush.bf16.msra.mxu0 %v4445
      %4922 = vmatpush.bf16.msra.mxu0 %v4443
      %4923 = vmatpush.bf16.msra.mxu0 %v4441
      %4924 = vmatpush.bf16.msra.mxu0 %v4439
      %4925 = vmatpush.bf16.msra.mxu0 %v4437
      %4926 = vmatpush.bf16.msra.mxu0 %v4435
      %4927 = vmatmul.bf16.gmra.mxu0 %v3895
      %v4928 = vpop.f32.mrf.mxu0
      %v4929 = vadd.f32 %v4840, %v4928
      %v4930 = vpop.f32.mrf.mxu0
      %v4931 = vadd.f32 %v4842, %v4930
      %4932 = vmatmul.bf16.gmra.mxu0 %v3901
      %v4933 = vpop.f32.mrf.mxu0
      %v4934 = vadd.f32 %v4845, %v4933
      %v4935 = vpop.f32.mrf.mxu0
      %v4936 = vadd.f32 %v4847, %v4935
      %4937 = vmatmul.bf16.gmra.mxu0 %v3907
      %v4938 = vpop.f32.mrf.mxu0
      %v4939 = vadd.f32 %v4850, %v4938
      %v4940 = vpop.f32.mrf.mxu0
      %v4941 = vadd.f32 %v4852, %v4940
      %4942 = vmatmul.bf16.gmra.mxu0 %v3913
      %v4943 = vpop.f32.mrf.mxu0
      %v4944 = vadd.f32 %v4855, %v4943
      %v4945 = vpop.f32.mrf.mxu0
      %v4946 = vadd.f32 %v4857, %v4945
      %4947 = vmatmul.bf16.gmra.mxu0 %v3919
      %v4948 = vpop.f32.mrf.mxu0
      %v4949 = vadd.f32 %v4860, %v4948
      %v4950 = vpop.f32.mrf.mxu0
      %v4951 = vadd.f32 %v4862, %v4950
      %4952 = vmatmul.bf16.gmra.mxu0 %v3925
      %v4953 = vpop.f32.mrf.mxu0
      %v4954 = vadd.f32 %v4865, %v4953
      %v4955 = vpop.f32.mrf.mxu0
      %v4956 = vadd.f32 %v4867, %v4955
      %4957 = vmatmul.bf16.gmra.mxu0 %v3931
      %v4958 = vpop.f32.mrf.mxu0
      %v4959 = vadd.f32 %v4870, %v4958
      %v4960 = vpop.f32.mrf.mxu0
      %v4961 = vadd.f32 %v4872, %v4960
      %4962 = vmatmul.bf16.gmra.mxu0 %v3937
      %v4963 = vpop.f32.mrf.mxu0
      %v4964 = vadd.f32 %v4875, %v4963
      %v4965 = vpop.f32.mrf.mxu0
      %v4966 = vadd.f32 %v4877, %v4965
      %4967 = vmatmul.bf16.gmra.mxu0 %v3943
      %v4968 = vpop.f32.mrf.mxu0
      %v4969 = vadd.f32 %v4880, %v4968
      %v4970 = vpop.f32.mrf.mxu0
      %v4971 = vadd.f32 %v4882, %v4970
      %4972 = vmatmul.bf16.gmra.mxu0 %v3949
      %v4973 = vpop.f32.mrf.mxu0
      %v4974 = vadd.f32 %v4885, %v4973
      %v4975 = vpop.f32.mrf.mxu0
      %v4976 = vadd.f32 %v4887, %v4975
      %4977 = vmatmul.bf16.gmra.mxu0 %v3955
      %v4978 = vpop.f32.mrf.mxu0
      %v4979 = vadd.f32 %v4890, %v4978
      %v4980 = vpop.f32.mrf.mxu0
      %v4981 = vadd.f32 %v4892, %v4980
      %4982 = vmatmul.bf16.gmra.mxu0 %v3961
      %v4983 = vpop.f32.mrf.mxu0
      %v4984 = vadd.f32 %v4895, %v4983
      %v4985 = vpop.f32.mrf.mxu0
      %v4986 = vadd.f32 %v4897, %v4985
      %4987 = vmatmul.bf16.gmra.mxu0 %v3967
      %v4988 = vpop.f32.mrf.mxu0
      %v4989 = vadd.f32 %v4900, %v4988
      %v4990 = vpop.f32.mrf.mxu0
      %v4991 = vadd.f32 %v4902, %v4990
      %4992 = vmatmul.bf16.gmra.mxu0 %v3973
      %v4993 = vpop.f32.mrf.mxu0
      %v4994 = vadd.f32 %v4905, %v4993
      %v4995 = vpop.f32.mrf.mxu0
      %v4996 = vadd.f32 %v4907, %v4995
      %4997 = vmatmul.bf16.gmra.mxu0 %v3979
      %v4998 = vpop.f32.mrf.mxu0
      %v4999 = vadd.f32 %v4910, %v4998
      %v5000 = vpop.f32.mrf.mxu0
      %v5001 = vadd.f32 %v4912, %v5000
      %5002 = vmatmul.bf16.gmra.mxu0 %v3985
      %v5003 = vpop.f32.mrf.mxu0
      %v5004 = vadd.f32 %v4915, %v5003
      %v5005 = vpop.f32.mrf.mxu0
      %v5006 = vadd.f32 %v4917, %v5005
      %5007 = vdwg.mxu0
      %5008 = vmatpush.bf16.msra.mxu0 %v4465
      %5009 = vmatpush.bf16.msra.mxu0 %v4463
      %5010 = vmatpush.bf16.msra.mxu0 %v4461
      %5011 = vmatpush.bf16.msra.mxu0 %v4459
      %5012 = vmatpush.bf16.msra.mxu0 %v4457
      %5013 = vmatpush.bf16.msra.mxu0 %v4455
      %5014 = vmatpush.bf16.msra.mxu0 %v4453
      %5015 = vmatpush.bf16.msra.mxu0 %v4451
      %5016 = vmatmul.bf16.gmra.mxu0 %v3896
      %v5017 = vpop.f32.mrf.mxu0
      %v5018 = vadd.f32 %v4929, %v5017
      %v5019 = vpop.f32.mrf.mxu0
      %v5020 = vadd.f32 %v4931, %v5019
      %5021 = vmatmul.bf16.gmra.mxu0 %v3902
      %v5022 = vpop.f32.mrf.mxu0
      %v5023 = vadd.f32 %v4934, %v5022
      %v5024 = vpop.f32.mrf.mxu0
      %v5025 = vadd.f32 %v4936, %v5024
      %5026 = vmatmul.bf16.gmra.mxu0 %v3908
      %v5027 = vpop.f32.mrf.mxu0
      %v5028 = vadd.f32 %v4939, %v5027
      %v5029 = vpop.f32.mrf.mxu0
      %v5030 = vadd.f32 %v4941, %v5029
      %5031 = vmatmul.bf16.gmra.mxu0 %v3914
      %v5032 = vpop.f32.mrf.mxu0
      %v5033 = vadd.f32 %v4944, %v5032
      %v5034 = vpop.f32.mrf.mxu0
      %v5035 = vadd.f32 %v4946, %v5034
      %5036 = vmatmul.bf16.gmra.mxu0 %v3920
      %v5037 = vpop.f32.mrf.mxu0
      %v5038 = vadd.f32 %v4949, %v5037
      %v5039 = vpop.f32.mrf.mxu0
      %v5040 = vadd.f32 %v4951, %v5039
      %5041 = vmatmul.bf16.gmra.mxu0 %v3926
      %v5042 = vpop.f32.mrf.mxu0
      %v5043 = vadd.f32 %v4954, %v5042
      %v5044 = vpop.f32.mrf.mxu0
      %v5045 = vadd.f32 %v4956, %v5044
      %5046 = vmatmul.bf16.gmra.mxu0 %v3932
      %v5047 = vpop.f32.mrf.mxu0
      %v5048 = vadd.f32 %v4959, %v5047
      %v5049 = vpop.f32.mrf.mxu0
      %v5050 = vadd.f32 %v4961, %v5049
      %5051 = vmatmul.bf16.gmra.mxu0 %v3938
      %v5052 = vpop.f32.mrf.mxu0
      %v5053 = vadd.f32 %v4964, %v5052
      %v5054 = vpop.f32.mrf.mxu0
      %v5055 = vadd.f32 %v4966, %v5054
      %5056 = vmatmul.bf16.gmra.mxu0 %v3944
      %v5057 = vpop.f32.mrf.mxu0
      %v5058 = vadd.f32 %v4969, %v5057
      %v5059 = vpop.f32.mrf.mxu0
      %v5060 = vadd.f32 %v4971, %v5059
      %5061 = vmatmul.bf16.gmra.mxu0 %v3950
      %v5062 = vpop.f32.mrf.mxu0
      %v5063 = vadd.f32 %v4974, %v5062
      %v5064 = vpop.f32.mrf.mxu0
      %v5065 = vadd.f32 %v4976, %v5064
      %5066 = vmatmul.bf16.gmra.mxu0 %v3956
      %v5067 = vpop.f32.mrf.mxu0
      %v5068 = vadd.f32 %v4979, %v5067
      %v5069 = vpop.f32.mrf.mxu0
      %v5070 = vadd.f32 %v4981, %v5069
      %5071 = vmatmul.bf16.gmra.mxu0 %v3962
      %v5072 = vpop.f32.mrf.mxu0
      %v5073 = vadd.f32 %v4984, %v5072
      %v5074 = vpop.f32.mrf.mxu0
      %v5075 = vadd.f32 %v4986, %v5074
      %5076 = vmatmul.bf16.gmra.mxu0 %v3968
      %v5077 = vpop.f32.mrf.mxu0
      %v5078 = vadd.f32 %v4989, %v5077
      %v5079 = vpop.f32.mrf.mxu0
      %v5080 = vadd.f32 %v4991, %v5079
      %5081 = vmatmul.bf16.gmra.mxu0 %v3974
      %v5082 = vpop.f32.mrf.mxu0
      %v5083 = vadd.f32 %v4994, %v5082
      %v5084 = vpop.f32.mrf.mxu0
      %v5085 = vadd.f32 %v4996, %v5084
      %5086 = vmatmul.bf16.gmra.mxu0 %v3980
      %v5087 = vpop.f32.mrf.mxu0
      %v5088 = vadd.f32 %v4999, %v5087
      %v5089 = vpop.f32.mrf.mxu0
      %v5090 = vadd.f32 %v5001, %v5089
      %5091 = vmatmul.bf16.gmra.mxu0 %v3986
      %v5092 = vpop.f32.mrf.mxu0
      %v5093 = vadd.f32 %v5004, %v5092
      %v5094 = vpop.f32.mrf.mxu0
      %v5095 = vadd.f32 %v5006, %v5094
      %5096 = vdwg.mxu0
      %5097 = vmatpush.bf16.msra.mxu0 %v4386
      %5098 = vmatpush.bf16.msra.mxu0 %v4384
      %5099 = vmatpush.bf16.msra.mxu0 %v4382
      %5100 = vmatpush.bf16.msra.mxu0 %v4380
      %5101 = vmatpush.bf16.msra.mxu0 %v4378
      %5102 = vmatpush.bf16.msra.mxu0 %v4376
      %5103 = vmatpush.bf16.msra.mxu0 %v4374
      %5104 = vmatpush.bf16.msra.mxu0 %v4372
      %5105 = vmatmul.bf16.gmra.mxu0 %v3891
      %v5106 = vpop.f32.mrf.mxu0
      %v5107 = vadd.f32 0.0, %v5106
      %v5108 = vpop.f32.mrf.mxu0
      %v5109 = vadd.f32 0.0, %v5108
      %5110 = vmatmul.bf16.gmra.mxu0 %v3897
      %v5111 = vpop.f32.mrf.mxu0
      %v5112 = vadd.f32 0.0, %v5111
      %v5113 = vpop.f32.mrf.mxu0
      %v5114 = vadd.f32 0.0, %v5113
      %5115 = vmatmul.bf16.gmra.mxu0 %v3903
      %v5116 = vpop.f32.mrf.mxu0
      %v5117 = vadd.f32 0.0, %v5116
      %v5118 = vpop.f32.mrf.mxu0
      %v5119 = vadd.f32 0.0, %v5118
      %5120 = vmatmul.bf16.gmra.mxu0 %v3909
      %v5121 = vpop.f32.mrf.mxu0
      %v5122 = vadd.f32 0.0, %v5121
      %v5123 = vpop.f32.mrf.mxu0
      %v5124 = vadd.f32 0.0, %v5123
      %5125 = vmatmul.bf16.gmra.mxu0 %v3915
      %v5126 = vpop.f32.mrf.mxu0
      %v5127 = vadd.f32 0.0, %v5126
      %v5128 = vpop.f32.mrf.mxu0
      %v5129 = vadd.f32 0.0, %v5128
      %5130 = vmatmul.bf16.gmra.mxu0 %v3921
      %v5131 = vpop.f32.mrf.mxu0
      %v5132 = vadd.f32 0.0, %v5131
      %v5133 = vpop.f32.mrf.mxu0
      %v5134 = vadd.f32 0.0, %v5133
      %5135 = vmatmul.bf16.gmra.mxu0 %v3927
      %v5136 = vpop.f32.mrf.mxu0
      %v5137 = vadd.f32 0.0, %v5136
      %v5138 = vpop.f32.mrf.mxu0
      %v5139 = vadd.f32 0.0, %v5138
      %5140 = vmatmul.bf16.gmra.mxu0 %v3933
      %v5141 = vpop.f32.mrf.mxu0
      %v5142 = vadd.f32 0.0, %v5141
      %v5143 = vpop.f32.mrf.mxu0
      %v5144 = vadd.f32 0.0, %v5143
      %5145 = vmatmul.bf16.gmra.mxu0 %v3939
      %v5146 = vpop.f32.mrf.mxu0
      %v5147 = vadd.f32 0.0, %v5146
      %v5148 = vpop.f32.mrf.mxu0
      %v5149 = vadd.f32 0.0, %v5148
      %5150 = vmatmul.bf16.gmra.mxu0 %v3945
      %v5151 = vpop.f32.mrf.mxu0
      %v5152 = vadd.f32 0.0, %v5151
      %v5153 = vpop.f32.mrf.mxu0
      %v5154 = vadd.f32 0.0, %v5153
      %5155 = vmatmul.bf16.gmra.mxu0 %v3951
      %v5156 = vpop.f32.mrf.mxu0
      %v5157 = vadd.f32 0.0, %v5156
      %v5158 = vpop.f32.mrf.mxu0
      %v5159 = vadd.f32 0.0, %v5158
      %5160 = vmatmul.bf16.gmra.mxu0 %v3957
      %v5161 = vpop.f32.mrf.mxu0
      %v5162 = vadd.f32 0.0, %v5161
      %v5163 = vpop.f32.mrf.mxu0
      %v5164 = vadd.f32 0.0, %v5163
      %5165 = vmatmul.bf16.gmra.mxu0 %v3963
      %v5166 = vpop.f32.mrf.mxu0
      %v5167 = vadd.f32 0.0, %v5166
      %v5168 = vpop.f32.mrf.mxu0
      %v5169 = vadd.f32 0.0, %v5168
      %5170 = vmatmul.bf16.gmra.mxu0 %v3969
      %v5171 = vpop.f32.mrf.mxu0
      %v5172 = vadd.f32 0.0, %v5171
      %v5173 = vpop.f32.mrf.mxu0
      %v5174 = vadd.f32 0.0, %v5173
      %5175 = vmatmul.bf16.gmra.mxu0 %v3975
      %v5176 = vpop.f32.mrf.mxu0
      %v5177 = vadd.f32 0.0, %v5176
      %v5178 = vpop.f32.mrf.mxu0
      %v5179 = vadd.f32 0.0, %v5178
      %5180 = vmatmul.bf16.gmra.mxu0 %v3981
      %v5181 = vpop.f32.mrf.mxu0
      %v5182 = vadd.f32 0.0, %v5181
      %v5183 = vpop.f32.mrf.mxu0
      %v5184 = vadd.f32 0.0, %v5183
      %5185 = vdwg.mxu0
      %5186 = vmatpush.bf16.msra.mxu0 %v4402
      %5187 = vmatpush.bf16.msra.mxu0 %v4400
      %5188 = vmatpush.bf16.msra.mxu0 %v4398
      %5189 = vmatpush.bf16.msra.mxu0 %v4396
      %5190 = vmatpush.bf16.msra.mxu0 %v4394
      %5191 = vmatpush.bf16.msra.mxu0 %v4392
      %5192 = vmatpush.bf16.msra.mxu0 %v4390
      %5193 = vmatpush.bf16.msra.mxu0 %v4388
      %5194 = vmatmul.bf16.gmra.mxu0 %v3892
      %v5195 = vpop.f32.mrf.mxu0
      %v5196 = vadd.f32 %v5107, %v5195
      %v5197 = vpop.f32.mrf.mxu0
      %v5198 = vadd.f32 %v5109, %v5197
      %5199 = vmatmul.bf16.gmra.mxu0 %v3898
      %v5200 = vpop.f32.mrf.mxu0
      %v5201 = vadd.f32 %v5112, %v5200
      %v5202 = vpop.f32.mrf.mxu0
      %v5203 = vadd.f32 %v5114, %v5202
      %5204 = vmatmul.bf16.gmra.mxu0 %v3904
      %v5205 = vpop.f32.mrf.mxu0
      %v5206 = vadd.f32 %v5117, %v5205
      %v5207 = vpop.f32.mrf.mxu0
      %v5208 = vadd.f32 %v5119, %v5207
      %5209 = vmatmul.bf16.gmra.mxu0 %v3910
      %v5210 = vpop.f32.mrf.mxu0
      %v5211 = vadd.f32 %v5122, %v5210
      %v5212 = vpop.f32.mrf.mxu0
      %v5213 = vadd.f32 %v5124, %v5212
      %5214 = vmatmul.bf16.gmra.mxu0 %v3916
      %v5215 = vpop.f32.mrf.mxu0
      %v5216 = vadd.f32 %v5127, %v5215
      %v5217 = vpop.f32.mrf.mxu0
      %v5218 = vadd.f32 %v5129, %v5217
      %5219 = vmatmul.bf16.gmra.mxu0 %v3922
      %v5220 = vpop.f32.mrf.mxu0
      %v5221 = vadd.f32 %v5132, %v5220
      %v5222 = vpop.f32.mrf.mxu0
      %v5223 = vadd.f32 %v5134, %v5222
      %5224 = vmatmul.bf16.gmra.mxu0 %v3928
      %v5225 = vpop.f32.mrf.mxu0
      %v5226 = vadd.f32 %v5137, %v5225
      %v5227 = vpop.f32.mrf.mxu0
      %v5228 = vadd.f32 %v5139, %v5227
      %5229 = vmatmul.bf16.gmra.mxu0 %v3934
      %v5230 = vpop.f32.mrf.mxu0
      %v5231 = vadd.f32 %v5142, %v5230
      %v5232 = vpop.f32.mrf.mxu0
      %v5233 = vadd.f32 %v5144, %v5232
      %5234 = vmatmul.bf16.gmra.mxu0 %v3940
      %v5235 = vpop.f32.mrf.mxu0
      %v5236 = vadd.f32 %v5147, %v5235
      %v5237 = vpop.f32.mrf.mxu0
      %v5238 = vadd.f32 %v5149, %v5237
      %5239 = vmatmul.bf16.gmra.mxu0 %v3946
      %v5240 = vpop.f32.mrf.mxu0
      %v5241 = vadd.f32 %v5152, %v5240
      %v5242 = vpop.f32.mrf.mxu0
      %v5243 = vadd.f32 %v5154, %v5242
      %5244 = vmatmul.bf16.gmra.mxu0 %v3952
      %v5245 = vpop.f32.mrf.mxu0
      %v5246 = vadd.f32 %v5157, %v5245
      %v5247 = vpop.f32.mrf.mxu0
      %v5248 = vadd.f32 %v5159, %v5247
      %5249 = vmatmul.bf16.gmra.mxu0 %v3958
      %v5250 = vpop.f32.mrf.mxu0
      %v5251 = vadd.f32 %v5162, %v5250
      %v5252 = vpop.f32.mrf.mxu0
      %v5253 = vadd.f32 %v5164, %v5252
      %5254 = vmatmul.bf16.gmra.mxu0 %v3964
      %v5255 = vpop.f32.mrf.mxu0
      %v5256 = vadd.f32 %v5167, %v5255
      %v5257 = vpop.f32.mrf.mxu0
      %v5258 = vadd.f32 %v5169, %v5257
      %5259 = vmatmul.bf16.gmra.mxu0 %v3970
      %v5260 = vpop.f32.mrf.mxu0
      %v5261 = vadd.f32 %v5172, %v5260
      %v5262 = vpop.f32.mrf.mxu0
      %v5263 = vadd.f32 %v5174, %v5262
      %5264 = vmatmul.bf16.gmra.mxu0 %v3976
      %v5265 = vpop.f32.mrf.mxu0
      %v5266 = vadd.f32 %v5177, %v5265
      %v5267 = vpop.f32.mrf.mxu0
      %v5268 = vadd.f32 %v5179, %v5267
      %5269 = vmatmul.bf16.gmra.mxu0 %v3982
      %v5270 = vpop.f32.mrf.mxu0
      %v5271 = vadd.f32 %v5182, %v5270
      %v5272 = vpop.f32.mrf.mxu0
      %v5273 = vadd.f32 %v5184, %v5272
      %5274 = vdwg.mxu0
      %5275 = vmatpush.bf16.msra.mxu0 %v4418
      %5276 = vmatpush.bf16.msra.mxu0 %v4416
      %5277 = vmatpush.bf16.msra.mxu0 %v4414
      %5278 = vmatpush.bf16.msra.mxu0 %v4412
      %5279 = vmatpush.bf16.msra.mxu0 %v4410
      %5280 = vmatpush.bf16.msra.mxu0 %v4408
      %5281 = vmatpush.bf16.msra.mxu0 %v4406
      %5282 = vmatpush.bf16.msra.mxu0 %v4404
      %5283 = vmatmul.bf16.gmra.mxu0 %v3893
      %v5284 = vpop.f32.mrf.mxu0
      %v5285 = vadd.f32 %v5196, %v5284
      %v5286 = vpop.f32.mrf.mxu0
      %v5287 = vadd.f32 %v5198, %v5286
      %5288 = vmatmul.bf16.gmra.mxu0 %v3899
      %v5289 = vpop.f32.mrf.mxu0
      %v5290 = vadd.f32 %v5201, %v5289
      %v5291 = vpop.f32.mrf.mxu0
      %v5292 = vadd.f32 %v5203, %v5291
      %5293 = vmatmul.bf16.gmra.mxu0 %v3905
      %v5294 = vpop.f32.mrf.mxu0
      %v5295 = vadd.f32 %v5206, %v5294
      %v5296 = vpop.f32.mrf.mxu0
      %v5297 = vadd.f32 %v5208, %v5296
      %5298 = vmatmul.bf16.gmra.mxu0 %v3911
      %v5299 = vpop.f32.mrf.mxu0
      %v5300 = vadd.f32 %v5211, %v5299
      %v5301 = vpop.f32.mrf.mxu0
      %v5302 = vadd.f32 %v5213, %v5301
      %5303 = vmatmul.bf16.gmra.mxu0 %v3917
      %v5304 = vpop.f32.mrf.mxu0
      %v5305 = vadd.f32 %v5216, %v5304
      %v5306 = vpop.f32.mrf.mxu0
      %v5307 = vadd.f32 %v5218, %v5306
      %5308 = vmatmul.bf16.gmra.mxu0 %v3923
      %v5309 = vpop.f32.mrf.mxu0
      %v5310 = vadd.f32 %v5221, %v5309
      %v5311 = vpop.f32.mrf.mxu0
      %v5312 = vadd.f32 %v5223, %v5311
      %5313 = vmatmul.bf16.gmra.mxu0 %v3929
      %v5314 = vpop.f32.mrf.mxu0
      %v5315 = vadd.f32 %v5226, %v5314
      %v5316 = vpop.f32.mrf.mxu0
      %v5317 = vadd.f32 %v5228, %v5316
      %5318 = vmatmul.bf16.gmra.mxu0 %v3935
      %v5319 = vpop.f32.mrf.mxu0
      %v5320 = vadd.f32 %v5231, %v5319
      %v5321 = vpop.f32.mrf.mxu0
      %v5322 = vadd.f32 %v5233, %v5321
      %5323 = vmatmul.bf16.gmra.mxu0 %v3941
      %v5324 = vpop.f32.mrf.mxu0
      %v5325 = vadd.f32 %v5236, %v5324
      %v5326 = vpop.f32.mrf.mxu0
      %v5327 = vadd.f32 %v5238, %v5326
      %5328 = vmatmul.bf16.gmra.mxu0 %v3947
      %v5329 = vpop.f32.mrf.mxu0
      %v5330 = vadd.f32 %v5241, %v5329
      %v5331 = vpop.f32.mrf.mxu0
      %v5332 = vadd.f32 %v5243, %v5331
      %5333 = vmatmul.bf16.gmra.mxu0 %v3953
      %v5334 = vpop.f32.mrf.mxu0
      %v5335 = vadd.f32 %v5246, %v5334
      %v5336 = vpop.f32.mrf.mxu0
      %v5337 = vadd.f32 %v5248, %v5336
      %5338 = vmatmul.bf16.gmra.mxu0 %v3959
      %v5339 = vpop.f32.mrf.mxu0
      %v5340 = vadd.f32 %v5251, %v5339
      %v5341 = vpop.f32.mrf.mxu0
      %v5342 = vadd.f32 %v5253, %v5341
      %5343 = vmatmul.bf16.gmra.mxu0 %v3965
      %v5344 = vpop.f32.mrf.mxu0
      %v5345 = vadd.f32 %v5256, %v5344
      %v5346 = vpop.f32.mrf.mxu0
      %v5347 = vadd.f32 %v5258, %v5346
      %5348 = vmatmul.bf16.gmra.mxu0 %v3971
      %v5349 = vpop.f32.mrf.mxu0
      %v5350 = vadd.f32 %v5261, %v5349
      %v5351 = vpop.f32.mrf.mxu0
      %v5352 = vadd.f32 %v5263, %v5351
      %5353 = vmatmul.bf16.gmra.mxu0 %v3977
      %v5354 = vpop.f32.mrf.mxu0
      %v5355 = vadd.f32 %v5266, %v5354
      %v5356 = vpop.f32.mrf.mxu0
      %v5357 = vadd.f32 %v5268, %v5356
      %5358 = vmatmul.bf16.gmra.mxu0 %v3983
      %v5359 = vpop.f32.mrf.mxu0
      %v5360 = vadd.f32 %v5271, %v5359
      %v5361 = vpop.f32.mrf.mxu0
      %v5362 = vadd.f32 %v5273, %v5361
      %5363 = vdwg.mxu0
      %5364 = vmatpush.bf16.msra.mxu0 %v4434
      %5365 = vmatpush.bf16.msra.mxu0 %v4432
      %5366 = vmatpush.bf16.msra.mxu0 %v4430
      %5367 = vmatpush.bf16.msra.mxu0 %v4428
      %5368 = vmatpush.bf16.msra.mxu0 %v4426
      %5369 = vmatpush.bf16.msra.mxu0 %v4424
      %5370 = vmatpush.bf16.msra.mxu0 %v4422
      %5371 = vmatpush.bf16.msra.mxu0 %v4420
      %5372 = vmatmul.bf16.gmra.mxu0 %v3894
      %v5373 = vpop.f32.mrf.mxu0
      %v5374 = vadd.f32 %v5285, %v5373
      %v5375 = vpop.f32.mrf.mxu0
      %v5376 = vadd.f32 %v5287, %v5375
      %5377 = vmatmul.bf16.gmra.mxu0 %v3900
      %v5378 = vpop.f32.mrf.mxu0
      %v5379 = vadd.f32 %v5290, %v5378
      %v5380 = vpop.f32.mrf.mxu0
      %v5381 = vadd.f32 %v5292, %v5380
      %5382 = vmatmul.bf16.gmra.mxu0 %v3906
      %v5383 = vpop.f32.mrf.mxu0
      %v5384 = vadd.f32 %v5295, %v5383
      %v5385 = vpop.f32.mrf.mxu0
      %v5386 = vadd.f32 %v5297, %v5385
      %5387 = vmatmul.bf16.gmra.mxu0 %v3912
      %v5388 = vpop.f32.mrf.mxu0
      %v5389 = vadd.f32 %v5300, %v5388
      %v5390 = vpop.f32.mrf.mxu0
      %v5391 = vadd.f32 %v5302, %v5390
      %5392 = vmatmul.bf16.gmra.mxu0 %v3918
      %v5393 = vpop.f32.mrf.mxu0
      %v5394 = vadd.f32 %v5305, %v5393
      %v5395 = vpop.f32.mrf.mxu0
      %v5396 = vadd.f32 %v5307, %v5395
      %5397 = vmatmul.bf16.gmra.mxu0 %v3924
      %v5398 = vpop.f32.mrf.mxu0
      %v5399 = vadd.f32 %v5310, %v5398
      %v5400 = vpop.f32.mrf.mxu0
      %v5401 = vadd.f32 %v5312, %v5400
      %5402 = vmatmul.bf16.gmra.mxu0 %v3930
      %v5403 = vpop.f32.mrf.mxu0
      %v5404 = vadd.f32 %v5315, %v5403
      %v5405 = vpop.f32.mrf.mxu0
      %v5406 = vadd.f32 %v5317, %v5405
      %5407 = vmatmul.bf16.gmra.mxu0 %v3936
      %v5408 = vpop.f32.mrf.mxu0
      %v5409 = vadd.f32 %v5320, %v5408
      %v5410 = vpop.f32.mrf.mxu0
      %v5411 = vadd.f32 %v5322, %v5410
      %5412 = vmatmul.bf16.gmra.mxu0 %v3942
      %v5413 = vpop.f32.mrf.mxu0
      %v5414 = vadd.f32 %v5325, %v5413
      %v5415 = vpop.f32.mrf.mxu0
      %v5416 = vadd.f32 %v5327, %v5415
      %5417 = vmatmul.bf16.gmra.mxu0 %v3948
      %v5418 = vpop.f32.mrf.mxu0
      %v5419 = vadd.f32 %v5330, %v5418
      %v5420 = vpop.f32.mrf.mxu0
      %v5421 = vadd.f32 %v5332, %v5420
      %5422 = vmatmul.bf16.gmra.mxu0 %v3954
      %v5423 = vpop.f32.mrf.mxu0
      %v5424 = vadd.f32 %v5335, %v5423
      %v5425 = vpop.f32.mrf.mxu0
      %v5426 = vadd.f32 %v5337, %v5425
      %5427 = vmatmul.bf16.gmra.mxu0 %v3960
      %v5428 = vpop.f32.mrf.mxu0
      %v5429 = vadd.f32 %v5340, %v5428
      %v5430 = vpop.f32.mrf.mxu0
      %v5431 = vadd.f32 %v5342, %v5430
      %5432 = vmatmul.bf16.gmra.mxu0 %v3966
      %v5433 = vpop.f32.mrf.mxu0
      %v5434 = vadd.f32 %v5345, %v5433
      %v5435 = vpop.f32.mrf.mxu0
      %v5436 = vadd.f32 %v5347, %v5435
      %5437 = vmatmul.bf16.gmra.mxu0 %v3972
      %v5438 = vpop.f32.mrf.mxu0
      %v5439 = vadd.f32 %v5350, %v5438
      %v5440 = vpop.f32.mrf.mxu0
      %v5441 = vadd.f32 %v5352, %v5440
      %5442 = vmatmul.bf16.gmra.mxu0 %v3978
      %v5443 = vpop.f32.mrf.mxu0
      %v5444 = vadd.f32 %v5355, %v5443
      %v5445 = vpop.f32.mrf.mxu0
      %v5446 = vadd.f32 %v5357, %v5445
      %5447 = vmatmul.bf16.gmra.mxu0 %v3984
      %v5448 = vpop.f32.mrf.mxu0
      %v5449 = vadd.f32 %v5360, %v5448
      %v5450 = vpop.f32.mrf.mxu0
      %v5451 = vadd.f32 %v5362, %v5450
      %5452 = vdwg.mxu0
      %5453 = vmatpush.bf16.msra.mxu0 %v4450
      %5454 = vmatpush.bf16.msra.mxu0 %v4448
      %5455 = vmatpush.bf16.msra.mxu0 %v4446
      %5456 = vmatpush.bf16.msra.mxu0 %v4444
      %5457 = vmatpush.bf16.msra.mxu0 %v4442
      %5458 = vmatpush.bf16.msra.mxu0 %v4440
      %5459 = vmatpush.bf16.msra.mxu0 %v4438
      %5460 = vmatpush.bf16.msra.mxu0 %v4436
      %5461 = vmatmul.bf16.gmra.mxu0 %v3895
      %v5462 = vpop.f32.mrf.mxu0
      %v5463 = vadd.f32 %v5374, %v5462
      %v5464 = vpop.f32.mrf.mxu0
      %v5465 = vadd.f32 %v5376, %v5464
      %5466 = vmatmul.bf16.gmra.mxu0 %v3901
      %v5467 = vpop.f32.mrf.mxu0
      %v5468 = vadd.f32 %v5379, %v5467
      %v5469 = vpop.f32.mrf.mxu0
      %v5470 = vadd.f32 %v5381, %v5469
      %5471 = vmatmul.bf16.gmra.mxu0 %v3907
      %v5472 = vpop.f32.mrf.mxu0
      %v5473 = vadd.f32 %v5384, %v5472
      %v5474 = vpop.f32.mrf.mxu0
      %v5475 = vadd.f32 %v5386, %v5474
      %5476 = vmatmul.bf16.gmra.mxu0 %v3913
      %v5477 = vpop.f32.mrf.mxu0
      %v5478 = vadd.f32 %v5389, %v5477
      %v5479 = vpop.f32.mrf.mxu0
      %v5480 = vadd.f32 %v5391, %v5479
      %5481 = vmatmul.bf16.gmra.mxu0 %v3919
      %v5482 = vpop.f32.mrf.mxu0
      %v5483 = vadd.f32 %v5394, %v5482
      %v5484 = vpop.f32.mrf.mxu0
      %v5485 = vadd.f32 %v5396, %v5484
      %5486 = vmatmul.bf16.gmra.mxu0 %v3925
      %v5487 = vpop.f32.mrf.mxu0
      %v5488 = vadd.f32 %v5399, %v5487
      %v5489 = vpop.f32.mrf.mxu0
      %v5490 = vadd.f32 %v5401, %v5489
      %5491 = vmatmul.bf16.gmra.mxu0 %v3931
      %v5492 = vpop.f32.mrf.mxu0
      %v5493 = vadd.f32 %v5404, %v5492
      %v5494 = vpop.f32.mrf.mxu0
      %v5495 = vadd.f32 %v5406, %v5494
      %5496 = vmatmul.bf16.gmra.mxu0 %v3937
      %v5497 = vpop.f32.mrf.mxu0
      %v5498 = vadd.f32 %v5409, %v5497
      %v5499 = vpop.f32.mrf.mxu0
      %v5500 = vadd.f32 %v5411, %v5499
      %5501 = vmatmul.bf16.gmra.mxu0 %v3943
      %v5502 = vpop.f32.mrf.mxu0
      %v5503 = vadd.f32 %v5414, %v5502
      %v5504 = vpop.f32.mrf.mxu0
      %v5505 = vadd.f32 %v5416, %v5504
      %5506 = vmatmul.bf16.gmra.mxu0 %v3949
      %v5507 = vpop.f32.mrf.mxu0
      %v5508 = vadd.f32 %v5419, %v5507
      %v5509 = vpop.f32.mrf.mxu0
      %v5510 = vadd.f32 %v5421, %v5509
      %5511 = vmatmul.bf16.gmra.mxu0 %v3955
      %v5512 = vpop.f32.mrf.mxu0
      %v5513 = vadd.f32 %v5424, %v5512
      %v5514 = vpop.f32.mrf.mxu0
      %v5515 = vadd.f32 %v5426, %v5514
      %5516 = vmatmul.bf16.gmra.mxu0 %v3961
      %v5517 = vpop.f32.mrf.mxu0
      %v5518 = vadd.f32 %v5429, %v5517
      %v5519 = vpop.f32.mrf.mxu0
      %v5520 = vadd.f32 %v5431, %v5519
      %5521 = vmatmul.bf16.gmra.mxu0 %v3967
      %v5522 = vpop.f32.mrf.mxu0
      %v5523 = vadd.f32 %v5434, %v5522
      %v5524 = vpop.f32.mrf.mxu0
      %v5525 = vadd.f32 %v5436, %v5524
      %5526 = vmatmul.bf16.gmra.mxu0 %v3973
      %v5527 = vpop.f32.mrf.mxu0
      %v5528 = vadd.f32 %v5439, %v5527
      %v5529 = vpop.f32.mrf.mxu0
      %v5530 = vadd.f32 %v5441, %v5529
      %5531 = vmatmul.bf16.gmra.mxu0 %v3979
      %v5532 = vpop.f32.mrf.mxu0
      %v5533 = vadd.f32 %v5444, %v5532
      %v5534 = vpop.f32.mrf.mxu0
      %v5535 = vadd.f32 %v5446, %v5534
      %5536 = vmatmul.bf16.gmra.mxu0 %v3985
      %v5537 = vpop.f32.mrf.mxu0
      %v5538 = vadd.f32 %v5449, %v5537
      %v5539 = vpop.f32.mrf.mxu0
      %v5540 = vadd.f32 %v5451, %v5539
      %5541 = vdwg.mxu0
      %5542 = vmatpush.bf16.msra.mxu0 %v4466
      %5543 = vmatpush.bf16.msra.mxu0 %v4464
      %5544 = vmatpush.bf16.msra.mxu0 %v4462
      %5545 = vmatpush.bf16.msra.mxu0 %v4460
      %5546 = vmatpush.bf16.msra.mxu0 %v4458
      %5547 = vmatpush.bf16.msra.mxu0 %v4456
      %5548 = vmatpush.bf16.msra.mxu0 %v4454
      %5549 = vmatpush.bf16.msra.mxu0 %v4452
      %5550 = vmatmul.bf16.gmra.mxu0 %v3896
      %v5551 = vpop.f32.mrf.mxu0
      %v5552 = vadd.f32 %v5463, %v5551
      %v5553 = vpop.f32.mrf.mxu0
      %v5554 = vadd.f32 %v5465, %v5553
      %5555 = vmatmul.bf16.gmra.mxu0 %v3902
      %v5556 = vpop.f32.mrf.mxu0
      %v5557 = vadd.f32 %v5468, %v5556
      %v5558 = vpop.f32.mrf.mxu0
      %v5559 = vadd.f32 %v5470, %v5558
      %5560 = vmatmul.bf16.gmra.mxu0 %v3908
      %v5561 = vpop.f32.mrf.mxu0
      %v5562 = vadd.f32 %v5473, %v5561
      %v5563 = vpop.f32.mrf.mxu0
      %v5564 = vadd.f32 %v5475, %v5563
      %5565 = vmatmul.bf16.gmra.mxu0 %v3914
      %v5566 = vpop.f32.mrf.mxu0
      %v5567 = vadd.f32 %v5478, %v5566
      %v5568 = vpop.f32.mrf.mxu0
      %v5569 = vadd.f32 %v5480, %v5568
      %5570 = vmatmul.bf16.gmra.mxu0 %v3920
      %v5571 = vpop.f32.mrf.mxu0
      %v5572 = vadd.f32 %v5483, %v5571
      %v5573 = vpop.f32.mrf.mxu0
      %v5574 = vadd.f32 %v5485, %v5573
      %5575 = vmatmul.bf16.gmra.mxu0 %v3926
      %v5576 = vpop.f32.mrf.mxu0
      %v5577 = vadd.f32 %v5488, %v5576
      %v5578 = vpop.f32.mrf.mxu0
      %v5579 = vadd.f32 %v5490, %v5578
      %5580 = vmatmul.bf16.gmra.mxu0 %v3932
      %v5581 = vpop.f32.mrf.mxu0
      %v5582 = vadd.f32 %v5493, %v5581
      %v5583 = vpop.f32.mrf.mxu0
      %v5584 = vadd.f32 %v5495, %v5583
      %5585 = vmatmul.bf16.gmra.mxu0 %v3938
      %v5586 = vpop.f32.mrf.mxu0
      %v5587 = vadd.f32 %v5498, %v5586
      %v5588 = vpop.f32.mrf.mxu0
      %v5589 = vadd.f32 %v5500, %v5588
      %5590 = vmatmul.bf16.gmra.mxu0 %v3944
      %v5591 = vpop.f32.mrf.mxu0
      %v5592 = vadd.f32 %v5503, %v5591
      %v5593 = vpop.f32.mrf.mxu0
      %v5594 = vadd.f32 %v5505, %v5593
      %5595 = vmatmul.bf16.gmra.mxu0 %v3950
      %v5596 = vpop.f32.mrf.mxu0
      %v5597 = vadd.f32 %v5508, %v5596
      %v5598 = vpop.f32.mrf.mxu0
      %v5599 = vadd.f32 %v5510, %v5598
      %5600 = vmatmul.bf16.gmra.mxu0 %v3956
      %v5601 = vpop.f32.mrf.mxu0
      %v5602 = vadd.f32 %v5513, %v5601
      %v5603 = vpop.f32.mrf.mxu0
      %v5604 = vadd.f32 %v5515, %v5603
      %5605 = vmatmul.bf16.gmra.mxu0 %v3962
      %v5606 = vpop.f32.mrf.mxu0
      %v5607 = vadd.f32 %v5518, %v5606
      %v5608 = vpop.f32.mrf.mxu0
      %v5609 = vadd.f32 %v5520, %v5608
      %5610 = vmatmul.bf16.gmra.mxu0 %v3968
      %v5611 = vpop.f32.mrf.mxu0
      %v5612 = vadd.f32 %v5523, %v5611
      %v5613 = vpop.f32.mrf.mxu0
      %v5614 = vadd.f32 %v5525, %v5613
      %5615 = vmatmul.bf16.gmra.mxu0 %v3974
      %v5616 = vpop.f32.mrf.mxu0
      %v5617 = vadd.f32 %v5528, %v5616
      %v5618 = vpop.f32.mrf.mxu0
      %v5619 = vadd.f32 %v5530, %v5618
      %5620 = vmatmul.bf16.gmra.mxu0 %v3980
      %v5621 = vpop.f32.mrf.mxu0
      %v5622 = vadd.f32 %v5533, %v5621
      %v5623 = vpop.f32.mrf.mxu0
      %v5624 = vadd.f32 %v5535, %v5623
      %5625 = vmatmul.bf16.gmra.mxu0 %v3986
      %v5626 = vpop.f32.mrf.mxu0
      %v5627 = vadd.f32 %v5538, %v5626
      %v5628 = vpop.f32.mrf.mxu0
      %v5629 = vadd.f32 %v5540, %v5628
      %5630 = vdwg.mxu0
      %s5631 = scalar_lea.vmem %s5, 2
      %v5632 = vld [vmem:[%s5631] ss:$4 sm:$0x3]
      %v5634 = vperm.slane %v5632, 0
      %v5635 = vperm.slane %v5632, 1
      %v5638 = vmul.f32 %v5018, %v5634
      %v5639 = vmul.f32 %v5552, %v5635
      %v5640 = vmul.f32 %v5020, %v5634
      %v5641 = vmul.f32 %v5554, %v5635
      %v5642 = vmul.f32 %v5023, %v5634
      %v5643 = vmul.f32 %v5557, %v5635
      %v5644 = vmul.f32 %v5025, %v5634
      %v5645 = vmul.f32 %v5559, %v5635
      %v5646 = vmul.f32 %v5028, %v5634
      %v5647 = vmul.f32 %v5562, %v5635
      %v5648 = vmul.f32 %v5030, %v5634
      %v5649 = vmul.f32 %v5564, %v5635
      %v5650 = vmul.f32 %v5033, %v5634
      %v5651 = vmul.f32 %v5567, %v5635
      %v5652 = vmul.f32 %v5035, %v5634
      %v5653 = vmul.f32 %v5569, %v5635
      %v5654 = vmul.f32 %v5038, %v5634
      %v5655 = vmul.f32 %v5572, %v5635
      %v5656 = vmul.f32 %v5040, %v5634
      %v5657 = vmul.f32 %v5574, %v5635
      %v5658 = vmul.f32 %v5043, %v5634
      %v5659 = vmul.f32 %v5577, %v5635
      %v5660 = vmul.f32 %v5045, %v5634
      %v5661 = vmul.f32 %v5579, %v5635
      %v5662 = vmul.f32 %v5048, %v5634
      %v5663 = vmul.f32 %v5582, %v5635
      %v5664 = vmul.f32 %v5050, %v5634
      %v5665 = vmul.f32 %v5584, %v5635
      %v5666 = vmul.f32 %v5053, %v5634
      %v5667 = vmul.f32 %v5587, %v5635
      %v5668 = vmul.f32 %v5055, %v5634
      %v5669 = vmul.f32 %v5589, %v5635
      %v5670 = vmul.f32 %v5058, %v5634
      %v5671 = vmul.f32 %v5592, %v5635
      %v5672 = vmul.f32 %v5060, %v5634
      %v5673 = vmul.f32 %v5594, %v5635
      %v5674 = vmul.f32 %v5063, %v5634
      %v5675 = vmul.f32 %v5597, %v5635
      %v5676 = vmul.f32 %v5065, %v5634
      %v5677 = vmul.f32 %v5599, %v5635
      %v5678 = vmul.f32 %v5068, %v5634
      %v5679 = vmul.f32 %v5602, %v5635
      %v5680 = vmul.f32 %v5070, %v5634
      %v5681 = vmul.f32 %v5604, %v5635
      %v5682 = vmul.f32 %v5073, %v5634
      %v5683 = vmul.f32 %v5607, %v5635
      %v5684 = vmul.f32 %v5075, %v5634
      %v5685 = vmul.f32 %v5609, %v5635
      %v5686 = vmul.f32 %v5078, %v5634
      %v5687 = vmul.f32 %v5612, %v5635
      %v5688 = vmul.f32 %v5080, %v5634
      %v5689 = vmul.f32 %v5614, %v5635
      %v5690 = vmul.f32 %v5083, %v5634
      %v5691 = vmul.f32 %v5617, %v5635
      %v5692 = vmul.f32 %v5085, %v5634
      %v5693 = vmul.f32 %v5619, %v5635
      %v5694 = vmul.f32 %v5088, %v5634
      %v5695 = vmul.f32 %v5622, %v5635
      %v5696 = vmul.f32 %v5090, %v5634
      %v5697 = vmul.f32 %v5624, %v5635
      %v5698 = vmul.f32 %v5093, %v5634
      %v5699 = vmul.f32 %v5627, %v5635
      %v5700 = vmul.f32 %v5095, %v5634
      %v5701 = vmul.f32 %v5629, %v5635
      %s5702 = scalar_lea.vmem %s5, 3
      %v5703 = vld [vmem:[%s5702] ss:$4 sm:$0x3]
      %v5705 = vperm.slane %v5703, 0
      %v5706 = vperm.slane %v5703, 1
      %v5709 = vadd.f32 %v5638, %v5705
      %v5710 = vadd.f32 %v5639, %v5706
      %v5711 = vadd.f32 %v5640, %v5705
      %v5712 = vadd.f32 %v5641, %v5706
      %v5713 = vadd.f32 %v5642, %v5705
      %v5714 = vadd.f32 %v5643, %v5706
      %v5715 = vadd.f32 %v5644, %v5705
      %v5716 = vadd.f32 %v5645, %v5706
      %v5717 = vadd.f32 %v5646, %v5705
      %v5718 = vadd.f32 %v5647, %v5706
      %v5719 = vadd.f32 %v5648, %v5705
      %v5720 = vadd.f32 %v5649, %v5706
      %v5721 = vadd.f32 %v5650, %v5705
      %v5722 = vadd.f32 %v5651, %v5706
      %v5723 = vadd.f32 %v5652, %v5705
      %v5724 = vadd.f32 %v5653, %v5706
      %v5725 = vadd.f32 %v5654, %v5705
      %v5726 = vadd.f32 %v5655, %v5706
      %v5727 = vadd.f32 %v5656, %v5705
      %v5728 = vadd.f32 %v5657, %v5706
      %v5729 = vadd.f32 %v5658, %v5705
      %v5730 = vadd.f32 %v5659, %v5706
      %v5731 = vadd.f32 %v5660, %v5705
      %v5732 = vadd.f32 %v5661, %v5706
      %v5733 = vadd.f32 %v5662, %v5705
      %v5734 = vadd.f32 %v5663, %v5706
      %v5735 = vadd.f32 %v5664, %v5705
      %v5736 = vadd.f32 %v5665, %v5706
      %v5737 = vadd.f32 %v5666, %v5705
      %v5738 = vadd.f32 %v5667, %v5706
      %v5739 = vadd.f32 %v5668, %v5705
      %v5740 = vadd.f32 %v5669, %v5706
      %v5741 = vadd.f32 %v5670, %v5705
      %v5742 = vadd.f32 %v5671, %v5706
      %v5743 = vadd.f32 %v5672, %v5705
      %v5744 = vadd.f32 %v5673, %v5706
      %v5745 = vadd.f32 %v5674, %v5705
      %v5746 = vadd.f32 %v5675, %v5706
      %v5747 = vadd.f32 %v5676, %v5705
      %v5748 = vadd.f32 %v5677, %v5706
      %v5749 = vadd.f32 %v5678, %v5705
      %v5750 = vadd.f32 %v5679, %v5706
      %v5751 = vadd.f32 %v5680, %v5705
      %v5752 = vadd.f32 %v5681, %v5706
      %v5753 = vadd.f32 %v5682, %v5705
      %v5754 = vadd.f32 %v5683, %v5706
      %v5755 = vadd.f32 %v5684, %v5705
      %v5756 = vadd.f32 %v5685, %v5706
      %v5757 = vadd.f32 %v5686, %v5705
      %v5758 = vadd.f32 %v5687, %v5706
      %v5759 = vadd.f32 %v5688, %v5705
      %v5760 = vadd.f32 %v5689, %v5706
      %v5761 = vadd.f32 %v5690, %v5705
      %v5762 = vadd.f32 %v5691, %v5706
      %v5763 = vadd.f32 %v5692, %v5705
      %v5764 = vadd.f32 %v5693, %v5706
      %v5765 = vadd.f32 %v5694, %v5705
      %v5766 = vadd.f32 %v5695, %v5706
      %v5767 = vadd.f32 %v5696, %v5705
      %v5768 = vadd.f32 %v5697, %v5706
      %v5769 = vadd.f32 %v5698, %v5705
      %v5770 = vadd.f32 %v5699, %v5706
      %v5771 = vadd.f32 %v5700, %v5705
      %v5772 = vadd.f32 %v5701, %v5706
      %5773 = vst [vmem:[%s258] sm:$0xff] %v5709
      %5774 = vst.msk [vmem:[%s258 + $0x8] sm:$0xff] %vm574, %v5710
      %5775 = vst [vmem:[%s258 + $0x10] sm:$0xff] %v5711
      %5776 = vst.msk [vmem:[%s258 + $0x18] sm:$0xff] %vm574, %v5712
      %5777 = vst [vmem:[%s258 + $0x20] sm:$0xff] %v5713
      %5778 = vst.msk [vmem:[%s258 + $0x28] sm:$0xff] %vm574, %v5714
      %5779 = vst [vmem:[%s258 + $0x30] sm:$0xff] %v5715
      %5780 = vst.msk [vmem:[%s258 + $0x38] sm:$0xff] %vm574, %v5716
      %5781 = vst [vmem:[%s258 + $0x40] sm:$0xff] %v5717
      %5782 = vst.msk [vmem:[%s258 + $0x48] sm:$0xff] %vm574, %v5718
      %5783 = vst [vmem:[%s258 + $0x50] sm:$0xff] %v5719
      %5784 = vst.msk [vmem:[%s258 + $0x58] sm:$0xff] %vm574, %v5720
      %5785 = vst [vmem:[%s258 + $0x60] sm:$0xff] %v5721
      %5786 = vst.msk [vmem:[%s258 + $0x68] sm:$0xff] %vm574, %v5722
      %5787 = vst [vmem:[%s258 + $0x70] sm:$0xff] %v5723
      %5788 = vst.msk [vmem:[%s258 + $0x78] sm:$0xff] %vm574, %v5724
      %5789 = vst [vmem:[%s258 + $0x80] sm:$0xff] %v5725
      %5790 = vst.msk [vmem:[%s258 + $0x88] sm:$0xff] %vm574, %v5726
      %5791 = vst [vmem:[%s258 + $0x90] sm:$0xff] %v5727
      %5792 = vst.msk [vmem:[%s258 + $0x98] sm:$0xff] %vm574, %v5728
      %5793 = vst [vmem:[%s258 + $0xa0] sm:$0xff] %v5729
      %5794 = vst.msk [vmem:[%s258 + $0xa8] sm:$0xff] %vm574, %v5730
      %5795 = vst [vmem:[%s258 + $0xb0] sm:$0xff] %v5731
      %5796 = vst.msk [vmem:[%s258 + $0xb8] sm:$0xff] %vm574, %v5732
      %5797 = vst [vmem:[%s258 + $0xc0] sm:$0xff] %v5733
      %5798 = vst.msk [vmem:[%s258 + $0xc8] sm:$0xff] %vm574, %v5734
      %5799 = vst [vmem:[%s258 + $0xd0] sm:$0xff] %v5735
      %5800 = vst.msk [vmem:[%s258 + $0xd8] sm:$0xff] %vm574, %v5736
      %5801 = vst [vmem:[%s258 + $0xe0] sm:$0xff] %v5737
      %5802 = vst.msk [vmem:[%s258 + $0xe8] sm:$0xff] %vm574, %v5738
      %5803 = vst [vmem:[%s258 + $0xf0] sm:$0xff] %v5739
      %5804 = vst.msk [vmem:[%s258 + $0xf8] sm:$0xff] %vm574, %v5740
      %s5805 = scalar_lea.vmem %s258, 256
      %5806 = vst [vmem:[%s5805] sm:$0xff] %v5741
      %5807 = vst.msk [vmem:[%s5805 + $0x8] sm:$0xff] %vm574, %v5742
      %5808 = vst [vmem:[%s5805 + $0x10] sm:$0xff] %v5743
      %5809 = vst.msk [vmem:[%s5805 + $0x18] sm:$0xff] %vm574, %v5744
      %5810 = vst [vmem:[%s5805 + $0x20] sm:$0xff] %v5745
      %5811 = vst.msk [vmem:[%s5805 + $0x28] sm:$0xff] %vm574, %v5746
      %5812 = vst [vmem:[%s5805 + $0x30] sm:$0xff] %v5747
      %5813 = vst.msk [vmem:[%s5805 + $0x38] sm:$0xff] %vm574, %v5748
      %5814 = vst [vmem:[%s5805 + $0x40] sm:$0xff] %v5749
      %5815 = vst.msk [vmem:[%s5805 + $0x48] sm:$0xff] %vm574, %v5750
      %5816 = vst [vmem:[%s5805 + $0x50] sm:$0xff] %v5751
      %5817 = vst.msk [vmem:[%s5805 + $0x58] sm:$0xff] %vm574, %v5752
      %5818 = vst [vmem:[%s5805 + $0x60] sm:$0xff] %v5753
      %5819 = vst.msk [vmem:[%s5805 + $0x68] sm:$0xff] %vm574, %v5754
      %5820 = vst [vmem:[%s5805 + $0x70] sm:$0xff] %v5755
      %5821 = vst.msk [vmem:[%s5805 + $0x78] sm:$0xff] %vm574, %v5756
      %5822 = vst [vmem:[%s5805 + $0x80] sm:$0xff] %v5757
      %5823 = vst.msk [vmem:[%s5805 + $0x88] sm:$0xff] %vm574, %v5758
      %5824 = vst [vmem:[%s5805 + $0x90] sm:$0xff] %v5759
      %5825 = vst.msk [vmem:[%s5805 + $0x98] sm:$0xff] %vm574, %v5760
      %5826 = vst [vmem:[%s5805 + $0xa0] sm:$0xff] %v5761
      %5827 = vst.msk [vmem:[%s5805 + $0xa8] sm:$0xff] %vm574, %v5762
      %5828 = vst [vmem:[%s5805 + $0xb0] sm:$0xff] %v5763
      %5829 = vst.msk [vmem:[%s5805 + $0xb8] sm:$0xff] %vm574, %v5764
      %5830 = vst [vmem:[%s5805 + $0xc0] sm:$0xff] %v5765
      %5831 = vst.msk [vmem:[%s5805 + $0xc8] sm:$0xff] %vm574, %v5766
      %5832 = vst [vmem:[%s5805 + $0xd0] sm:$0xff] %v5767
      %5833 = vst.msk [vmem:[%s5805 + $0xd8] sm:$0xff] %vm574, %v5768
      %5834 = vst [vmem:[%s5805 + $0xe0] sm:$0xff] %v5769
      %5835 = vst.msk [vmem:[%s5805 + $0xe8] sm:$0xff] %vm574, %v5770
      %5836 = vst [vmem:[%s5805 + $0xf0] sm:$0xff] %v5771
      %5837 = vst.msk [vmem:[%s5805 + $0xf8] sm:$0xff] %vm574, %v5772
      %s5838 = smul.u32 2, %s17
      %p5839 = scmp.lt.s32.totalorder %s5838, 3
      %s5840 = scalar_select %p5839, %s5838, 3
      %s5841 = smul.addr %s5840, 32
      %s5842 = smul.addr %s5841, 8
      %s5843 = scalar_lea.vmem %s6, %s5842
      // Predicated region
      $region45: #{tpu_custom_call.1} parent=43 // pred_check
        %p5844 = pneg %p166
      $region46: #{tpu_custom_call.1} parent=43 // pred_check_branch
        %5846 = sbr.rel (%p5844) target = $region48
      $region47: #{tpu_custom_call.1} parent=43 // pred_region
        %s5847 = smul.u32 2, %s17
      $region48: #{tpu_custom_call.1} parent=43 // pred_fallthru
        _
    $region44: #{tpu_custom_call.1} parent=5 // pred_fallthru
      _
    %p5848 = scmp.le.s32.totalorder 2, %s12
    // Predicated region
    $region49: #{tpu_custom_call.1} parent=5 // pred_check
      %p5849 = pneg %p5848
    $region50: #{tpu_custom_call.1} parent=5 // pred_check_branch
      %5851 = sbr.rel (%p5849) target = $region52
    $region51: #{tpu_custom_call.1} parent=5 // pred_region
      %s5852 = ssub.s32 %s12, 2
      // Predicated region
      $region53: #{tpu_custom_call.1} parent=51 // pred_check
        %p5853 = pneg %p172
      $region54: #{tpu_custom_call.1} parent=51 // pred_check_branch
        %5855 = sbr.rel (%p5853) target = $region56
      $region55: #{tpu_custom_call.1} parent=51 // pred_region
        %s5856 = smul.u32 2, %s18
        %p5857 = scmp.lt.s32.totalorder %s5856, 3
        %s5858 = scalar_select %p5857, %s5856, 3
        %s5859 = smul.addr %s5858, 32
        %s5860 = smul.addr %s5859, 8
        %s5861 = scalar_lea.vmem %s6, %s5860
      $region56: #{tpu_custom_call.1} parent=51 // pred_fallthru
        _
    $region52: #{tpu_custom_call.1} parent=5 // pred_fallthru
      _
  $region6: #{tpu_custom_call.1} parent=0 // loop_footer
    %s16 = sadd.s32 1, %s12
  $region7: #{tpu_custom_call.1} parent=0 // loop_footer_branch
    %11 = sbr.rel target = $region3
  $region8: #{tpu_custom_call.1} parent=0 // loop_exit
    _

</llo_original>
